<compile_context>
chip_gen: v7x
topology: tpu7x:2x2x1
jax: 0.10.0
libtpu: 0.0.40
codegen_flags: <defaults>
</compile_context>

<pallas_src>
import math

import jax
import jax.numpy as jnp
from jax import lax
from jax.experimental import pallas as pl
from jax.experimental.pallas import tpu as pltpu


_LN_EPS = 1e-5  # nn.LayerNorm default


def _gelu_exact(x):
    # PyTorch nn.GELU() default is the exact erf-based GELU.
    return 0.5 * x * (1.0 + lax.erf(x * (1.0 / math.sqrt(2.0))))


def projection_head_kernel(x_ref, wp_ref, bp_ref, wf_ref, bf_ref, g_ref, beta_ref,
                           o_ref, acc_ref):
    """Grid = (batch tiles, embedding k-tiles).  acc_ref: f32 partial sums of x @ Wp."""
    wdt = wp_ref.dtype  # weight dtype drives the MXU input dtype (bf16 or f32)
    k = pl.program_id(1)

    @pl.when(k == 0)
    def _():
        acc_ref[...] = jnp.zeros_like(acc_ref)

    # projected partial: x_tile @ Wp_tile  (f32 accumulation on the MXU)
    acc_ref[...] += jnp.dot(x_ref[...].astype(wdt), wp_ref[...],
                            preferred_element_type=jnp.float32)

    @pl.when(k == pl.num_programs(1) - 1)
    def _():
        projected = acc_ref[...] + bp_ref[...].astype(jnp.float32)

        # h = GELU(projected) @ Wf + bf
        h = _gelu_exact(projected)
        h = jnp.dot(h.astype(wdt), wf_ref[...], preferred_element_type=jnp.float32)
        h = h + bf_ref[...].astype(jnp.float32)

        # Dropout is identity at inference time.
        # TODO(synk): train-mode dropout would need pltpu.prng_seed + stateful_bernoulli.

        # residual
        h = h + projected

        # LayerNorm over the feature axis (eps=1e-5), rsqrt on the EUP slot.
        mean = jnp.mean(h, axis=-1, keepdims=True)
        c = h - mean
        var = jnp.mean(c * c, axis=-1, keepdims=True)
        inv = lax.rsqrt(var + _LN_EPS)
        y = c * inv * g_ref[...].astype(jnp.float32) + beta_ref[...].astype(jnp.float32)

        o_ref[...] = y.astype(o_ref.dtype)


def _pick_batch_tile(batch, itemsize):
    """Batch-tile: largest aligned divisor <= target, with >= 2 grid steps if possible."""
    # Sublane packing: 8 rows/vreg for 4-byte, 16 for 2-byte, 32 for 1-byte dtypes.
    step = max(8, 32 // max(itemsize, 1))
    target = 1024 if itemsize <= 2 else 512
    # Guarantee >= 2 grid steps so ("parallel", ...) can span both v7x TensorCores.
    if batch >= 2 * step:
        target = min(target, max(step, (batch // 2) // step * step))
    if batch <= target:
        return batch
    for tb in range(target - (target % step), step - 1, -step):
        if batch % tb == 0:
            return tb
    for tb in range(target - (target % 8), 7, -8):  # relax alignment to 8 rows
        if batch % tb == 0:
            return tb
    # Ragged batch with no aligned divisor: single full tile (still correct, no pipeline).
    return batch


def _pick_k_tile(embed, proj, w_itemsize, max_tile_bytes=8 << 20):
    """K-tile over embedding_dim so one Wp block stays <= ~8 MiB (fits v7x VMEM)."""
    if embed * proj * w_itemsize <= max_tile_bytes:
        return embed
    max_rows = max(256, (max_tile_bytes // (proj * w_itemsize)) // 256 * 256)
    for tk in range(max_rows, 255, -256):
        if embed % tk == 0:
            return tk
    for tk in range(min(embed, max_rows) - (min(embed, max_rows) % 128), 127, -128):
        if embed % tk == 0:
            return tk
    return embed


def _vmem_ceiling_bytes():
    """Per-generation scoped-VMEM ceiling (leave headroom for Mosaic internal scratch)."""
    try:
        cap = int(pltpu.get_tpu_info().vmem_capacity_bytes)
    except Exception:
        cap = 128 << 20
    return cap - max(cap // 8, 8 << 20)   # ~56 MiB on v7x, ~112 MiB on v5e/v6e


def projection_head_forward(x, params, *, batch_tile=None, k_tile=None, out_dtype=None):
    """ProjectionHead forward: batch-tiled, E-k-tiled, single fused Pallas kernel."""
    wp, bp, wf, bf, gamma, beta = params
    B, E = x.shape
    P = wp.shape[1]
    out_dtype = out_dtype or x.dtype

    xb = jnp.dtype(x.dtype).itemsize
    wb = jnp.dtype(wp.dtype).itemsize
    ob = jnp.dtype(out_dtype).itemsize

    tb = batch_tile if batch_tile is not None else _pick_batch_tile(B, xb)
    assert B % tb == 0, "batch must be divisible by the batch tile"
    tk = k_tile if k_tile is not None else _pick_k_tile(E, P, wb)
    assert E % tk == 0, "embedding_dim must be divisible by the k tile"
    nb, nk = B // tb, E // tk
    grid = (nb, nk)

    nbytes = lambda a: a.size * jnp.dtype(a.dtype).itemsize

    # Scoped-VMEM budget (single pass, no double hedging):
    #   invariant params (assume 2x in case single-buffering is unavailable)
    #   + double-buffered pipelined tiles (wp k-tile if nk>1, x tile, out tile)
    #   + f32 accumulator scratch + ~4 live f32 (tb,P) intermediates + headroom.
    invariant_bytes = sum(nbytes(p) for p in (bp, wf, bf, gamma, beta))
    if nk == 1:
        invariant_bytes += nbytes(wp)
        wp_tile_bytes = 0
    else:
        wp_tile_bytes = tk * P * wb
    est = (2 * invariant_bytes
           + 2 * wp_tile_bytes
           + 2 * (tb * tk * xb + tb * P * ob)
           + tb * P * 4
           + 4 * tb * P * 4
           + (4 << 20))
    vmem_limit = int(min(_vmem_ceiling_bytes(), max(est, 32 << 20)))

    def build_and_call(single_buffer_invariant):
        def inv(shape):
            # Grid-invariant block: single-buffer it (its block index never changes).
            if single_buffer_invariant:
                return pl.BlockSpec(shape, lambda i, k: (0, 0),
                                    pipeline_mode=pl.Buffered(1))
            return pl.BlockSpec(shape, lambda i, k: (0, 0))

        if nk == 1:
            wp_spec = inv((E, P))
        else:
            wp_spec = pl.BlockSpec((tk, P), lambda i, k: (k, 0))  # pipelined k-tiles

        return pl.pallas_call(
            projection_head_kernel,
            out_shape=jax.ShapeDtypeStruct((B, P), out_dtype),
            grid_spec=pltpu.PrefetchScalarGridSpec(
                num_scalar_prefetch=0,
                grid=grid,
                in_specs=[
                    pl.BlockSpec((tb, tk), lambda i, k: (i, k)),  # x tile (pipelined)
                    wp_spec,                                      # projection weight
                    inv((1, P)),                                  # projection bias
                    inv((P, P)),                                  # fc weight
                    inv((1, P)),                                  # fc bias
                    inv((1, P)),                                  # layer_norm gamma
                    inv((1, P)),                                  # layer_norm beta
                ],
                out_specs=pl.BlockSpec((tb, P), lambda i, k: (i, 0)),
                scratch_shapes=[pltpu.VMEM((tb, P), jnp.float32)],  # f32 x@Wp accumulator
            ),
            compiler_params=pltpu.CompilerParams(
                dimension_semantics=("parallel", "arbitrary"),
                vmem_limit_bytes=vmem_limit),
        )(x, wp, bp, wf, bf, gamma, beta)

    try:
        return build_and_call(True)
    except Exception:
        # Fallback for jax versions without pipeline_mode=pl.Buffered(1) support;
        # genuine kernel errors still surface from the rebuilt call below.
        return build_and_call(False)


def init_params(key, embedding_dim, projection_dim, dtype=jnp.float32):
    """Synthetic init mirroring the module's parameter shapes.

    nn.Linear default init: weight, bias ~ U(-1/sqrt(fan_in), 1/sqrt(fan_in)).
    Weights are returned transposed to [in, out] for the x @ W kernel layout.
    LayerNorm affine params are perturbed away from (1, 0) so the test exercises them.
    """
    k1, k2, k3, k4, k5, k6 = jax.random.split(key, 6)

    def uniform(k, shape, bound):
        return jax.random.uniform(k, shape, jnp.float32, -bound, bound)

    bp_bound = 1.0 / math.sqrt(embedding_dim)
    bf_bound = 1.0 / math.sqrt(projection_dim)

    wp = uniform(k1, (embedding_dim, projection_dim), bp_bound)
    bp = uniform(k2, (1, projection_dim), bp_bound)
    wf = uniform(k3, (projection_dim, projection_dim), bf_bound)
    bf = uniform(k4, (1, projection_dim), bf_bound)
    gamma = 1.0 + 0.1 * jax.random.normal(k5, (1, projection_dim), jnp.float32)
    beta = 0.1 * jax.random.normal(k6, (1, projection_dim), jnp.float32)

    return tuple(p.astype(dtype) for p in (wp, bp, wf, bf, gamma, beta))


def projection_head_reference(x, params):
    """Pure-JAX f32 reference (highest matmul precision) for correctness checks."""
    wp, bp, wf, bf, gamma, beta = (p.astype(jnp.float32) for p in params)
    x = x.astype(jnp.float32)
    hi = lax.Precision.HIGHEST
    projected = jnp.dot(x, wp, precision=hi) + bp
    h = _gelu_exact(projected)
    h = jnp.dot(h, wf, precision=hi) + bf
    h = h + projected  # dropout is identity at inference
    mean = jnp.mean(h, axis=-1, keepdims=True)
    var = jnp.mean((h - mean) ** 2, axis=-1, keepdims=True)
    return (h - mean) / jnp.sqrt(var + _LN_EPS) * gamma + beta


if __name__ == "__main__":
    # Small, lane-aligned shapes: batch=512, embedding_dim=256, projection_dim=256.
    # Picked batch tile = 256 -> grid=(2, 1): the batch axis pipelines and can span
    # both v7x TensorCores; E fits one k-tile so nk=1 (weights stay resident).
    B, EMBED, PROJ = 512, 256, 256

    key = jax.random.PRNGKey(0)
    kx, kp = jax.random.split(key)
    x = jax.random.normal(kx, (B, EMBED), jnp.float32)
    params_f32 = init_params(kp, EMBED, PROJ, dtype=jnp.float32)
    ref = projection_head_reference(x, params_f32)

    # 1) f32-weight path: tight check against the f32 reference.
    out = jax.block_until_ready(projection_head_forward(x, params_f32))
    assert out.shape == (B, PROJ)
    assert jnp.allclose(out, ref, atol=2e-3, rtol=2e-3), "f32 path mismatch vs reference"

    # 2) bf16-weight path (recommended for deployment: ~3x MXU throughput, half the
    #    weight VMEM).  Activations are cast to bf16 for the MXU, accumulation stays
    #    f32, so compare against the f32 reference with a bf16-appropriate tolerance.
    params_bf16 = tuple(
        p.astype(jnp.bfloat16) if i in (0, 2) else p for i, p in enumerate(params_f32))
    out_bf16 = jax.block_until_ready(projection_head_forward(x, params_bf16))
    assert out_bf16.shape == (B, PROJ)
    assert jnp.allclose(out_bf16, ref, atol=5e-2, rtol=5e-2), "bf16 path mismatch"

    print("KERNEL_OK")
</pallas_src>

<mosaic_0001>
module attributes {stable_mosaic.version = 11 : i64} {
  func.func @projection_head_kernel(%arg0: i32, %arg1: i32, %arg2: memref<256x256xf32, #tpu.memory_space<vmem>>, %arg3: memref<256x256xf32, #tpu.memory_space<vmem>>, %arg4: memref<1x256xf32, #tpu.memory_space<vmem>>, %arg5: memref<256x256xf32, #tpu.memory_space<vmem>>, %arg6: memref<1x256xf32, #tpu.memory_space<vmem>>, %arg7: memref<1x256xf32, #tpu.memory_space<vmem>>, %arg8: memref<1x256xf32, #tpu.memory_space<vmem>>, %arg9: memref<256x256xf32, #tpu.memory_space<vmem>>, %arg10: memref<256x256xf32, #tpu.memory_space<vmem>>) attributes {dimension_semantics = [#tpu.dimension_semantics<parallel>, #tpu.dimension_semantics<arbitrary>], iteration_bounds = array<i64: 2, 1>, scalar_prefetch = 0 : i64, scratch_operands = 1 : i64, tpu.core_type = #tpu.core_type<tc>, window_params = [{transform_indices = @transform_0, window_bounds = array<i64: 256, 256>}, {pipeline_mode = #tpu.pipeline_mode<synchronous>, transform_indices = @transform_1, window_bounds = array<i64: 256, 256>}, {pipeline_mode = #tpu.pipeline_mode<synchronous>, transform_indices = @transform_2, window_bounds = array<i64: 1, 256>}, {pipeline_mode = #tpu.pipeline_mode<synchronous>, transform_indices = @transform_3, window_bounds = array<i64: 256, 256>}, {pipeline_mode = #tpu.pipeline_mode<synchronous>, transform_indices = @transform_4, window_bounds = array<i64: 1, 256>}, {pipeline_mode = #tpu.pipeline_mode<synchronous>, transform_indices = @transform_5, window_bounds = array<i64: 1, 256>}, {pipeline_mode = #tpu.pipeline_mode<synchronous>, transform_indices = @transform_6, window_bounds = array<i64: 1, 256>}, {transform_indices = @transform_7, window_bounds = array<i64: 256, 256>}]} {
    %c0_i32 = arith.constant 0 : i32
    %0 = arith.cmpi eq, %arg1, %c0_i32 : i32
    %1 = arith.extui %0 : i1 to i32
    %c0_i32_0 = arith.constant 0 : i32
    %2 = arith.cmpi ne, %1, %c0_i32_0 : i32
    scf.if %2 {
      %cst_10 = arith.constant 0.000000e+00 : f32
      %12 = vector.broadcast %cst_10 : f32 to vector<256x256xf32>
      %c0_11 = arith.constant 0 : index
      %c0_12 = arith.constant 0 : index
      %13 = vector.load %arg10[%c0_11, %c0_12] : memref<256x256xf32, #tpu.memory_space<vmem>>, vector<256x256xf32>
      tpu.vector_store %arg10[%c0_11, %c0_12], %12 {strides = array<i32>} : memref<256x256xf32, #tpu.memory_space<vmem>>, vector<256x256xf32>,
    } else {
    }
    %c0 = arith.constant 0 : index
    %c0_1 = arith.constant 0 : index
    %3 = vector.load %arg10[%c0, %c0_1] : memref<256x256xf32, #tpu.memory_space<vmem>>, vector<256x256xf32>
    %c0_2 = arith.constant 0 : index
    %c0_3 = arith.constant 0 : index
    %4 = vector.load %arg2[%c0_2, %c0_3] : memref<256x256xf32, #tpu.memory_space<vmem>>, vector<256x256xf32>
    %c0_4 = arith.constant 0 : index
    %c0_5 = arith.constant 0 : index
    %5 = vector.load %arg3[%c0_4, %c0_5] : memref<256x256xf32, #tpu.memory_space<vmem>>, vector<256x256xf32>
    %cst = arith.constant dense<0.000000e+00> : vector<256x256xf32>
    %6 = tpu.matmul %4, %5, %cst {dimension_numbers = #tpu.dot_dimension_numbers<[1], [0], [0], [1], [0, 0, 1, 1], [], []>} : vector<256x256xf32>, vector<256x256xf32>, vector<256x256xf32> -> vector<256x256xf32>
    %7 = arith.addf %3, %6 : vector<256x256xf32>
    %c0_6 = arith.constant 0 : index
    %c0_7 = arith.constant 0 : index
    %8 = vector.load %arg10[%c0_6, %c0_7] : memref<256x256xf32, #tpu.memory_space<vmem>>, vector<256x256xf32>
    tpu.vector_store %arg10[%c0_6, %c0_7], %7 {strides = array<i32>} : memref<256x256xf32, #tpu.memory_space<vmem>>, vector<256x256xf32>,
    %c0_i32_8 = arith.constant 0 : i32
    %9 = arith.cmpi eq, %arg1, %c0_i32_8 : i32
    %10 = arith.extui %9 : i1 to i32
    %c0_i32_9 = arith.constant 0 : i32
    %11 = arith.cmpi ne, %10, %c0_i32_9 : i32
    scf.if %11 {
      %c0_10 = arith.constant 0 : index
      %c0_11 = arith.constant 0 : index
      %12 = vector.load %arg10[%c0_10, %c0_11] : memref<256x256xf32, #tpu.memory_space<vmem>>, vector<256x256xf32>
      %c0_12 = arith.constant 0 : index
      %c0_13 = arith.constant 0 : index
      %13 = vector.load %arg4[%c0_12, %c0_13] : memref<1x256xf32, #tpu.memory_space<vmem>>, vector<1x256xf32>
      %14 = vector.broadcast %13 : vector<1x256xf32> to vector<256x256xf32>
      %15 = arith.addf %12, %14 : vector<256x256xf32>
      %cst_14 = arith.constant 5.000000e-01 : f32
      %16 = vector.broadcast %cst_14 : f32 to vector<256x256xf32>
      %17 = arith.mulf %16, %15 : vector<256x256xf32>
      %cst_15 = arith.constant 0.707106769 : f32
      %18 = vector.broadcast %cst_15 : f32 to vector<256x256xf32>
      %19 = arith.mulf %15, %18 : vector<256x256xf32>
      %20 = math.erf %19 : vector<256x256xf32>
      %cst_16 = arith.constant 1.000000e+00 : f32
      %21 = vector.broadcast %cst_16 : f32 to vector<256x256xf32>
      %22 = arith.addf %21, %20 : vector<256x256xf32>
      %23 = arith.mulf %17, %22 : vector<256x256xf32>
      %c0_17 = arith.constant 0 : index
      %c0_18 = arith.constant 0 : index
      %24 = vector.load %arg5[%c0_17, %c0_18] : memref<256x256xf32, #tpu.memory_space<vmem>>, vector<256x256xf32>
      %cst_19 = arith.constant dense<0.000000e+00> : vector<256x256xf32>
      %25 = tpu.matmul %23, %24, %cst_19 {dimension_numbers = #tpu.dot_dimension_numbers<[1], [0], [0], [1], [0, 0, 1, 1], [], []>} : vector<256x256xf32>, vector<256x256xf32>, vector<256x256xf32> -> vector<256x256xf32>
      %c0_20 = arith.constant 0 : index
      %c0_21 = arith.constant 0 : index
      %26 = vector.load %arg6[%c0_20, %c0_21] : memref<1x256xf32, #tpu.memory_space<vmem>>, vector<1x256xf32>
      %27 = vector.broadcast %26 : vector<1x256xf32> to vector<256x256xf32>
      %28 = arith.addf %25, %27 : vector<256x256xf32>
      %29 = arith.addf %28, %15 : vector<256x256xf32>
      %cst_22 = arith.constant dense<0.000000e+00> : vector<256xf32>
      %30 = vector.multi_reduction <add>, %29, %cst_22 [1] : vector<256x256xf32> to vector<256xf32>
      %31 = vector.shape_cast %30 : vector<256xf32> to vector<256x1xf32>
      %cst_23 = arith.constant 2.560000e+02 : f32
      %32 = vector.broadcast %cst_23 : f32 to vector<256x1xf32>
      %33 = arith.divf %31, %32 : vector<256x1xf32>
      %34 = vector.broadcast %33 : vector<256x1xf32> to vector<256x256xf32>
      %35 = arith.subf %29, %34 : vector<256x256xf32>
      %36 = arith.mulf %35, %35 : vector<256x256xf32>
      %cst_24 = arith.constant dense<0.000000e+00> : vector<256xf32>
      %37 = vector.multi_reduction <add>, %36, %cst_24 [1] : vector<256x256xf32> to vector<256xf32>
      %38 = vector.shape_cast %37 : vector<256xf32> to vector<256x1xf32>
      %cst_25 = arith.constant 2.560000e+02 : f32
      %39 = vector.broadcast %cst_25 : f32 to vector<256x1xf32>
      %40 = arith.divf %38, %39 : vector<256x1xf32>
      %cst_26 = arith.constant 9.99999974E-6 : f32
      %41 = vector.broadcast %cst_26 : f32 to vector<256x1xf32>
      %42 = arith.addf %40, %41 : vector<256x1xf32>
      %43 = math.rsqrt %42 : vector<256x1xf32>
      %44 = vector.broadcast %43 : vector<256x1xf32> to vector<256x256xf32>
      %45 = arith.mulf %35, %44 : vector<256x256xf32>
      %c0_27 = arith.constant 0 : index
      %c0_28 = arith.constant 0 : index
      %46 = vector.load %arg7[%c0_27, %c0_28] : memref<1x256xf32, #tpu.memory_space<vmem>>, vector<1x256xf32>
      %47 = vector.broadcast %46 : vector<1x256xf32> to vector<256x256xf32>
      %48 = arith.mulf %45, %47 : vector<256x256xf32>
      %c0_29 = arith.constant 0 : index
      %c0_30 = arith.constant 0 : index
      %49 = vector.load %arg8[%c0_29, %c0_30] : memref<1x256xf32, #tpu.memory_space<vmem>>, vector<1x256xf32>
      %50 = vector.broadcast %49 : vector<1x256xf32> to vector<256x256xf32>
      %51 = arith.addf %48, %50 : vector<256x256xf32>
      %c0_31 = arith.constant 0 : index
      %c0_32 = arith.constant 0 : index
      %52 = vector.load %arg9[%c0_31, %c0_32] : memref<256x256xf32, #tpu.memory_space<vmem>>, vector<256x256xf32>
      tpu.vector_store %arg9[%c0_31, %c0_32], %51 {strides = array<i32>} : memref<256x256xf32, #tpu.memory_space<vmem>>, vector<256x256xf32>,
    } else {
    }
    return
  }
  func.func @transform_0(%arg0: i32, %arg1: i32) -> (i32, i32) {
    %c0_i32 = arith.constant 0 : i32
    return %arg0, %arg1 : i32, i32
  }
  func.func @transform_1(%arg0: i32, %arg1: i32) -> (i32, i32) {
    %c0_i32 = arith.constant 0 : i32
    %c0_i32_0 = arith.constant 0 : i32
    %c0_i32_1 = arith.constant 0 : i32
    return %c0_i32, %c0_i32_0 : i32, i32
  }
  func.func @transform_2(%arg0: i32, %arg1: i32) -> (i32, i32) {
    %c0_i32 = arith.constant 0 : i32
    %c0_i32_0 = arith.constant 0 : i32
    %c0_i32_1 = arith.constant 0 : i32
    return %c0_i32, %c0_i32_0 : i32, i32
  }
  func.func @transform_3(%arg0: i32, %arg1: i32) -> (i32, i32) {
    %c0_i32 = arith.constant 0 : i32
    %c0_i32_0 = arith.constant 0 : i32
    %c0_i32_1 = arith.constant 0 : i32
    return %c0_i32, %c0_i32_0 : i32, i32
  }
  func.func @transform_4(%arg0: i32, %arg1: i32) -> (i32, i32) {
    %c0_i32 = arith.constant 0 : i32
    %c0_i32_0 = arith.constant 0 : i32
    %c0_i32_1 = arith.constant 0 : i32
    return %c0_i32, %c0_i32_0 : i32, i32
  }
  func.func @transform_5(%arg0: i32, %arg1: i32) -> (i32, i32) {
    %c0_i32 = arith.constant 0 : i32
    %c0_i32_0 = arith.constant 0 : i32
    %c0_i32_1 = arith.constant 0 : i32
    return %c0_i32, %c0_i32_0 : i32, i32
  }
  func.func @transform_6(%arg0: i32, %arg1: i32) -> (i32, i32) {
    %c0_i32 = arith.constant 0 : i32
    %c0_i32_0 = arith.constant 0 : i32
    %c0_i32_1 = arith.constant 0 : i32
    return %c0_i32, %c0_i32_0 : i32, i32
  }
  func.func @transform_7(%arg0: i32, %arg1: i32) -> (i32, i32) {
    %c0_i32 = arith.constant 0 : i32
    %c0_i32_0 = arith.constant 0 : i32
    return %arg0, %c0_i32 : i32, i32
  }
}

module attributes {stable_mosaic.version = 11 : i64} {
  func.func @projection_head_kernel(%arg0: i32, %arg1: i32, %arg2: memref<256x256xf32, #tpu.memory_space<vmem>>, %arg3: memref<256x256xf32, #tpu.memory_space<vmem>>, %arg4: memref<1x256xf32, #tpu.memory_space<vmem>>, %arg5: memref<256x256xf32, #tpu.memory_space<vmem>>, %arg6: memref<1x256xf32, #tpu.memory_space<vmem>>, %arg7: memref<1x256xf32, #tpu.memory_space<vmem>>, %arg8: memref<1x256xf32, #tpu.memory_space<vmem>>, %arg9: memref<256x256xf32, #tpu.memory_space<vmem>>, %arg10: memref<256x256xf32, #tpu.memory_space<vmem>>) attributes {dimension_semantics = [#tpu.dimension_semantics<parallel>, #tpu.dimension_semantics<arbitrary>], iteration_bounds = array<i64: 2, 1>, scalar_prefetch = 0 : i64, scratch_operands = 1 : i64, tpu.core_type = #tpu.core_type<tc>, window_params = [{transform_indices = @transform_0, window_bounds = array<i64: 256, 256>}, {pipeline_mode = #tpu.pipeline_mode<synchronous>, transform_indices = @transform_1, window_bounds = array<i64: 256, 256>}, {pipeline_mode = #tpu.pipeline_mode<synchronous>, transform_indices = @transform_2, window_bounds = array<i64: 1, 256>}, {pipeline_mode = #tpu.pipeline_mode<synchronous>, transform_indices = @transform_3, window_bounds = array<i64: 256, 256>}, {pipeline_mode = #tpu.pipeline_mode<synchronous>, transform_indices = @transform_4, window_bounds = array<i64: 1, 256>}, {pipeline_mode = #tpu.pipeline_mode<synchronous>, transform_indices = @transform_5, window_bounds = array<i64: 1, 256>}, {pipeline_mode = #tpu.pipeline_mode<synchronous>, transform_indices = @transform_6, window_bounds = array<i64: 1, 256>}, {transform_indices = @transform_7, window_bounds = array<i64: 256, 256>}]} {
    %c0_i32 = arith.constant 0 : i32
    %0 = arith.cmpi eq, %arg1, %c0_i32 : i32
    %1 = arith.extui %0 : i1 to i32
    %c0_i32_0 = arith.constant 0 : i32
    %2 = arith.cmpi ne, %1, %c0_i32_0 : i32
    scf.if %2 {
      %cst_10 = arith.constant 0.000000e+00 : f32
      %12 = vector.broadcast %cst_10 : f32 to vector<256x256xf32>
      %c0_11 = arith.constant 0 : index
      %c0_12 = arith.constant 0 : index
      %13 = vector.load %arg10[%c0_11, %c0_12] : memref<256x256xf32, #tpu.memory_space<vmem>>, vector<256x256xf32>
      tpu.vector_store %arg10[%c0_11, %c0_12], %12 {strides = array<i32>} : memref<256x256xf32, #tpu.memory_space<vmem>>, vector<256x256xf32>,
    } else {
    }
    %c0 = arith.constant 0 : index
    %c0_1 = arith.constant 0 : index
    %3 = vector.load %arg10[%c0, %c0_1] : memref<256x256xf32, #tpu.memory_space<vmem>>, vector<256x256xf32>
    %c0_2 = arith.constant 0 : index
    %c0_3 = arith.constant 0 : index
    %4 = vector.load %arg2[%c0_2, %c0_3] : memref<256x256xf32, #tpu.memory_space<vmem>>, vector<256x256xf32>
    %c0_4 = arith.constant 0 : index
    %c0_5 = arith.constant 0 : index
    %5 = vector.load %arg3[%c0_4, %c0_5] : memref<256x256xf32, #tpu.memory_space<vmem>>, vector<256x256xf32>
    %cst = arith.constant dense<0.000000e+00> : vector<256x256xf32>
    %6 = tpu.matmul %4, %5, %cst {dimension_numbers = #tpu.dot_dimension_numbers<[1], [0], [0], [1], [0, 0, 1, 1], [], []>} : vector<256x256xf32>, vector<256x256xf32>, vector<256x256xf32> -> vector<256x256xf32>
    %7 = arith.addf %3, %6 : vector<256x256xf32>
    %c0_6 = arith.constant 0 : index
    %c0_7 = arith.constant 0 : index
    %8 = vector.load %arg10[%c0_6, %c0_7] : memref<256x256xf32, #tpu.memory_space<vmem>>, vector<256x256xf32>
    tpu.vector_store %arg10[%c0_6, %c0_7], %7 {strides = array<i32>} : memref<256x256xf32, #tpu.memory_space<vmem>>, vector<256x256xf32>,
    %c0_i32_8 = arith.constant 0 : i32
    %9 = arith.cmpi eq, %arg1, %c0_i32_8 : i32
    %10 = arith.extui %9 : i1 to i32
    %c0_i32_9 = arith.constant 0 : i32
    %11 = arith.cmpi ne, %10, %c0_i32_9 : i32
    scf.if %11 {
      %c0_10 = arith.constant 0 : index
      %c0_11 = arith.constant 0 : index
      %12 = vector.load %arg10[%c0_10, %c0_11] : memref<256x256xf32, #tpu.memory_space<vmem>>, vector<256x256xf32>
      %c0_12 = arith.constant 0 : index
      %c0_13 = arith.constant 0 : index
      %13 = vector.load %arg4[%c0_12, %c0_13] : memref<1x256xf32, #tpu.memory_space<vmem>>, vector<1x256xf32>
      %14 = vector.broadcast %13 : vector<1x256xf32> to vector<256x256xf32>
      %15 = arith.addf %12, %14 : vector<256x256xf32>
      %cst_14 = arith.constant 5.000000e-01 : f32
      %16 = vector.broadcast %cst_14 : f32 to vector<256x256xf32>
      %17 = arith.mulf %16, %15 : vector<256x256xf32>
      %cst_15 = arith.constant 0.707106769 : f32
      %18 = vector.broadcast %cst_15 : f32 to vector<256x256xf32>
      %19 = arith.mulf %15, %18 : vector<256x256xf32>
      %20 = math.erf %19 : vector<256x256xf32>
      %cst_16 = arith.constant 1.000000e+00 : f32
      %21 = vector.broadcast %cst_16 : f32 to vector<256x256xf32>
      %22 = arith.addf %21, %20 : vector<256x256xf32>
      %23 = arith.mulf %17, %22 : vector<256x256xf32>
      %c0_17 = arith.constant 0 : index
      %c0_18 = arith.constant 0 : index
      %24 = vector.load %arg5[%c0_17, %c0_18] : memref<256x256xf32, #tpu.memory_space<vmem>>, vector<256x256xf32>
      %cst_19 = arith.constant dense<0.000000e+00> : vector<256x256xf32>
      %25 = tpu.matmul %23, %24, %cst_19 {dimension_numbers = #tpu.dot_dimension_numbers<[1], [0], [0], [1], [0, 0, 1, 1], [], []>} : vector<256x256xf32>, vector<256x256xf32>, vector<256x256xf32> -> vector<256x256xf32>
      %c0_20 = arith.constant 0 : index
      %c0_21 = arith.constant 0 : index
      %26 = vector.load %arg6[%c0_20, %c0_21] : memref<1x256xf32, #tpu.memory_space<vmem>>, vector<1x256xf32>
      %27 = vector.broadcast %26 : vector<1x256xf32> to vector<256x256xf32>
      %28 = arith.addf %25, %27 : vector<256x256xf32>
      %29 = arith.addf %28, %15 : vector<256x256xf32>
      %cst_22 = arith.constant dense<0.000000e+00> : vector<256xf32>
      %30 = vector.multi_reduction <add>, %29, %cst_22 [1] : vector<256x256xf32> to vector<256xf32>
      %31 = vector.shape_cast %30 : vector<256xf32> to vector<256x1xf32>
      %cst_23 = arith.constant 2.560000e+02 : f32
      %32 = vector.broadcast %cst_23 : f32 to vector<256x1xf32>
      %33 = arith.divf %31, %32 : vector<256x1xf32>
      %34 = vector.broadcast %33 : vector<256x1xf32> to vector<256x256xf32>
      %35 = arith.subf %29, %34 : vector<256x256xf32>
      %36 = arith.mulf %35, %35 : vector<256x256xf32>
      %cst_24 = arith.constant dense<0.000000e+00> : vector<256xf32>
      %37 = vector.multi_reduction <add>, %36, %cst_24 [1] : vector<256x256xf32> to vector<256xf32>
      %38 = vector.shape_cast %37 : vector<256xf32> to vector<256x1xf32>
      %cst_25 = arith.constant 2.560000e+02 : f32
      %39 = vector.broadcast %cst_25 : f32 to vector<256x1xf32>
      %40 = arith.divf %38, %39 : vector<256x1xf32>
      %cst_26 = arith.constant 9.99999974E-6 : f32
      %41 = vector.broadcast %cst_26 : f32 to vector<256x1xf32>
      %42 = arith.addf %40, %41 : vector<256x1xf32>
      %43 = math.rsqrt %42 : vector<256x1xf32>
      %44 = vector.broadcast %43 : vector<256x1xf32> to vector<256x256xf32>
      %45 = arith.mulf %35, %44 : vector<256x256xf32>
      %c0_27 = arith.constant 0 : index
      %c0_28 = arith.constant 0 : index
      %46 = vector.load %arg7[%c0_27, %c0_28] : memref<1x256xf32, #tpu.memory_space<vmem>>, vector<1x256xf32>
      %47 = vector.broadcast %46 : vector<1x256xf32> to vector<256x256xf32>
      %48 = arith.mulf %45, %47 : vector<256x256xf32>
      %c0_29 = arith.constant 0 : index
      %c0_30 = arith.constant 0 : index
      %49 = vector.load %arg8[%c0_29, %c0_30] : memref<1x256xf32, #tpu.memory_space<vmem>>, vector<1x256xf32>
      %50 = vector.broadcast %49 : vector<1x256xf32> to vector<256x256xf32>
      %51 = arith.addf %48, %50 : vector<256x256xf32>
      %c0_31 = arith.constant 0 : index
      %c0_32 = arith.constant 0 : index
      %52 = vector.load %arg9[%c0_31, %c0_32] : memref<256x256xf32, #tpu.memory_space<vmem>>, vector<256x256xf32>
      tpu.vector_store %arg9[%c0_31, %c0_32], %51 {strides = array<i32>} : memref<256x256xf32, #tpu.memory_space<vmem>>, vector<256x256xf32>,
    } else {
    }
    return
  }
  func.func @transform_0(%arg0: i32, %arg1: i32) -> (i32, i32) {
    %c0_i32 = arith.constant 0 : i32
    return %arg0, %arg1 : i32, i32
  }
  func.func @transform_1(%arg0: i32, %arg1: i32) -> (i32, i32) {
    %c0_i32 = arith.constant 0 : i32
    %c0_i32_0 = arith.constant 0 : i32
    %c0_i32_1 = arith.constant 0 : i32
    return %c0_i32, %c0_i32_0 : i32, i32
  }
  func.func @transform_2(%arg0: i32, %arg1: i32) -> (i32, i32) {
    %c0_i32 = arith.constant 0 : i32
    %c0_i32_0 = arith.constant 0 : i32
    %c0_i32_1 = arith.constant 0 : i32
    return %c0_i32, %c0_i32_0 : i32, i32
  }
  func.func @transform_3(%arg0: i32, %arg1: i32) -> (i32, i32) {
    %c0_i32 = arith.constant 0 : i32
    %c0_i32_0 = arith.constant 0 : i32
    %c0_i32_1 = arith.constant 0 : i32
    return %c0_i32, %c0_i32_0 : i32, i32
  }
  func.func @transform_4(%arg0: i32, %arg1: i32) -> (i32, i32) {
    %c0_i32 = arith.constant 0 : i32
    %c0_i32_0 = arith.constant 0 : i32
    %c0_i32_1 = arith.constant 0 : i32
    return %c0_i32, %c0_i32_0 : i32, i32
  }
  func.func @transform_5(%arg0: i32, %arg1: i32) -> (i32, i32) {
    %c0_i32 = arith.constant 0 : i32
    %c0_i32_0 = arith.constant 0 : i32
    %c0_i32_1 = arith.constant 0 : i32
    return %c0_i32, %c0_i32_0 : i32, i32
  }
  func.func @transform_6(%arg0: i32, %arg1: i32) -> (i32, i32) {
    %c0_i32 = arith.constant 0 : i32
    %c0_i32_0 = arith.constant 0 : i32
    %c0_i32_1 = arith.constant 0 : i32
    return %c0_i32, %c0_i32_0 : i32, i32
  }
  func.func @transform_7(%arg0: i32, %arg1: i32) -> (i32, i32) {
    %c0_i32 = arith.constant 0 : i32
    %c0_i32_0 = arith.constant 0 : i32
    return %arg0, %c0_i32 : i32, i32
  }
}

</mosaic_0001>

<llo_original>
// kernel: tpu_custom_call.1
$region0: #{tpu_custom_call.1}
  #allocation0 [shape = 'u32[]', space=smem, size = 0x4, offset = 0x4, fixed_abs, tag = 'smem constant byte address 0x4 - core index']
  #allocation1 [shape = 'u32[144,128]{1,0:T(1,128)}', space=vmem, size = 0x12000, scoped, tag = 'internal scratch']
  #allocation2 [shape = 'f32[256,256]{1,0:T(8,128)}', space=vmem, size = 0x40000, scoped, tag = 'scratch operand']
  %s0 = inlined_call_operand.hbm [shape: f32[512,256], index: 0, kind: input, shape index: {}]
  %s1 = inlined_call_operand.hbm [shape: f32[256,256], index: 1, kind: input, shape index: {}]
  %s2 = inlined_call_operand.vmem [shape: f32[1,256], index: 2, kind: input, shape index: {}]
  %s3 = inlined_call_operand.hbm [shape: f32[256,256], index: 3, kind: input, shape index: {}]
  %s4 = inlined_call_operand.vmem [shape: f32[1,256], index: 4, kind: input, shape index: {}]
  %s5 = inlined_call_operand.vmem [shape: f32[1,256], index: 5, kind: input, shape index: {}]
  %s6 = inlined_call_operand.vmem [shape: f32[1,256], index: 6, kind: input, shape index: {}]
  %s7 = inlined_call_operand.hbm [shape: f32[512,256], index: 7, kind: output, shape index: {}]
  %s8 = sld [smem:[#allocation0]]
  $region81: #{tpu_custom_call.1} parent=0
    _
  %s10 = ssub.s32 1, %s8
  %s11 = scalar_select 0, %s10, %s8
  $region1: #{tpu_custom_call.1} parent=0
    #allocation3 [shape = 'u8[524288]{0}', space=vmem, size = 0x80000, scoped, tag = 'input window, operand 0']
    #allocation4 [shape = 's32[2]{0}', space=sflag, size = 0x8, scoped, tag = 'scoped memory for tpu_custom_call.1']
    #allocation5 [shape = 's32[2]{0}', space=sflag, size = 0x8, scoped, tag = 'scoped memory for tpu_custom_call.1']
    #allocation6 [shape = 'u8[262144]{0}', space=vmem, size = 0x40000, scoped, tag = 'input window, operand 1, single buffered']
    #allocation7 [shape = 's32[1]{0}', space=sflag, size = 0x4, scoped, tag = 'scoped memory for tpu_custom_call.1']
    #allocation8 [shape = 'u8[262144]{0}', space=vmem, size = 0x40000, scoped, tag = 'input window, operand 3, single buffered']
    #allocation9 [shape = 'u8[524288]{0}', space=vmem, size = 0x80000, scoped, tag = 'output window, operand 0']
    %12 = vsyncpa [#allocation4], 0
    %s13 = scalar_lea.sflag [#allocation4], 1
    %14 = vsyncpa %s13, 0
    %15 = vsyncpa [#allocation7], 0
    %16 = vsyncpa [#allocation5], 0
    %s17 = scalar_lea.sflag [#allocation5], 1
    %18 = vsyncpa %s17, 0
    loop: start=0, step=1, limit=4
    $region2: #{tpu_custom_call.1} parent=1 // loop_pre_header
      _
    $region3: #{tpu_custom_call.1} parent=1 // loop_header
      %s20 = sphi 0, %s24
      %p21 = scmp.ge.s32.totalorder %s20, 4
      %s27 = sphi 0, %s39
      %s28 = sphi 0, %s35
      %s29 = sphi 0, %s27
      %s30 = sphi 0, %s28
      %s31 = sphi 0, %s29
      %s32 = sphi 0, %s30
      %s44 = sphi 0, %s46
      %s47 = sphi 0, %s44
      %s48 = sphi 0, %s47
      %s64 = sphi 0, %s48
      %s68 = sphi 0, %s68
      %s70 = sphi 0, %s68
      %s71 = sphi 0, %s70
      %s85 = sphi 0, %s71
      %s89 = sphi 0, %s89
      %s91 = sphi 0, %s89
      %s92 = sphi 0, %s91
      %s106 = sphi 0, %s92
      %s110 = sphi 0, %s110
      %s112 = sphi 0, %s110
      %s113 = sphi 0, %s112
      %s127 = sphi 0, %s113
      %s131 = sphi 0, %s131
      %s133 = sphi 0, %s131
      %s134 = sphi 0, %s133
      %s148 = sphi 0, %s134
      %s152 = sphi 0, %s152
      %s154 = sphi 0, %s152
      %s155 = sphi 0, %s154
      %s169 = sphi 0, %s155
      %s173 = sphi 0, %s173
      %s175 = sphi 0, %s173
      %s176 = sphi 0, %s175
      %s190 = sphi 0, %s176
      %s196 = sphi 0, %s198
      %s199 = sphi 0, %s196
      %s200 = sphi 0, %s199
      %s216 = sphi 0, %s200
    $region4: #{tpu_custom_call.1} parent=1 // loop_header_branch
      %23 = sbr.rel (%p21) target = $region8
    $region5: #{tpu_custom_call.1} parent=1 // loop_body
      %s25 = ssub.s32 %s20, 1
      %s26 = ssub.s32 %s20, 2
      %s33 = sadd.s32 1, %s28
      %p34 = scmp.ge.s32.totalorder %s33, 1
      %s35 = scalar_select %p34, 0, %s33
      %s36 = sadd.s32 1, %s27
      %s37 = scalar_select %p34, %s36, %s27
      %p38 = scmp.ge.s32.totalorder %s37, 2
      %s39 = scalar_select %p38, 0, %s37
      %s40 = ssub.s32 %s27, %s39
      %s41 = ssub.s32 %s28, %s35
      %s42 = sor.u32 %s40, %s41
      %p43 = scmp.eq.s32.totalorder %s42, 0
      %s45 = sadd.s32 %s44, 1
      %s46 = scalar_select %p43, %s44, %s45
      %p49 = pneg %p43
      %p50 = scmp.eq.s32.totalorder %s20, 1
      %p51 = por %p49, %p50
      %p52 = scmp.ne.s32.totalorder %s44, %s47
      %p53 = scmp.eq.s32.totalorder %s20, 0
      %p54 = por %p52, %p53
      %p55 = scmp.ne.s32.totalorder %s44, %s47
      %p56 = scmp.eq.s32.totalorder %s25, 1
      %p57 = por %p55, %p56
      %p58 = scmp.ne.s32.totalorder %s47, %s48
      %p59 = scmp.eq.s32.totalorder %s25, 0
      %p60 = por %p58, %p59
      %p61 = scmp.ne.s32.totalorder %s47, %s48
      %p62 = scmp.eq.s32.totalorder %s26, 1
      %p63 = por %p61, %p62
      %p65 = scmp.ne.s32.totalorder %s48, %s64
      %p66 = scmp.eq.s32.totalorder %s26, 0
      %p67 = por %p65, %p66
      %s69 = sadd.s32 %s68, 1
      %p72 = scmp.eq.s32.totalorder %s20, 1
      %p73 = scmp.ne.s32.totalorder %s68, %s70
      %p74 = scmp.eq.s32.totalorder %s20, 0
      %p75 = por %p73, %p74
      %p76 = scmp.ne.s32.totalorder %s68, %s70
      %p77 = scmp.eq.s32.totalorder %s25, 1
      %p78 = por %p76, %p77
      %p79 = scmp.ne.s32.totalorder %s70, %s71
      %p80 = scmp.eq.s32.totalorder %s25, 0
      %p81 = por %p79, %p80
      %p82 = scmp.ne.s32.totalorder %s70, %s71
      %p83 = scmp.eq.s32.totalorder %s26, 1
      %p84 = por %p82, %p83
      %p86 = scmp.ne.s32.totalorder %s71, %s85
      %p87 = scmp.eq.s32.totalorder %s26, 0
      %p88 = por %p86, %p87
      %s90 = sadd.s32 %s89, 1
      %p93 = scmp.eq.s32.totalorder %s20, 1
      %p94 = scmp.ne.s32.totalorder %s89, %s91
      %p95 = scmp.eq.s32.totalorder %s20, 0
      %p96 = por %p94, %p95
      %p97 = scmp.ne.s32.totalorder %s89, %s91
      %p98 = scmp.eq.s32.totalorder %s25, 1
      %p99 = por %p97, %p98
      %p100 = scmp.ne.s32.totalorder %s91, %s92
      %p101 = scmp.eq.s32.totalorder %s25, 0
      %p102 = por %p100, %p101
      %p103 = scmp.ne.s32.totalorder %s91, %s92
      %p104 = scmp.eq.s32.totalorder %s26, 1
      %p105 = por %p103, %p104
      %p107 = scmp.ne.s32.totalorder %s92, %s106
      %p108 = scmp.eq.s32.totalorder %s26, 0
      %p109 = por %p107, %p108
      %s111 = sadd.s32 %s110, 1
      %p114 = scmp.eq.s32.totalorder %s20, 1
      %p115 = scmp.ne.s32.totalorder %s110, %s112
      %p116 = scmp.eq.s32.totalorder %s20, 0
      %p117 = por %p115, %p116
      %p118 = scmp.ne.s32.totalorder %s110, %s112
      %p119 = scmp.eq.s32.totalorder %s25, 1
      %p120 = por %p118, %p119
      %p121 = scmp.ne.s32.totalorder %s112, %s113
      %p122 = scmp.eq.s32.totalorder %s25, 0
      %p123 = por %p121, %p122
      %p124 = scmp.ne.s32.totalorder %s112, %s113
      %p125 = scmp.eq.s32.totalorder %s26, 1
      %p126 = por %p124, %p125
      %p128 = scmp.ne.s32.totalorder %s113, %s127
      %p129 = scmp.eq.s32.totalorder %s26, 0
      %p130 = por %p128, %p129
      %s132 = sadd.s32 %s131, 1
      %p135 = scmp.eq.s32.totalorder %s20, 1
      %p136 = scmp.ne.s32.totalorder %s131, %s133
      %p137 = scmp.eq.s32.totalorder %s20, 0
      %p138 = por %p136, %p137
      %p139 = scmp.ne.s32.totalorder %s131, %s133
      %p140 = scmp.eq.s32.totalorder %s25, 1
      %p141 = por %p139, %p140
      %p142 = scmp.ne.s32.totalorder %s133, %s134
      %p143 = scmp.eq.s32.totalorder %s25, 0
      %p144 = por %p142, %p143
      %p145 = scmp.ne.s32.totalorder %s133, %s134
      %p146 = scmp.eq.s32.totalorder %s26, 1
      %p147 = por %p145, %p146
      %p149 = scmp.ne.s32.totalorder %s134, %s148
      %p150 = scmp.eq.s32.totalorder %s26, 0
      %p151 = por %p149, %p150
      %s153 = sadd.s32 %s152, 1
      %p156 = scmp.eq.s32.totalorder %s20, 1
      %p157 = scmp.ne.s32.totalorder %s152, %s154
      %p158 = scmp.eq.s32.totalorder %s20, 0
      %p159 = por %p157, %p158
      %p160 = scmp.ne.s32.totalorder %s152, %s154
      %p161 = scmp.eq.s32.totalorder %s25, 1
      %p162 = por %p160, %p161
      %p163 = scmp.ne.s32.totalorder %s154, %s155
      %p164 = scmp.eq.s32.totalorder %s25, 0
      %p165 = por %p163, %p164
      %p166 = scmp.ne.s32.totalorder %s154, %s155
      %p167 = scmp.eq.s32.totalorder %s26, 1
      %p168 = por %p166, %p167
      %p170 = scmp.ne.s32.totalorder %s155, %s169
      %p171 = scmp.eq.s32.totalorder %s26, 0
      %p172 = por %p170, %p171
      %s174 = sadd.s32 %s173, 1
      %p177 = scmp.eq.s32.totalorder %s20, 1
      %p178 = scmp.ne.s32.totalorder %s173, %s175
      %p179 = scmp.eq.s32.totalorder %s20, 0
      %p180 = por %p178, %p179
      %p181 = scmp.ne.s32.totalorder %s173, %s175
      %p182 = scmp.eq.s32.totalorder %s25, 1
      %p183 = por %p181, %p182
      %p184 = scmp.ne.s32.totalorder %s175, %s176
      %p185 = scmp.eq.s32.totalorder %s25, 0
      %p186 = por %p184, %p185
      %p187 = scmp.ne.s32.totalorder %s175, %s176
      %p188 = scmp.eq.s32.totalorder %s26, 1
      %p189 = por %p187, %p188
      %p191 = scmp.ne.s32.totalorder %s176, %s190
      %p192 = scmp.eq.s32.totalorder %s26, 0
      %p193 = por %p191, %p192
      %s194 = ssub.s32 %s27, %s39
      %p195 = scmp.eq.s32.totalorder %s194, 0
      %s197 = sadd.s32 %s196, 1
      %s198 = scalar_select %p195, %s196, %s197
      %p201 = pneg %p195
      %p202 = scmp.eq.s32.totalorder %s20, 1
      %p203 = por %p201, %p202
      %p204 = scmp.ne.s32.totalorder %s196, %s199
      %p205 = scmp.eq.s32.totalorder %s20, 0
      %p206 = por %p204, %p205
      %p207 = scmp.ne.s32.totalorder %s196, %s199
      %p208 = scmp.eq.s32.totalorder %s25, 1
      %p209 = por %p207, %p208
      %p210 = scmp.ne.s32.totalorder %s199, %s200
      %p211 = scmp.eq.s32.totalorder %s25, 0
      %p212 = por %p210, %p211
      %p213 = scmp.ne.s32.totalorder %s199, %s200
      %p214 = scmp.eq.s32.totalorder %s26, 1
      %p215 = por %p213, %p214
      %p217 = scmp.ne.s32.totalorder %s200, %s216
      %p218 = scmp.eq.s32.totalorder %s26, 0
      %p219 = por %p217, %p218
      %p220 = scmp.le.s32.totalorder 1, %s20
      %p221 = scmp.lt.s32.totalorder %s20, 3
      %p222 = pnand %p220, %p221
      %p223 = pneg %p222
      // Predicated region
      $region9: #{tpu_custom_call.1} parent=5 // pred_check
        _
      $region10: #{tpu_custom_call.1} parent=5 // pred_check_branch
        %225 = sbr.rel (%p222) target = $region12
      $region11: #{tpu_custom_call.1} parent=5 // pred_region
        %s226 = ssub.s32 %s20, 1
        // Predicated region
        $region13: #{tpu_custom_call.1} parent=11 // pred_check
          %p227 = pneg %p81
        $region14: #{tpu_custom_call.1} parent=11 // pred_check_branch
          %229 = sbr.rel (%p227) target = $region16
        $region15: #{tpu_custom_call.1} parent=11 // pred_region
          %s231 = ssub.s32 8192, 8192
          %232 = vsyncadd [#allocation7], %s231
          %s233 = sshll.u32 [#allocation6], 4
          %s234 = int_to_ptr.vmem [resolvable:$true] %s233
          %239 = dma.hbm_to_vmem [thread:$0]  %s1, 8192, %s234, [#allocation7], 256, 256, 16
        $region16: #{tpu_custom_call.1} parent=11 // pred_fallthru
          _
        // Predicated region
        $region17: #{tpu_custom_call.1} parent=11 // pred_check
          %p240 = pneg %p102
        $region18: #{tpu_custom_call.1} parent=11 // pred_check_branch
          %242 = sbr.rel (%p240) target = $region20
        $region19: #{tpu_custom_call.1} parent=11 // pred_region
          _
        $region20: #{tpu_custom_call.1} parent=11 // pred_fallthru
          _
        // Predicated region
        $region21: #{tpu_custom_call.1} parent=11 // pred_check
          %p243 = pneg %p123
        $region22: #{tpu_custom_call.1} parent=11 // pred_check_branch
          %245 = sbr.rel (%p243) target = $region24
        $region23: #{tpu_custom_call.1} parent=11 // pred_region
          %s247 = ssub.s32 8192, 8192
          %248 = vsyncadd [#allocation7], %s247
          %s249 = sshll.u32 [#allocation8], 4
          %s250 = int_to_ptr.vmem [resolvable:$true] %s249
          %255 = dma.hbm_to_vmem [thread:$0]  %s3, 8192, %s250, [#allocation7], 256, 256, 16
        $region24: #{tpu_custom_call.1} parent=11 // pred_fallthru
          _
        // Predicated region
        $region25: #{tpu_custom_call.1} parent=11 // pred_check
          %p256 = pneg %p144
        $region26: #{tpu_custom_call.1} parent=11 // pred_check_branch
          %258 = sbr.rel (%p256) target = $region28
        $region27: #{tpu_custom_call.1} parent=11 // pred_region
          _
        $region28: #{tpu_custom_call.1} parent=11 // pred_fallthru
          _
        // Predicated region
        $region29: #{tpu_custom_call.1} parent=11 // pred_check
          %p259 = pneg %p165
        $region30: #{tpu_custom_call.1} parent=11 // pred_check_branch
          %261 = sbr.rel (%p259) target = $region32
        $region31: #{tpu_custom_call.1} parent=11 // pred_region
          _
        $region32: #{tpu_custom_call.1} parent=11 // pred_fallthru
          _
        // Predicated region
        $region33: #{tpu_custom_call.1} parent=11 // pred_check
          %p262 = pneg %p186
        $region34: #{tpu_custom_call.1} parent=11 // pred_check_branch
          %264 = sbr.rel (%p262) target = $region36
        $region35: #{tpu_custom_call.1} parent=11 // pred_region
          _
        $region36: #{tpu_custom_call.1} parent=11 // pred_fallthru
          _
      $region12: #{tpu_custom_call.1} parent=5 // pred_fallthru
        _
      %p265 = scmp.lt.s32.totalorder %s20, 2
      // Predicated region
      $region37: #{tpu_custom_call.1} parent=5 // pred_check
        %p266 = pneg %p265
      $region38: #{tpu_custom_call.1} parent=5 // pred_check_branch
        %268 = sbr.rel (%p266) target = $region40
      $region39: #{tpu_custom_call.1} parent=5 // pred_region
        // Predicated region
        $region41: #{tpu_custom_call.1} parent=39 // pred_check
          %p269 = pneg %p54
        $region42: #{tpu_custom_call.1} parent=39 // pred_check_branch
          %271 = sbr.rel (%p269) target = $region44
        $region43: #{tpu_custom_call.1} parent=39 // pred_region
          %s272 = sand.u32 %s44, 1
          %s273 = scalar_lea.sflag [#allocation4], %s272
          %s274 = sand.u32 %s44, 1
          %s275 = smul.addr %s274, 512
          %s276 = scalar_lea.vmem [#allocation3], %s275
          %s277 = smul.u32 32, %s27
          %s278 = smul.u32 2, %s28
          %s280 = ssub.s32 8192, 8192
          %281 = vsyncadd %s273, %s280
          %s282 = smul.addr %s277, 2
          %s283 = sadd.s32 %s278, %s282
          %s284 = smul.addr %s283, 128
          %s285 = scalar_lea.hbm %s0, %s284
          %s286 = sshll.u32 %s276, 4
          %s287 = int_to_ptr.vmem [resolvable:$true] %s286
          %292 = dma.hbm_to_vmem [thread:$0]  %s285, 8192, %s287, %s273, 256, 256, 16
        $region44: #{tpu_custom_call.1} parent=39 // pred_fallthru
          _
      $region40: #{tpu_custom_call.1} parent=5 // pred_fallthru
        _
      %p293 = scmp.le.s32.totalorder 1, %s20
      %p294 = scmp.lt.s32.totalorder %s20, 3
      %p295 = pnand %p293, %p294
      %p296 = pneg %p295
      // Predicated region
      $region45: #{tpu_custom_call.1} parent=5 // pred_check
        _
      $region46: #{tpu_custom_call.1} parent=5 // pred_check_branch
        %298 = sbr.rel (%p295) target = $region48
      $region47: #{tpu_custom_call.1} parent=5 // pred_region
        %s299 = ssub.s32 %s20, 1
        %s300 = sand.u32 %s47, 1
        %s301 = scalar_lea.sflag [#allocation4], %s300
        %s302 = sand.u32 %s47, 1
        %s303 = smul.addr %s302, 512
        %s304 = scalar_lea.vmem [#allocation3], %s303
        // Predicated region
        $region49: #{tpu_custom_call.1} parent=47 // pred_check
          %p305 = pneg %p60
        $region50: #{tpu_custom_call.1} parent=47 // pred_check_branch
          %307 = sbr.rel (%p305) target = $region52
        $region51: #{tpu_custom_call.1} parent=47 // pred_region
          %308 = dma.done %s301, 8192
        $region52: #{tpu_custom_call.1} parent=47 // pred_fallthru
          _
        // Predicated region
        $region53: #{tpu_custom_call.1} parent=47 // pred_check
          %p309 = pneg %p81
        $region54: #{tpu_custom_call.1} parent=47 // pred_check_branch
          %311 = sbr.rel (%p309) target = $region56
        $region55: #{tpu_custom_call.1} parent=47 // pred_region
          %312 = dma.done [#allocation7], 8192
        $region56: #{tpu_custom_call.1} parent=47 // pred_fallthru
          _
        // Predicated region
        $region57: #{tpu_custom_call.1} parent=47 // pred_check
          %p313 = pneg %p123
        $region58: #{tpu_custom_call.1} parent=47 // pred_check_branch
          %315 = sbr.rel (%p313) target = $region60
        $region59: #{tpu_custom_call.1} parent=47 // pred_region
          %316 = dma.done [#allocation7], 8192
        $region60: #{tpu_custom_call.1} parent=47 // pred_fallthru
          _
        %s317 = sand.u32 %s47, 1
        %s318 = scalar_lea.sflag [#allocation4], %s317
        %s319 = sand.u32 %s47, 1
        %s320 = smul.addr %s319, 512
        %s321 = scalar_lea.vmem [#allocation3], %s320
        %p322 = pneg %p60
        %p323 = pneg %p57
        %p324 = pneg %p81
        %p325 = pneg %p78
        %p326 = pneg %p102
        %p327 = pneg %p99
        %p328 = pneg %p123
        %p329 = pneg %p120
        %p330 = pneg %p144
        %p331 = pneg %p141
        %p332 = pneg %p165
        %p333 = pneg %p162
        %p334 = pneg %p186
        %p335 = pneg %p183
        %p336 = pneg %p212
        %p337 = pneg %p209
        %s338 = sand.u32 %s199, 1
        %s339 = scalar_lea.sflag [#allocation5], %s338
        %s340 = sand.u32 %s199, 1
        %s341 = smul.addr %s340, 512
        %s342 = scalar_lea.vmem [#allocation9], %s341
        %s343 = smul.u32 32, %s29
        %s344 = smul.u32 2, %s30
        %s345 = smul.u32 32, %s29
        %p346 = scmp.eq.s32.totalorder %s30, 0
        // Predicated region
        $region61: #{tpu_custom_call.1} parent=47 // pred_check
          %p347 = pneg %p346
        $region62: #{tpu_custom_call.1} parent=47 // pred_check_branch
          %349 = sbr.rel (%p347) target = $region64
        $region63: #{tpu_custom_call.1} parent=47 // pred_region
          %350 = vst [vmem:[#allocation2] sm:$0xff] 0.0
          %351 = vst [vmem:[#allocation2 + $0x8] sm:$0xff] 0.0
          %352 = vst [vmem:[#allocation2 + $0x10] sm:$0xff] 0.0
          %353 = vst [vmem:[#allocation2 + $0x18] sm:$0xff] 0.0
          %354 = vst [vmem:[#allocation2 + $0x20] sm:$0xff] 0.0
          %355 = vst [vmem:[#allocation2 + $0x28] sm:$0xff] 0.0
          %356 = vst [vmem:[#allocation2 + $0x30] sm:$0xff] 0.0
          %357 = vst [vmem:[#allocation2 + $0x38] sm:$0xff] 0.0
          %358 = vst [vmem:[#allocation2 + $0x40] sm:$0xff] 0.0
          %359 = vst [vmem:[#allocation2 + $0x48] sm:$0xff] 0.0
          %360 = vst [vmem:[#allocation2 + $0x50] sm:$0xff] 0.0
          %361 = vst [vmem:[#allocation2 + $0x58] sm:$0xff] 0.0
          %362 = vst [vmem:[#allocation2 + $0x60] sm:$0xff] 0.0
          %363 = vst [vmem:[#allocation2 + $0x68] sm:$0xff] 0.0
          %364 = vst [vmem:[#allocation2 + $0x70] sm:$0xff] 0.0
          %365 = vst [vmem:[#allocation2 + $0x78] sm:$0xff] 0.0
          %366 = vst [vmem:[#allocation2 + $0x80] sm:$0xff] 0.0
          %367 = vst [vmem:[#allocation2 + $0x88] sm:$0xff] 0.0
          %368 = vst [vmem:[#allocation2 + $0x90] sm:$0xff] 0.0
          %369 = vst [vmem:[#allocation2 + $0x98] sm:$0xff] 0.0
          %370 = vst [vmem:[#allocation2 + $0xa0] sm:$0xff] 0.0
          %371 = vst [vmem:[#allocation2 + $0xa8] sm:$0xff] 0.0
          %372 = vst [vmem:[#allocation2 + $0xb0] sm:$0xff] 0.0
          %373 = vst [vmem:[#allocation2 + $0xb8] sm:$0xff] 0.0
          %374 = vst [vmem:[#allocation2 + $0xc0] sm:$0xff] 0.0
          %375 = vst [vmem:[#allocation2 + $0xc8] sm:$0xff] 0.0
          %376 = vst [vmem:[#allocation2 + $0xd0] sm:$0xff] 0.0
          %377 = vst [vmem:[#allocation2 + $0xd8] sm:$0xff] 0.0
          %378 = vst [vmem:[#allocation2 + $0xe0] sm:$0xff] 0.0
          %379 = vst [vmem:[#allocation2 + $0xe8] sm:$0xff] 0.0
          %380 = vst [vmem:[#allocation2 + $0xf0] sm:$0xff] 0.0
          %381 = vst [vmem:[#allocation2 + $0xf8] sm:$0xff] 0.0
          %382 = vst [vmem:[#allocation2 + $0x100] sm:$0xff] 0.0
          %383 = vst [vmem:[#allocation2 + $0x108] sm:$0xff] 0.0
          %384 = vst [vmem:[#allocation2 + $0x110] sm:$0xff] 0.0
          %385 = vst [vmem:[#allocation2 + $0x118] sm:$0xff] 0.0
          %386 = vst [vmem:[#allocation2 + $0x120] sm:$0xff] 0.0
          %387 = vst [vmem:[#allocation2 + $0x128] sm:$0xff] 0.0
          %388 = vst [vmem:[#allocation2 + $0x130] sm:$0xff] 0.0
          %389 = vst [vmem:[#allocation2 + $0x138] sm:$0xff] 0.0
          %390 = vst [vmem:[#allocation2 + $0x140] sm:$0xff] 0.0
          %391 = vst [vmem:[#allocation2 + $0x148] sm:$0xff] 0.0
          %392 = vst [vmem:[#allocation2 + $0x150] sm:$0xff] 0.0
          %393 = vst [vmem:[#allocation2 + $0x158] sm:$0xff] 0.0
          %394 = vst [vmem:[#allocation2 + $0x160] sm:$0xff] 0.0
          %395 = vst [vmem:[#allocation2 + $0x168] sm:$0xff] 0.0
          %396 = vst [vmem:[#allocation2 + $0x170] sm:$0xff] 0.0
          %397 = vst [vmem:[#allocation2 + $0x178] sm:$0xff] 0.0
          %398 = vst [vmem:[#allocation2 + $0x180] sm:$0xff] 0.0
          %399 = vst [vmem:[#allocation2 + $0x188] sm:$0xff] 0.0
          %400 = vst [vmem:[#allocation2 + $0x190] sm:$0xff] 0.0
          %401 = vst [vmem:[#allocation2 + $0x198] sm:$0xff] 0.0
          %402 = vst [vmem:[#allocation2 + $0x1a0] sm:$0xff] 0.0
          %403 = vst [vmem:[#allocation2 + $0x1a8] sm:$0xff] 0.0
          %404 = vst [vmem:[#allocation2 + $0x1b0] sm:$0xff] 0.0
          %405 = vst [vmem:[#allocation2 + $0x1b8] sm:$0xff] 0.0
          %406 = vst [vmem:[#allocation2 + $0x1c0] sm:$0xff] 0.0
          %407 = vst [vmem:[#allocation2 + $0x1c8] sm:$0xff] 0.0
          %408 = vst [vmem:[#allocation2 + $0x1d0] sm:$0xff] 0.0
          %409 = vst [vmem:[#allocation2 + $0x1d8] sm:$0xff] 0.0
          %410 = vst [vmem:[#allocation2 + $0x1e0] sm:$0xff] 0.0
          %411 = vst [vmem:[#allocation2 + $0x1e8] sm:$0xff] 0.0
          %412 = vst [vmem:[#allocation2 + $0x1f0] sm:$0xff] 0.0
          %413 = vst [vmem:[#allocation2 + $0x1f8] sm:$0xff] 0.0
        $region64: #{tpu_custom_call.1} parent=47 // pred_fallthru
          _
        %v414 = vld [vmem:[#allocation2] sm:$0xff]
        %v415 = vld [vmem:[#allocation2 + $0x8] sm:$0xff]
        %v416 = vld [vmem:[#allocation2 + $0x10] sm:$0xff]
        %v417 = vld [vmem:[#allocation2 + $0x18] sm:$0xff]
        %v418 = vld [vmem:[#allocation2 + $0x20] sm:$0xff]
        %v419 = vld [vmem:[#allocation2 + $0x28] sm:$0xff]
        %v420 = vld [vmem:[#allocation2 + $0x30] sm:$0xff]
        %v421 = vld [vmem:[#allocation2 + $0x38] sm:$0xff]
        %v422 = vld [vmem:[#allocation2 + $0x40] sm:$0xff]
        %v423 = vld [vmem:[#allocation2 + $0x48] sm:$0xff]
        %v424 = vld [vmem:[#allocation2 + $0x50] sm:$0xff]
        %v425 = vld [vmem:[#allocation2 + $0x58] sm:$0xff]
        %v426 = vld [vmem:[#allocation2 + $0x60] sm:$0xff]
        %v427 = vld [vmem:[#allocation2 + $0x68] sm:$0xff]
        %v428 = vld [vmem:[#allocation2 + $0x70] sm:$0xff]
        %v429 = vld [vmem:[#allocation2 + $0x78] sm:$0xff]
        %v430 = vld [vmem:[#allocation2 + $0x80] sm:$0xff]
        %v431 = vld [vmem:[#allocation2 + $0x88] sm:$0xff]
        %v432 = vld [vmem:[#allocation2 + $0x90] sm:$0xff]
        %v433 = vld [vmem:[#allocation2 + $0x98] sm:$0xff]
        %v434 = vld [vmem:[#allocation2 + $0xa0] sm:$0xff]
        %v435 = vld [vmem:[#allocation2 + $0xa8] sm:$0xff]
        %v436 = vld [vmem:[#allocation2 + $0xb0] sm:$0xff]
        %v437 = vld [vmem:[#allocation2 + $0xb8] sm:$0xff]
        %v438 = vld [vmem:[#allocation2 + $0xc0] sm:$0xff]
        %v439 = vld [vmem:[#allocation2 + $0xc8] sm:$0xff]
        %v440 = vld [vmem:[#allocation2 + $0xd0] sm:$0xff]
        %v441 = vld [vmem:[#allocation2 + $0xd8] sm:$0xff]
        %v442 = vld [vmem:[#allocation2 + $0xe0] sm:$0xff]
        %v443 = vld [vmem:[#allocation2 + $0xe8] sm:$0xff]
        %v444 = vld [vmem:[#allocation2 + $0xf0] sm:$0xff]
        %v445 = vld [vmem:[#allocation2 + $0xf8] sm:$0xff]
        %v446 = vld [vmem:[#allocation2 + $0x100] sm:$0xff]
        %v447 = vld [vmem:[#allocation2 + $0x108] sm:$0xff]
        %v448 = vld [vmem:[#allocation2 + $0x110] sm:$0xff]
        %v449 = vld [vmem:[#allocation2 + $0x118] sm:$0xff]
        %v450 = vld [vmem:[#allocation2 + $0x120] sm:$0xff]
        %v451 = vld [vmem:[#allocation2 + $0x128] sm:$0xff]
        %v452 = vld [vmem:[#allocation2 + $0x130] sm:$0xff]
        %v453 = vld [vmem:[#allocation2 + $0x138] sm:$0xff]
        %v454 = vld [vmem:[#allocation2 + $0x140] sm:$0xff]
        %v455 = vld [vmem:[#allocation2 + $0x148] sm:$0xff]
        %v456 = vld [vmem:[#allocation2 + $0x150] sm:$0xff]
        %v457 = vld [vmem:[#allocation2 + $0x158] sm:$0xff]
        %v458 = vld [vmem:[#allocation2 + $0x160] sm:$0xff]
        %v459 = vld [vmem:[#allocation2 + $0x168] sm:$0xff]
        %v460 = vld [vmem:[#allocation2 + $0x170] sm:$0xff]
        %v461 = vld [vmem:[#allocation2 + $0x178] sm:$0xff]
        %v462 = vld [vmem:[#allocation2 + $0x180] sm:$0xff]
        %v463 = vld [vmem:[#allocation2 + $0x188] sm:$0xff]
        %v464 = vld [vmem:[#allocation2 + $0x190] sm:$0xff]
        %v465 = vld [vmem:[#allocation2 + $0x198] sm:$0xff]
        %v466 = vld [vmem:[#allocation2 + $0x1a0] sm:$0xff]
        %v467 = vld [vmem:[#allocation2 + $0x1a8] sm:$0xff]
        %v468 = vld [vmem:[#allocation2 + $0x1b0] sm:$0xff]
        %v469 = vld [vmem:[#allocation2 + $0x1b8] sm:$0xff]
        %v470 = vld [vmem:[#allocation2 + $0x1c0] sm:$0xff]
        %v471 = vld [vmem:[#allocation2 + $0x1c8] sm:$0xff]
        %v472 = vld [vmem:[#allocation2 + $0x1d0] sm:$0xff]
        %v473 = vld [vmem:[#allocation2 + $0x1d8] sm:$0xff]
        %v474 = vld [vmem:[#allocation2 + $0x1e0] sm:$0xff]
        %v475 = vld [vmem:[#allocation2 + $0x1e8] sm:$0xff]
        %v476 = vld [vmem:[#allocation2 + $0x1f0] sm:$0xff]
        %v477 = vld [vmem:[#allocation2 + $0x1f8] sm:$0xff]
        %v478 = vld [vmem:[%s304] sm:$0xff]
        %v479 = vld [vmem:[%s304 + $0x8] sm:$0xff]
        %v480 = vld [vmem:[%s304 + $0x10] sm:$0xff]
        %v481 = vld [vmem:[%s304 + $0x18] sm:$0xff]
        %v482 = vld [vmem:[%s304 + $0x20] sm:$0xff]
        %v483 = vld [vmem:[%s304 + $0x28] sm:$0xff]
        %v484 = vld [vmem:[%s304 + $0x30] sm:$0xff]
        %v485 = vld [vmem:[%s304 + $0x38] sm:$0xff]
        %v486 = vld [vmem:[%s304 + $0x40] sm:$0xff]
        %v487 = vld [vmem:[%s304 + $0x48] sm:$0xff]
        %v488 = vld [vmem:[%s304 + $0x50] sm:$0xff]
        %v489 = vld [vmem:[%s304 + $0x58] sm:$0xff]
        %v490 = vld [vmem:[%s304 + $0x60] sm:$0xff]
        %v491 = vld [vmem:[%s304 + $0x68] sm:$0xff]
        %v492 = vld [vmem:[%s304 + $0x70] sm:$0xff]
        %v493 = vld [vmem:[%s304 + $0x78] sm:$0xff]
        %v494 = vld [vmem:[%s304 + $0x80] sm:$0xff]
        %v495 = vld [vmem:[%s304 + $0x88] sm:$0xff]
        %v496 = vld [vmem:[%s304 + $0x90] sm:$0xff]
        %v497 = vld [vmem:[%s304 + $0x98] sm:$0xff]
        %v498 = vld [vmem:[%s304 + $0xa0] sm:$0xff]
        %v499 = vld [vmem:[%s304 + $0xa8] sm:$0xff]
        %v500 = vld [vmem:[%s304 + $0xb0] sm:$0xff]
        %v501 = vld [vmem:[%s304 + $0xb8] sm:$0xff]
        %v502 = vld [vmem:[%s304 + $0xc0] sm:$0xff]
        %v503 = vld [vmem:[%s304 + $0xc8] sm:$0xff]
        %v504 = vld [vmem:[%s304 + $0xd0] sm:$0xff]
        %v505 = vld [vmem:[%s304 + $0xd8] sm:$0xff]
        %v506 = vld [vmem:[%s304 + $0xe0] sm:$0xff]
        %v507 = vld [vmem:[%s304 + $0xe8] sm:$0xff]
        %v508 = vld [vmem:[%s304 + $0xf0] sm:$0xff]
        %v509 = vld [vmem:[%s304 + $0xf8] sm:$0xff]
        %v510 = vld [vmem:[%s304 + $0x100] sm:$0xff]
        %v511 = vld [vmem:[%s304 + $0x108] sm:$0xff]
        %v512 = vld [vmem:[%s304 + $0x110] sm:$0xff]
        %v513 = vld [vmem:[%s304 + $0x118] sm:$0xff]
        %v514 = vld [vmem:[%s304 + $0x120] sm:$0xff]
        %v515 = vld [vmem:[%s304 + $0x128] sm:$0xff]
        %v516 = vld [vmem:[%s304 + $0x130] sm:$0xff]
        %v517 = vld [vmem:[%s304 + $0x138] sm:$0xff]
        %v518 = vld [vmem:[%s304 + $0x140] sm:$0xff]
        %v519 = vld [vmem:[%s304 + $0x148] sm:$0xff]
        %v520 = vld [vmem:[%s304 + $0x150] sm:$0xff]
        %v521 = vld [vmem:[%s304 + $0x158] sm:$0xff]
        %v522 = vld [vmem:[%s304 + $0x160] sm:$0xff]
        %v523 = vld [vmem:[%s304 + $0x168] sm:$0xff]
        %v524 = vld [vmem:[%s304 + $0x170] sm:$0xff]
        %v525 = vld [vmem:[%s304 + $0x178] sm:$0xff]
        %v526 = vld [vmem:[%s304 + $0x180] sm:$0xff]
        %v527 = vld [vmem:[%s304 + $0x188] sm:$0xff]
        %v528 = vld [vmem:[%s304 + $0x190] sm:$0xff]
        %v529 = vld [vmem:[%s304 + $0x198] sm:$0xff]
        %v530 = vld [vmem:[%s304 + $0x1a0] sm:$0xff]
        %v531 = vld [vmem:[%s304 + $0x1a8] sm:$0xff]
        %v532 = vld [vmem:[%s304 + $0x1b0] sm:$0xff]
        %v533 = vld [vmem:[%s304 + $0x1b8] sm:$0xff]
        %v534 = vld [vmem:[%s304 + $0x1c0] sm:$0xff]
        %v535 = vld [vmem:[%s304 + $0x1c8] sm:$0xff]
        %v536 = vld [vmem:[%s304 + $0x1d0] sm:$0xff]
        %v537 = vld [vmem:[%s304 + $0x1d8] sm:$0xff]
        %v538 = vld [vmem:[%s304 + $0x1e0] sm:$0xff]
        %v539 = vld [vmem:[%s304 + $0x1e8] sm:$0xff]
        %v540 = vld [vmem:[%s304 + $0x1f0] sm:$0xff]
        %v541 = vld [vmem:[%s304 + $0x1f8] sm:$0xff]
        %v542 = vld [vmem:[#allocation6] sm:$0xff]
        %v543 = vld [vmem:[#allocation6 + $0x8] sm:$0xff]
        %v544 = vld [vmem:[#allocation6 + $0x10] sm:$0xff]
        %v545 = vld [vmem:[#allocation6 + $0x18] sm:$0xff]
        %v546 = vld [vmem:[#allocation6 + $0x20] sm:$0xff]
        %v547 = vld [vmem:[#allocation6 + $0x28] sm:$0xff]
        %v548 = vld [vmem:[#allocation6 + $0x30] sm:$0xff]
        %v549 = vld [vmem:[#allocation6 + $0x38] sm:$0xff]
        %v550 = vld [vmem:[#allocation6 + $0x40] sm:$0xff]
        %v551 = vld [vmem:[#allocation6 + $0x48] sm:$0xff]
        %v552 = vld [vmem:[#allocation6 + $0x50] sm:$0xff]
        %v553 = vld [vmem:[#allocation6 + $0x58] sm:$0xff]
        %v554 = vld [vmem:[#allocation6 + $0x60] sm:$0xff]
        %v555 = vld [vmem:[#allocation6 + $0x68] sm:$0xff]
        %v556 = vld [vmem:[#allocation6 + $0x70] sm:$0xff]
        %v557 = vld [vmem:[#allocation6 + $0x78] sm:$0xff]
        %v558 = vld [vmem:[#allocation6 + $0x80] sm:$0xff]
        %v559 = vld [vmem:[#allocation6 + $0x88] sm:$0xff]
        %v560 = vld [vmem:[#allocation6 + $0x90] sm:$0xff]
        %v561 = vld [vmem:[#allocation6 + $0x98] sm:$0xff]
        %v562 = vld [vmem:[#allocation6 + $0xa0] sm:$0xff]
        %v563 = vld [vmem:[#allocation6 + $0xa8] sm:$0xff]
        %v564 = vld [vmem:[#allocation6 + $0xb0] sm:$0xff]
        %v565 = vld [vmem:[#allocation6 + $0xb8] sm:$0xff]
        %v566 = vld [vmem:[#allocation6 + $0xc0] sm:$0xff]
        %v567 = vld [vmem:[#allocation6 + $0xc8] sm:$0xff]
        %v568 = vld [vmem:[#allocation6 + $0xd0] sm:$0xff]
        %v569 = vld [vmem:[#allocation6 + $0xd8] sm:$0xff]
        %v570 = vld [vmem:[#allocation6 + $0xe0] sm:$0xff]
        %v571 = vld [vmem:[#allocation6 + $0xe8] sm:$0xff]
        %v572 = vld [vmem:[#allocation6 + $0xf0] sm:$0xff]
        %v573 = vld [vmem:[#allocation6 + $0xf8] sm:$0xff]
        %v574 = vld [vmem:[#allocation6 + $0x100] sm:$0xff]
        %v575 = vld [vmem:[#allocation6 + $0x108] sm:$0xff]
        %v576 = vld [vmem:[#allocation6 + $0x110] sm:$0xff]
        %v577 = vld [vmem:[#allocation6 + $0x118] sm:$0xff]
        %v578 = vld [vmem:[#allocation6 + $0x120] sm:$0xff]
        %v579 = vld [vmem:[#allocation6 + $0x128] sm:$0xff]
        %v580 = vld [vmem:[#allocation6 + $0x130] sm:$0xff]
        %v581 = vld [vmem:[#allocation6 + $0x138] sm:$0xff]
        %v582 = vld [vmem:[#allocation6 + $0x140] sm:$0xff]
        %v583 = vld [vmem:[#allocation6 + $0x148] sm:$0xff]
        %v584 = vld [vmem:[#allocation6 + $0x150] sm:$0xff]
        %v585 = vld [vmem:[#allocation6 + $0x158] sm:$0xff]
        %v586 = vld [vmem:[#allocation6 + $0x160] sm:$0xff]
        %v587 = vld [vmem:[#allocation6 + $0x168] sm:$0xff]
        %v588 = vld [vmem:[#allocation6 + $0x170] sm:$0xff]
        %v589 = vld [vmem:[#allocation6 + $0x178] sm:$0xff]
        %v590 = vld [vmem:[#allocation6 + $0x180] sm:$0xff]
        %v591 = vld [vmem:[#allocation6 + $0x188] sm:$0xff]
        %v592 = vld [vmem:[#allocation6 + $0x190] sm:$0xff]
        %v593 = vld [vmem:[#allocation6 + $0x198] sm:$0xff]
        %v594 = vld [vmem:[#allocation6 + $0x1a0] sm:$0xff]
        %v595 = vld [vmem:[#allocation6 + $0x1a8] sm:$0xff]
        %v596 = vld [vmem:[#allocation6 + $0x1b0] sm:$0xff]
        %v597 = vld [vmem:[#allocation6 + $0x1b8] sm:$0xff]
        %v598 = vld [vmem:[#allocation6 + $0x1c0] sm:$0xff]
        %v599 = vld [vmem:[#allocation6 + $0x1c8] sm:$0xff]
        %v600 = vld [vmem:[#allocation6 + $0x1d0] sm:$0xff]
        %v601 = vld [vmem:[#allocation6 + $0x1d8] sm:$0xff]
        %v602 = vld [vmem:[#allocation6 + $0x1e0] sm:$0xff]
        %v603 = vld [vmem:[#allocation6 + $0x1e8] sm:$0xff]
        %v604 = vld [vmem:[#allocation6 + $0x1f0] sm:$0xff]
        %v605 = vld [vmem:[#allocation6 + $0x1f8] sm:$0xff]
        %606 = vmatprep.subr.mxu0 %v543
        %607 = vmatpush1.msra.mxu0 %v542
        %608 = vmatprep.subr.mxu0 %v545
        %609 = vmatpush1.msra.mxu0 %v544
        %610 = vmatprep.subr.mxu0 %v547
        %611 = vmatpush1.msra.mxu0 %v546
        %612 = vmatprep.subr.mxu0 %v549
        %613 = vmatpush1.msra.mxu0 %v548
        %614 = vmatprep.subr.mxu0 %v551
        %615 = vmatpush1.msra.mxu0 %v550
        %616 = vmatprep.subr.mxu0 %v553
        %617 = vmatpush1.msra.mxu0 %v552
        %618 = vmatprep.subr.mxu0 %v555
        %619 = vmatpush1.msra.mxu0 %v554
        %620 = vmatprep.subr.mxu0 %v557
        %621 = vmatpush1.msra.mxu0 %v556
        %622 = vmatprep.subr.mxu0 %v559
        %623 = vmatpush1.msra.mxu0 %v558
        %624 = vmatprep.subr.mxu0 %v561
        %625 = vmatpush1.msra.mxu0 %v560
        %626 = vmatprep.subr.mxu0 %v563
        %627 = vmatpush1.msra.mxu0 %v562
        %628 = vmatprep.subr.mxu0 %v565
        %629 = vmatpush1.msra.mxu0 %v564
        %630 = vmatprep.subr.mxu0 %v567
        %631 = vmatpush1.msra.mxu0 %v566
        %632 = vmatprep.subr.mxu0 %v569
        %633 = vmatpush1.msra.mxu0 %v568
        %634 = vmatprep.subr.mxu0 %v571
        %635 = vmatpush1.msra.mxu0 %v570
        %636 = vmatprep.subr.mxu0 %v573
        %637 = vmatpush1.msra.mxu0 %v572
        %638 = vmatprep.subr.mxu0 %v575
        %639 = vmatpush1.msra.mxu0 %v574
        %640 = vmatprep.subr.mxu0 %v577
        %641 = vmatpush1.msra.mxu0 %v576
        %642 = vmatprep.subr.mxu0 %v579
        %643 = vmatpush1.msra.mxu0 %v578
        %644 = vmatprep.subr.mxu0 %v581
        %645 = vmatpush1.msra.mxu0 %v580
        %646 = vmatprep.subr.mxu0 %v583
        %647 = vmatpush1.msra.mxu0 %v582
        %648 = vmatprep.subr.mxu0 %v585
        %649 = vmatpush1.msra.mxu0 %v584
        %650 = vmatprep.subr.mxu0 %v587
        %651 = vmatpush1.msra.mxu0 %v586
        %652 = vmatprep.subr.mxu0 %v589
        %653 = vmatpush1.msra.mxu0 %v588
        %654 = vmatprep.subr.mxu0 %v591
        %655 = vmatpush1.msra.mxu0 %v590
        %656 = vmatprep.subr.mxu0 %v593
        %657 = vmatpush1.msra.mxu0 %v592
        %658 = vmatprep.subr.mxu0 %v595
        %659 = vmatpush1.msra.mxu0 %v594
        %660 = vmatprep.subr.mxu0 %v597
        %661 = vmatpush1.msra.mxu0 %v596
        %662 = vmatprep.subr.mxu0 %v599
        %663 = vmatpush1.msra.mxu0 %v598
        %664 = vmatprep.subr.mxu0 %v601
        %665 = vmatpush1.msra.mxu0 %v600
        %666 = vmatprep.subr.mxu0 %v603
        %667 = vmatpush1.msra.mxu0 %v602
        %668 = vmatprep.subr.mxu0 %v605
        %669 = vmatpush1.msra.mxu0 %v604
        %670 = vmatprep.mubr.f32.mxu0 %v479
        %671 = vmatmul.mubr.f32.gmra.mrb[0].mxu0 %v478
        %v672 = vpop.f32.mrb[0].mxu0
        %v673 = vadd.f32 0.0, %v672
        %v674 = vpop.f32.mrb[0].mxu0
        %v675 = vadd.f32 0.0, %v674
        %676 = vmatprep.mubr.f32.mxu0 %v481
        %677 = vmatmul.mubr.f32.gmra.mrb[0].mxu0 %v480
        %v678 = vpop.f32.mrb[0].mxu0
        %v679 = vadd.f32 0.0, %v678
        %v680 = vpop.f32.mrb[0].mxu0
        %v681 = vadd.f32 0.0, %v680
        %682 = vmatprep.mubr.f32.mxu0 %v483
        %683 = vmatmul.mubr.f32.gmra.mrb[0].mxu0 %v482
        %v684 = vpop.f32.mrb[0].mxu0
        %v685 = vadd.f32 0.0, %v684
        %v686 = vpop.f32.mrb[0].mxu0
        %v687 = vadd.f32 0.0, %v686
        %688 = vmatprep.mubr.f32.mxu0 %v485
        %689 = vmatmul.mubr.f32.gmra.mrb[0].mxu0 %v484
        %v690 = vpop.f32.mrb[0].mxu0
        %v691 = vadd.f32 0.0, %v690
        %v692 = vpop.f32.mrb[0].mxu0
        %v693 = vadd.f32 0.0, %v692
        %694 = vmatprep.mubr.f32.mxu0 %v487
        %695 = vmatmul.mubr.f32.gmra.mrb[0].mxu0 %v486
        %v696 = vpop.f32.mrb[0].mxu0
        %v697 = vadd.f32 0.0, %v696
        %v698 = vpop.f32.mrb[0].mxu0
        %v699 = vadd.f32 0.0, %v698
        %700 = vmatprep.mubr.f32.mxu0 %v489
        %701 = vmatmul.mubr.f32.gmra.mrb[0].mxu0 %v488
        %v702 = vpop.f32.mrb[0].mxu0
        %v703 = vadd.f32 0.0, %v702
        %v704 = vpop.f32.mrb[0].mxu0
        %v705 = vadd.f32 0.0, %v704
        %706 = vmatprep.mubr.f32.mxu0 %v491
        %707 = vmatmul.mubr.f32.gmra.mrb[0].mxu0 %v490
        %v708 = vpop.f32.mrb[0].mxu0
        %v709 = vadd.f32 0.0, %v708
        %v710 = vpop.f32.mrb[0].mxu0
        %v711 = vadd.f32 0.0, %v710
        %712 = vmatprep.mubr.f32.mxu0 %v493
        %713 = vmatmul.mubr.f32.gmra.mrb[0].mxu0 %v492
        %v714 = vpop.f32.mrb[0].mxu0
        %v715 = vadd.f32 0.0, %v714
        %v716 = vpop.f32.mrb[0].mxu0
        %v717 = vadd.f32 0.0, %v716
        %718 = vmatprep.mubr.f32.mxu0 %v495
        %719 = vmatmul.mubr.f32.gmra.mrb[0].mxu0 %v494
        %v720 = vpop.f32.mrb[0].mxu0
        %v721 = vadd.f32 0.0, %v720
        %v722 = vpop.f32.mrb[0].mxu0
        %v723 = vadd.f32 0.0, %v722
        %724 = vmatprep.mubr.f32.mxu0 %v497
        %725 = vmatmul.mubr.f32.gmra.mrb[0].mxu0 %v496
        %v726 = vpop.f32.mrb[0].mxu0
        %v727 = vadd.f32 0.0, %v726
        %v728 = vpop.f32.mrb[0].mxu0
        %v729 = vadd.f32 0.0, %v728
        %730 = vmatprep.mubr.f32.mxu0 %v499
        %731 = vmatmul.mubr.f32.gmra.mrb[0].mxu0 %v498
        %v732 = vpop.f32.mrb[0].mxu0
        %v733 = vadd.f32 0.0, %v732
        %v734 = vpop.f32.mrb[0].mxu0
        %v735 = vadd.f32 0.0, %v734
        %736 = vmatprep.mubr.f32.mxu0 %v501
        %737 = vmatmul.mubr.f32.gmra.mrb[0].mxu0 %v500
        %v738 = vpop.f32.mrb[0].mxu0
        %v739 = vadd.f32 0.0, %v738
        %v740 = vpop.f32.mrb[0].mxu0
        %v741 = vadd.f32 0.0, %v740
        %742 = vmatprep.mubr.f32.mxu0 %v503
        %743 = vmatmul.mubr.f32.gmra.mrb[0].mxu0 %v502
        %v744 = vpop.f32.mrb[0].mxu0
        %v745 = vadd.f32 0.0, %v744
        %v746 = vpop.f32.mrb[0].mxu0
        %v747 = vadd.f32 0.0, %v746
        %748 = vmatprep.mubr.f32.mxu0 %v505
        %749 = vmatmul.mubr.f32.gmra.mrb[0].mxu0 %v504
        %v750 = vpop.f32.mrb[0].mxu0
        %v751 = vadd.f32 0.0, %v750
        %v752 = vpop.f32.mrb[0].mxu0
        %v753 = vadd.f32 0.0, %v752
        %754 = vmatprep.mubr.f32.mxu0 %v507
        %755 = vmatmul.mubr.f32.gmra.mrb[0].mxu0 %v506
        %v756 = vpop.f32.mrb[0].mxu0
        %v757 = vadd.f32 0.0, %v756
        %v758 = vpop.f32.mrb[0].mxu0
        %v759 = vadd.f32 0.0, %v758
        %760 = vmatprep.mubr.f32.mxu0 %v509
        %761 = vmatmul.mubr.f32.gmra.mrb[0].mxu0 %v508
        %v762 = vpop.f32.mrb[0].mxu0
        %v763 = vadd.f32 0.0, %v762
        %v764 = vpop.f32.mrb[0].mxu0
        %v765 = vadd.f32 0.0, %v764
        %766 = vmatprep.mubr.f32.mxu0 %v511
        %767 = vmatmul.mubr.f32.gmra.mrb[0].mxu0 %v510
        %v768 = vpop.f32.mrb[0].mxu0
        %v769 = vadd.f32 0.0, %v768
        %v770 = vpop.f32.mrb[0].mxu0
        %v771 = vadd.f32 0.0, %v770
        %772 = vmatprep.mubr.f32.mxu0 %v513
        %773 = vmatmul.mubr.f32.gmra.mrb[0].mxu0 %v512
        %v774 = vpop.f32.mrb[0].mxu0
        %v775 = vadd.f32 0.0, %v774
        %v776 = vpop.f32.mrb[0].mxu0
        %v777 = vadd.f32 0.0, %v776
        %778 = vmatprep.mubr.f32.mxu0 %v515
        %779 = vmatmul.mubr.f32.gmra.mrb[0].mxu0 %v514
        %v780 = vpop.f32.mrb[0].mxu0
        %v781 = vadd.f32 0.0, %v780
        %v782 = vpop.f32.mrb[0].mxu0
        %v783 = vadd.f32 0.0, %v782
        %784 = vmatprep.mubr.f32.mxu0 %v517
        %785 = vmatmul.mubr.f32.gmra.mrb[0].mxu0 %v516
        %v786 = vpop.f32.mrb[0].mxu0
        %v787 = vadd.f32 0.0, %v786
        %v788 = vpop.f32.mrb[0].mxu0
        %v789 = vadd.f32 0.0, %v788
        %790 = vmatprep.mubr.f32.mxu0 %v519
        %791 = vmatmul.mubr.f32.gmra.mrb[0].mxu0 %v518
        %v792 = vpop.f32.mrb[0].mxu0
        %v793 = vadd.f32 0.0, %v792
        %v794 = vpop.f32.mrb[0].mxu0
        %v795 = vadd.f32 0.0, %v794
        %796 = vmatprep.mubr.f32.mxu0 %v521
        %797 = vmatmul.mubr.f32.gmra.mrb[0].mxu0 %v520
        %v798 = vpop.f32.mrb[0].mxu0
        %v799 = vadd.f32 0.0, %v798
        %v800 = vpop.f32.mrb[0].mxu0
        %v801 = vadd.f32 0.0, %v800
        %802 = vmatprep.mubr.f32.mxu0 %v523
        %803 = vmatmul.mubr.f32.gmra.mrb[0].mxu0 %v522
        %v804 = vpop.f32.mrb[0].mxu0
        %v805 = vadd.f32 0.0, %v804
        %v806 = vpop.f32.mrb[0].mxu0
        %v807 = vadd.f32 0.0, %v806
        %808 = vmatprep.mubr.f32.mxu0 %v525
        %809 = vmatmul.mubr.f32.gmra.mrb[0].mxu0 %v524
        %v810 = vpop.f32.mrb[0].mxu0
        %v811 = vadd.f32 0.0, %v810
        %v812 = vpop.f32.mrb[0].mxu0
        %v813 = vadd.f32 0.0, %v812
        %814 = vmatprep.mubr.f32.mxu0 %v527
        %815 = vmatmul.mubr.f32.gmra.mrb[0].mxu0 %v526
        %v816 = vpop.f32.mrb[0].mxu0
        %v817 = vadd.f32 0.0, %v816
        %v818 = vpop.f32.mrb[0].mxu0
        %v819 = vadd.f32 0.0, %v818
        %820 = vmatprep.mubr.f32.mxu0 %v529
        %821 = vmatmul.mubr.f32.gmra.mrb[0].mxu0 %v528
        %v822 = vpop.f32.mrb[0].mxu0
        %v823 = vadd.f32 0.0, %v822
        %v824 = vpop.f32.mrb[0].mxu0
        %v825 = vadd.f32 0.0, %v824
        %826 = vmatprep.mubr.f32.mxu0 %v531
        %827 = vmatmul.mubr.f32.gmra.mrb[0].mxu0 %v530
        %v828 = vpop.f32.mrb[0].mxu0
        %v829 = vadd.f32 0.0, %v828
        %v830 = vpop.f32.mrb[0].mxu0
        %v831 = vadd.f32 0.0, %v830
        %832 = vmatprep.mubr.f32.mxu0 %v533
        %833 = vmatmul.mubr.f32.gmra.mrb[0].mxu0 %v532
        %v834 = vpop.f32.mrb[0].mxu0
        %v835 = vadd.f32 0.0, %v834
        %v836 = vpop.f32.mrb[0].mxu0
        %v837 = vadd.f32 0.0, %v836
        %838 = vmatprep.mubr.f32.mxu0 %v535
        %839 = vmatmul.mubr.f32.gmra.mrb[0].mxu0 %v534
        %v840 = vpop.f32.mrb[0].mxu0
        %v841 = vadd.f32 0.0, %v840
        %v842 = vpop.f32.mrb[0].mxu0
        %v843 = vadd.f32 0.0, %v842
        %844 = vmatprep.mubr.f32.mxu0 %v537
        %845 = vmatmul.mubr.f32.gmra.mrb[0].mxu0 %v536
        %v846 = vpop.f32.mrb[0].mxu0
        %v847 = vadd.f32 0.0, %v846
        %v848 = vpop.f32.mrb[0].mxu0
        %v849 = vadd.f32 0.0, %v848
        %850 = vmatprep.mubr.f32.mxu0 %v539
        %851 = vmatmul.mubr.f32.gmra.mrb[0].mxu0 %v538
        %v852 = vpop.f32.mrb[0].mxu0
        %v853 = vadd.f32 0.0, %v852
        %v854 = vpop.f32.mrb[0].mxu0
        %v855 = vadd.f32 0.0, %v854
        %856 = vmatprep.mubr.f32.mxu0 %v541
        %857 = vmatmul.mubr.f32.gmra.mrb[0].mxu0 %v540
        %v858 = vpop.f32.mrb[0].mxu0
        %v859 = vadd.f32 0.0, %v858
        %v860 = vpop.f32.mrb[0].mxu0
        %v861 = vadd.f32 0.0, %v860
        %862 = vdwg.mxu0
        %v863 = vadd.f32 %v414, %v673
        %v864 = vadd.f32 %v415, %v675
        %v865 = vadd.f32 %v416, %v679
        %v866 = vadd.f32 %v417, %v681
        %v867 = vadd.f32 %v418, %v685
        %v868 = vadd.f32 %v419, %v687
        %v869 = vadd.f32 %v420, %v691
        %v870 = vadd.f32 %v421, %v693
        %v871 = vadd.f32 %v422, %v697
        %v872 = vadd.f32 %v423, %v699
        %v873 = vadd.f32 %v424, %v703
        %v874 = vadd.f32 %v425, %v705
        %v875 = vadd.f32 %v426, %v709
        %v876 = vadd.f32 %v427, %v711
        %v877 = vadd.f32 %v428, %v715
        %v878 = vadd.f32 %v429, %v717
        %v879 = vadd.f32 %v430, %v721
        %v880 = vadd.f32 %v431, %v723
        %v881 = vadd.f32 %v432, %v727
        %v882 = vadd.f32 %v433, %v729
        %v883 = vadd.f32 %v434, %v733
        %v884 = vadd.f32 %v435, %v735
        %v885 = vadd.f32 %v436, %v739
        %v886 = vadd.f32 %v437, %v741
        %v887 = vadd.f32 %v438, %v745
        %v888 = vadd.f32 %v439, %v747
        %v889 = vadd.f32 %v440, %v751
        %v890 = vadd.f32 %v441, %v753
        %v891 = vadd.f32 %v442, %v757
        %v892 = vadd.f32 %v443, %v759
        %v893 = vadd.f32 %v444, %v763
        %v894 = vadd.f32 %v445, %v765
        %v895 = vadd.f32 %v446, %v769
        %v896 = vadd.f32 %v447, %v771
        %v897 = vadd.f32 %v448, %v775
        %v898 = vadd.f32 %v449, %v777
        %v899 = vadd.f32 %v450, %v781
        %v900 = vadd.f32 %v451, %v783
        %v901 = vadd.f32 %v452, %v787
        %v902 = vadd.f32 %v453, %v789
        %v903 = vadd.f32 %v454, %v793
        %v904 = vadd.f32 %v455, %v795
        %v905 = vadd.f32 %v456, %v799
        %v906 = vadd.f32 %v457, %v801
        %v907 = vadd.f32 %v458, %v805
        %v908 = vadd.f32 %v459, %v807
        %v909 = vadd.f32 %v460, %v811
        %v910 = vadd.f32 %v461, %v813
        %v911 = vadd.f32 %v462, %v817
        %v912 = vadd.f32 %v463, %v819
        %v913 = vadd.f32 %v464, %v823
        %v914 = vadd.f32 %v465, %v825
        %v915 = vadd.f32 %v466, %v829
        %v916 = vadd.f32 %v467, %v831
        %v917 = vadd.f32 %v468, %v835
        %v918 = vadd.f32 %v469, %v837
        %v919 = vadd.f32 %v470, %v841
        %v920 = vadd.f32 %v471, %v843
        %v921 = vadd.f32 %v472, %v847
        %v922 = vadd.f32 %v473, %v849
        %v923 = vadd.f32 %v474, %v853
        %v924 = vadd.f32 %v475, %v855
        %v925 = vadd.f32 %v476, %v859
        %v926 = vadd.f32 %v477, %v861
        %927 = vst [vmem:[#allocation2] sm:$0xff] %v863
        %928 = vst [vmem:[#allocation2 + $0x8] sm:$0xff] %v864
        %929 = vst [vmem:[#allocation2 + $0x10] sm:$0xff] %v865
        %930 = vst [vmem:[#allocation2 + $0x18] sm:$0xff] %v866
        %931 = vst [vmem:[#allocation2 + $0x20] sm:$0xff] %v867
        %932 = vst [vmem:[#allocation2 + $0x28] sm:$0xff] %v868
        %933 = vst [vmem:[#allocation2 + $0x30] sm:$0xff] %v869
        %934 = vst [vmem:[#allocation2 + $0x38] sm:$0xff] %v870
        %935 = vst [vmem:[#allocation2 + $0x40] sm:$0xff] %v871
        %936 = vst [vmem:[#allocation2 + $0x48] sm:$0xff] %v872
        %937 = vst [vmem:[#allocation2 + $0x50] sm:$0xff] %v873
        %938 = vst [vmem:[#allocation2 + $0x58] sm:$0xff] %v874
        %939 = vst [vmem:[#allocation2 + $0x60] sm:$0xff] %v875
        %940 = vst [vmem:[#allocation2 + $0x68] sm:$0xff] %v876
        %941 = vst [vmem:[#allocation2 + $0x70] sm:$0xff] %v877
        %942 = vst [vmem:[#allocation2 + $0x78] sm:$0xff] %v878
        %943 = vst [vmem:[#allocation2 + $0x80] sm:$0xff] %v879
        %944 = vst [vmem:[#allocation2 + $0x88] sm:$0xff] %v880
        %945 = vst [vmem:[#allocation2 + $0x90] sm:$0xff] %v881
        %946 = vst [vmem:[#allocation2 + $0x98] sm:$0xff] %v882
        %947 = vst [vmem:[#allocation2 + $0xa0] sm:$0xff] %v883
        %948 = vst [vmem:[#allocation2 + $0xa8] sm:$0xff] %v884
        %949 = vst [vmem:[#allocation2 + $0xb0] sm:$0xff] %v885
        %950 = vst [vmem:[#allocation2 + $0xb8] sm:$0xff] %v886
        %951 = vst [vmem:[#allocation2 + $0xc0] sm:$0xff] %v887
        %952 = vst [vmem:[#allocation2 + $0xc8] sm:$0xff] %v888
        %953 = vst [vmem:[#allocation2 + $0xd0] sm:$0xff] %v889
        %954 = vst [vmem:[#allocation2 + $0xd8] sm:$0xff] %v890
        %955 = vst [vmem:[#allocation2 + $0xe0] sm:$0xff] %v891
        %956 = vst [vmem:[#allocation2 + $0xe8] sm:$0xff] %v892
        %957 = vst [vmem:[#allocation2 + $0xf0] sm:$0xff] %v893
        %958 = vst [vmem:[#allocation2 + $0xf8] sm:$0xff] %v894
        %959 = vst [vmem:[#allocation2 + $0x100] sm:$0xff] %v895
        %960 = vst [vmem:[#allocation2 + $0x108] sm:$0xff] %v896
        %961 = vst [vmem:[#allocation2 + $0x110] sm:$0xff] %v897
        %962 = vst [vmem:[#allocation2 + $0x118] sm:$0xff] %v898
        %963 = vst [vmem:[#allocation2 + $0x120] sm:$0xff] %v899
        %964 = vst [vmem:[#allocation2 + $0x128] sm:$0xff] %v900
        %965 = vst [vmem:[#allocation2 + $0x130] sm:$0xff] %v901
        %966 = vst [vmem:[#allocation2 + $0x138] sm:$0xff] %v902
        %967 = vst [vmem:[#allocation2 + $0x140] sm:$0xff] %v903
        %968 = vst [vmem:[#allocation2 + $0x148] sm:$0xff] %v904
        %969 = vst [vmem:[#allocation2 + $0x150] sm:$0xff] %v905
        %970 = vst [vmem:[#allocation2 + $0x158] sm:$0xff] %v906
        %971 = vst [vmem:[#allocation2 + $0x160] sm:$0xff] %v907
        %972 = vst [vmem:[#allocation2 + $0x168] sm:$0xff] %v908
        %973 = vst [vmem:[#allocation2 + $0x170] sm:$0xff] %v909
        %974 = vst [vmem:[#allocation2 + $0x178] sm:$0xff] %v910
        %975 = vst [vmem:[#allocation2 + $0x180] sm:$0xff] %v911
        %976 = vst [vmem:[#allocation2 + $0x188] sm:$0xff] %v912
        %977 = vst [vmem:[#allocation2 + $0x190] sm:$0xff] %v913
        %978 = vst [vmem:[#allocation2 + $0x198] sm:$0xff] %v914
        %979 = vst [vmem:[#allocation2 + $0x1a0] sm:$0xff] %v915
        %980 = vst [vmem:[#allocation2 + $0x1a8] sm:$0xff] %v916
        %981 = vst [vmem:[#allocation2 + $0x1b0] sm:$0xff] %v917
        %982 = vst [vmem:[#allocation2 + $0x1b8] sm:$0xff] %v918
        %983 = vst [vmem:[#allocation2 + $0x1c0] sm:$0xff] %v919
        %984 = vst [vmem:[#allocation2 + $0x1c8] sm:$0xff] %v920
        %985 = vst [vmem:[#allocation2 + $0x1d0] sm:$0xff] %v921
        %986 = vst [vmem:[#allocation2 + $0x1d8] sm:$0xff] %v922
        %987 = vst [vmem:[#allocation2 + $0x1e0] sm:$0xff] %v923
        %988 = vst [vmem:[#allocation2 + $0x1e8] sm:$0xff] %v924
        %989 = vst [vmem:[#allocation2 + $0x1f0] sm:$0xff] %v925
        %990 = vst [vmem:[#allocation2 + $0x1f8] sm:$0xff] %v926
        // Predicated region
        $region65: #{tpu_custom_call.1} parent=47 // pred_check
          %p991 = pneg %p346
        $region66: #{tpu_custom_call.1} parent=47 // pred_check_branch
          %993 = sbr.rel (%p991) target = $region68
        $region67: #{tpu_custom_call.1} parent=47 // pred_region
          %v994 = vld [vmem:[#allocation2] sm:$0xff]
          %v995 = vld [vmem:[#allocation2 + $0x8] sm:$0xff]
          %v996 = vld [vmem:[#allocation2 + $0x10] sm:$0xff]
          %v997 = vld [vmem:[#allocation2 + $0x18] sm:$0xff]
          %v998 = vld [vmem:[#allocation2 + $0x20] sm:$0xff]
          %v999 = vld [vmem:[#allocation2 + $0x28] sm:$0xff]
          %v1000 = vld [vmem:[#allocation2 + $0x30] sm:$0xff]
          %v1001 = vld [vmem:[#allocation2 + $0x38] sm:$0xff]
          %v1002 = vld [vmem:[#allocation2 + $0x40] sm:$0xff]
          %v1003 = vld [vmem:[#allocation2 + $0x48] sm:$0xff]
          %v1004 = vld [vmem:[#allocation2 + $0x50] sm:$0xff]
          %v1005 = vld [vmem:[#allocation2 + $0x58] sm:$0xff]
          %v1006 = vld [vmem:[#allocation2 + $0x60] sm:$0xff]
          %v1007 = vld [vmem:[#allocation2 + $0x68] sm:$0xff]
          %v1008 = vld [vmem:[#allocation2 + $0x70] sm:$0xff]
          %v1009 = vld [vmem:[#allocation2 + $0x78] sm:$0xff]
          %v1010 = vld [vmem:[#allocation2 + $0x80] sm:$0xff]
          %v1011 = vld [vmem:[#allocation2 + $0x88] sm:$0xff]
          %v1012 = vld [vmem:[#allocation2 + $0x90] sm:$0xff]
          %v1013 = vld [vmem:[#allocation2 + $0x98] sm:$0xff]
          %v1014 = vld [vmem:[#allocation2 + $0xa0] sm:$0xff]
          %v1015 = vld [vmem:[#allocation2 + $0xa8] sm:$0xff]
          %v1016 = vld [vmem:[#allocation2 + $0xb0] sm:$0xff]
          %v1017 = vld [vmem:[#allocation2 + $0xb8] sm:$0xff]
          %v1018 = vld [vmem:[#allocation2 + $0xc0] sm:$0xff]
          %v1019 = vld [vmem:[#allocation2 + $0xc8] sm:$0xff]
          %v1020 = vld [vmem:[#allocation2 + $0xd0] sm:$0xff]
          %v1021 = vld [vmem:[#allocation2 + $0xd8] sm:$0xff]
          %v1022 = vld [vmem:[#allocation2 + $0xe0] sm:$0xff]
          %v1023 = vld [vmem:[#allocation2 + $0xe8] sm:$0xff]
          %v1024 = vld [vmem:[#allocation2 + $0xf0] sm:$0xff]
          %v1025 = vld [vmem:[#allocation2 + $0xf8] sm:$0xff]
          %v1026 = vld [vmem:[#allocation2 + $0x100] sm:$0xff]
          %v1027 = vld [vmem:[#allocation2 + $0x108] sm:$0xff]
          %v1028 = vld [vmem:[#allocation2 + $0x110] sm:$0xff]
          %v1029 = vld [vmem:[#allocation2 + $0x118] sm:$0xff]
          %v1030 = vld [vmem:[#allocation2 + $0x120] sm:$0xff]
          %v1031 = vld [vmem:[#allocation2 + $0x128] sm:$0xff]
          %v1032 = vld [vmem:[#allocation2 + $0x130] sm:$0xff]
          %v1033 = vld [vmem:[#allocation2 + $0x138] sm:$0xff]
          %v1034 = vld [vmem:[#allocation2 + $0x140] sm:$0xff]
          %v1035 = vld [vmem:[#allocation2 + $0x148] sm:$0xff]
          %v1036 = vld [vmem:[#allocation2 + $0x150] sm:$0xff]
          %v1037 = vld [vmem:[#allocation2 + $0x158] sm:$0xff]
          %v1038 = vld [vmem:[#allocation2 + $0x160] sm:$0xff]
          %v1039 = vld [vmem:[#allocation2 + $0x168] sm:$0xff]
          %v1040 = vld [vmem:[#allocation2 + $0x170] sm:$0xff]
          %v1041 = vld [vmem:[#allocation2 + $0x178] sm:$0xff]
          %v1042 = vld [vmem:[#allocation2 + $0x180] sm:$0xff]
          %v1043 = vld [vmem:[#allocation2 + $0x188] sm:$0xff]
          %v1044 = vld [vmem:[#allocation2 + $0x190] sm:$0xff]
          %v1045 = vld [vmem:[#allocation2 + $0x198] sm:$0xff]
          %v1046 = vld [vmem:[#allocation2 + $0x1a0] sm:$0xff]
          %v1047 = vld [vmem:[#allocation2 + $0x1a8] sm:$0xff]
          %v1048 = vld [vmem:[#allocation2 + $0x1b0] sm:$0xff]
          %v1049 = vld [vmem:[#allocation2 + $0x1b8] sm:$0xff]
          %v1050 = vld [vmem:[#allocation2 + $0x1c0] sm:$0xff]
          %v1051 = vld [vmem:[#allocation2 + $0x1c8] sm:$0xff]
          %v1052 = vld [vmem:[#allocation2 + $0x1d0] sm:$0xff]
          %v1053 = vld [vmem:[#allocation2 + $0x1d8] sm:$0xff]
          %v1054 = vld [vmem:[#allocation2 + $0x1e0] sm:$0xff]
          %v1055 = vld [vmem:[#allocation2 + $0x1e8] sm:$0xff]
          %v1056 = vld [vmem:[#allocation2 + $0x1f0] sm:$0xff]
          %v1057 = vld [vmem:[#allocation2 + $0x1f8] sm:$0xff]
          %v1058 = vld [vmem:[%s2] sm:$0x3]
          %v1060 = vlaneseq
          %v1061 = vshrl.u32 %v1060, 7
          %v1062 = vsub.s32 0, %v1061
          %v1063 = vrot.slane %v1058, %v1062
          %v1064 = vlaneseq
          %v1065 = vshrl.u32 %v1064, 7
          %v1066 = vsub.s32 1, %v1065
          %v1067 = vrot.slane %v1058, %v1066
          %v1070 = vadd.f32 %v994, %v1063
          %v1071 = vadd.f32 %v995, %v1067
          %v1072 = vadd.f32 %v996, %v1063
          %v1073 = vadd.f32 %v997, %v1067
          %v1074 = vadd.f32 %v998, %v1063
          %v1075 = vadd.f32 %v999, %v1067
          %v1076 = vadd.f32 %v1000, %v1063
          %v1077 = vadd.f32 %v1001, %v1067
          %v1078 = vadd.f32 %v1002, %v1063
          %v1079 = vadd.f32 %v1003, %v1067
          %v1080 = vadd.f32 %v1004, %v1063
          %v1081 = vadd.f32 %v1005, %v1067
          %v1082 = vadd.f32 %v1006, %v1063
          %v1083 = vadd.f32 %v1007, %v1067
          %v1084 = vadd.f32 %v1008, %v1063
          %v1085 = vadd.f32 %v1009, %v1067
          %v1086 = vadd.f32 %v1010, %v1063
          %v1087 = vadd.f32 %v1011, %v1067
          %v1088 = vadd.f32 %v1012, %v1063
          %v1089 = vadd.f32 %v1013, %v1067
          %v1090 = vadd.f32 %v1014, %v1063
          %v1091 = vadd.f32 %v1015, %v1067
          %v1092 = vadd.f32 %v1016, %v1063
          %v1093 = vadd.f32 %v1017, %v1067
          %v1094 = vadd.f32 %v1018, %v1063
          %v1095 = vadd.f32 %v1019, %v1067
          %v1096 = vadd.f32 %v1020, %v1063
          %v1097 = vadd.f32 %v1021, %v1067
          %v1098 = vadd.f32 %v1022, %v1063
          %v1099 = vadd.f32 %v1023, %v1067
          %v1100 = vadd.f32 %v1024, %v1063
          %v1101 = vadd.f32 %v1025, %v1067
          %v1102 = vadd.f32 %v1026, %v1063
          %v1103 = vadd.f32 %v1027, %v1067
          %v1104 = vadd.f32 %v1028, %v1063
          %v1105 = vadd.f32 %v1029, %v1067
          %v1106 = vadd.f32 %v1030, %v1063
          %v1107 = vadd.f32 %v1031, %v1067
          %v1108 = vadd.f32 %v1032, %v1063
          %v1109 = vadd.f32 %v1033, %v1067
          %v1110 = vadd.f32 %v1034, %v1063
          %v1111 = vadd.f32 %v1035, %v1067
          %v1112 = vadd.f32 %v1036, %v1063
          %v1113 = vadd.f32 %v1037, %v1067
          %v1114 = vadd.f32 %v1038, %v1063
          %v1115 = vadd.f32 %v1039, %v1067
          %v1116 = vadd.f32 %v1040, %v1063
          %v1117 = vadd.f32 %v1041, %v1067
          %v1118 = vadd.f32 %v1042, %v1063
          %v1119 = vadd.f32 %v1043, %v1067
          %v1120 = vadd.f32 %v1044, %v1063
          %v1121 = vadd.f32 %v1045, %v1067
          %v1122 = vadd.f32 %v1046, %v1063
          %v1123 = vadd.f32 %v1047, %v1067
          %v1124 = vadd.f32 %v1048, %v1063
          %v1125 = vadd.f32 %v1049, %v1067
          %v1126 = vadd.f32 %v1050, %v1063
          %v1127 = vadd.f32 %v1051, %v1067
          %v1128 = vadd.f32 %v1052, %v1063
          %v1129 = vadd.f32 %v1053, %v1067
          %v1130 = vadd.f32 %v1054, %v1063
          %v1131 = vadd.f32 %v1055, %v1067
          %v1132 = vadd.f32 %v1056, %v1063
          %v1133 = vadd.f32 %v1057, %v1067
          %v1134 = vmul.f32 %v1070, 0.5
          %v1135 = vmul.f32 %v1071, 0.5
          %v1136 = vmul.f32 %v1072, 0.5
          %v1137 = vmul.f32 %v1073, 0.5
          %v1138 = vmul.f32 %v1074, 0.5
          %v1139 = vmul.f32 %v1075, 0.5
          %v1140 = vmul.f32 %v1076, 0.5
          %v1141 = vmul.f32 %v1077, 0.5
          %v1142 = vmul.f32 %v1078, 0.5
          %v1143 = vmul.f32 %v1079, 0.5
          %v1144 = vmul.f32 %v1080, 0.5
          %v1145 = vmul.f32 %v1081, 0.5
          %v1146 = vmul.f32 %v1082, 0.5
          %v1147 = vmul.f32 %v1083, 0.5
          %v1148 = vmul.f32 %v1084, 0.5
          %v1149 = vmul.f32 %v1085, 0.5
          %v1150 = vmul.f32 %v1086, 0.5
          %v1151 = vmul.f32 %v1087, 0.5
          %v1152 = vmul.f32 %v1088, 0.5
          %v1153 = vmul.f32 %v1089, 0.5
          %v1154 = vmul.f32 %v1090, 0.5
          %v1155 = vmul.f32 %v1091, 0.5
          %v1156 = vmul.f32 %v1092, 0.5
          %v1157 = vmul.f32 %v1093, 0.5
          %v1158 = vmul.f32 %v1094, 0.5
          %v1159 = vmul.f32 %v1095, 0.5
          %v1160 = vmul.f32 %v1096, 0.5
          %v1161 = vmul.f32 %v1097, 0.5
          %v1162 = vmul.f32 %v1098, 0.5
          %v1163 = vmul.f32 %v1099, 0.5
          %v1164 = vmul.f32 %v1100, 0.5
          %v1165 = vmul.f32 %v1101, 0.5
          %v1166 = vmul.f32 %v1102, 0.5
          %v1167 = vmul.f32 %v1103, 0.5
          %v1168 = vmul.f32 %v1104, 0.5
          %v1169 = vmul.f32 %v1105, 0.5
          %v1170 = vmul.f32 %v1106, 0.5
          %v1171 = vmul.f32 %v1107, 0.5
          %v1172 = vmul.f32 %v1108, 0.5
          %v1173 = vmul.f32 %v1109, 0.5
          %v1174 = vmul.f32 %v1110, 0.5
          %v1175 = vmul.f32 %v1111, 0.5
          %v1176 = vmul.f32 %v1112, 0.5
          %v1177 = vmul.f32 %v1113, 0.5
          %v1178 = vmul.f32 %v1114, 0.5
          %v1179 = vmul.f32 %v1115, 0.5
          %v1180 = vmul.f32 %v1116, 0.5
          %v1181 = vmul.f32 %v1117, 0.5
          %v1182 = vmul.f32 %v1118, 0.5
          %v1183 = vmul.f32 %v1119, 0.5
          %v1184 = vmul.f32 %v1120, 0.5
          %v1185 = vmul.f32 %v1121, 0.5
          %v1186 = vmul.f32 %v1122, 0.5
          %v1187 = vmul.f32 %v1123, 0.5
          %v1188 = vmul.f32 %v1124, 0.5
          %v1189 = vmul.f32 %v1125, 0.5
          %v1190 = vmul.f32 %v1126, 0.5
          %v1191 = vmul.f32 %v1127, 0.5
          %v1192 = vmul.f32 %v1128, 0.5
          %v1193 = vmul.f32 %v1129, 0.5
          %v1194 = vmul.f32 %v1130, 0.5
          %v1195 = vmul.f32 %v1131, 0.5
          %v1196 = vmul.f32 %v1132, 0.5
          %v1197 = vmul.f32 %v1133, 0.5
          %v1198 = vmul.f32 %v1070, 0.70710677
          %v1199 = vmul.f32 %v1071, 0.70710677
          %v1200 = vmul.f32 %v1072, 0.70710677
          %v1201 = vmul.f32 %v1073, 0.70710677
          %v1202 = vmul.f32 %v1074, 0.70710677
          %v1203 = vmul.f32 %v1075, 0.70710677
          %v1204 = vmul.f32 %v1076, 0.70710677
          %v1205 = vmul.f32 %v1077, 0.70710677
          %v1206 = vmul.f32 %v1078, 0.70710677
          %v1207 = vmul.f32 %v1079, 0.70710677
          %v1208 = vmul.f32 %v1080, 0.70710677
          %v1209 = vmul.f32 %v1081, 0.70710677
          %v1210 = vmul.f32 %v1082, 0.70710677
          %v1211 = vmul.f32 %v1083, 0.70710677
          %v1212 = vmul.f32 %v1084, 0.70710677
          %v1213 = vmul.f32 %v1085, 0.70710677
          %v1214 = vmul.f32 %v1086, 0.70710677
          %v1215 = vmul.f32 %v1087, 0.70710677
          %v1216 = vmul.f32 %v1088, 0.70710677
          %v1217 = vmul.f32 %v1089, 0.70710677
          %v1218 = vmul.f32 %v1090, 0.70710677
          %v1219 = vmul.f32 %v1091, 0.70710677
          %v1220 = vmul.f32 %v1092, 0.70710677
          %v1221 = vmul.f32 %v1093, 0.70710677
          %v1222 = vmul.f32 %v1094, 0.70710677
          %v1223 = vmul.f32 %v1095, 0.70710677
          %v1224 = vmul.f32 %v1096, 0.70710677
          %v1225 = vmul.f32 %v1097, 0.70710677
          %v1226 = vmul.f32 %v1098, 0.70710677
          %v1227 = vmul.f32 %v1099, 0.70710677
          %v1228 = vmul.f32 %v1100, 0.70710677
          %v1229 = vmul.f32 %v1101, 0.70710677
          %v1230 = vmul.f32 %v1102, 0.70710677
          %v1231 = vmul.f32 %v1103, 0.70710677
          %v1232 = vmul.f32 %v1104, 0.70710677
          %v1233 = vmul.f32 %v1105, 0.70710677
          %v1234 = vmul.f32 %v1106, 0.70710677
          %v1235 = vmul.f32 %v1107, 0.70710677
          %v1236 = vmul.f32 %v1108, 0.70710677
          %v1237 = vmul.f32 %v1109, 0.70710677
          %v1238 = vmul.f32 %v1110, 0.70710677
          %v1239 = vmul.f32 %v1111, 0.70710677
          %v1240 = vmul.f32 %v1112, 0.70710677
          %v1241 = vmul.f32 %v1113, 0.70710677
          %v1242 = vmul.f32 %v1114, 0.70710677
          %v1243 = vmul.f32 %v1115, 0.70710677
          %v1244 = vmul.f32 %v1116, 0.70710677
          %v1245 = vmul.f32 %v1117, 0.70710677
          %v1246 = vmul.f32 %v1118, 0.70710677
          %v1247 = vmul.f32 %v1119, 0.70710677
          %v1248 = vmul.f32 %v1120, 0.70710677
          %v1249 = vmul.f32 %v1121, 0.70710677
          %v1250 = vmul.f32 %v1122, 0.70710677
          %v1251 = vmul.f32 %v1123, 0.70710677
          %v1252 = vmul.f32 %v1124, 0.70710677
          %v1253 = vmul.f32 %v1125, 0.70710677
          %v1254 = vmul.f32 %v1126, 0.70710677
          %v1255 = vmul.f32 %v1127, 0.70710677
          %v1256 = vmul.f32 %v1128, 0.70710677
          %v1257 = vmul.f32 %v1129, 0.70710677
          %v1258 = vmul.f32 %v1130, 0.70710677
          %v1259 = vmul.f32 %v1131, 0.70710677
          %v1260 = vmul.f32 %v1132, 0.70710677
          %v1261 = vmul.f32 %v1133, 0.70710677
          %v1262 = verf.f32.pop %v1198
          %v1263 = verf.f32.pop %v1199
          %v1264 = verf.f32.pop %v1200
          %v1265 = verf.f32.pop %v1201
          %v1266 = verf.f32.pop %v1202
          %v1267 = verf.f32.pop %v1203
          %v1268 = verf.f32.pop %v1204
          %v1269 = verf.f32.pop %v1205
          %v1270 = verf.f32.pop %v1206
          %v1271 = verf.f32.pop %v1207
          %v1272 = verf.f32.pop %v1208
          %v1273 = verf.f32.pop %v1209
          %v1274 = verf.f32.pop %v1210
          %v1275 = verf.f32.pop %v1211
          %v1276 = verf.f32.pop %v1212
          %v1277 = verf.f32.pop %v1213
          %v1278 = verf.f32.pop %v1214
          %v1279 = verf.f32.pop %v1215
          %v1280 = verf.f32.pop %v1216
          %v1281 = verf.f32.pop %v1217
          %v1282 = verf.f32.pop %v1218
          %v1283 = verf.f32.pop %v1219
          %v1284 = verf.f32.pop %v1220
          %v1285 = verf.f32.pop %v1221
          %v1286 = verf.f32.pop %v1222
          %v1287 = verf.f32.pop %v1223
          %v1288 = verf.f32.pop %v1224
          %v1289 = verf.f32.pop %v1225
          %v1290 = verf.f32.pop %v1226
          %v1291 = verf.f32.pop %v1227
          %v1292 = verf.f32.pop %v1228
          %v1293 = verf.f32.pop %v1229
          %v1294 = verf.f32.pop %v1230
          %v1295 = verf.f32.pop %v1231
          %v1296 = verf.f32.pop %v1232
          %v1297 = verf.f32.pop %v1233
          %v1298 = verf.f32.pop %v1234
          %v1299 = verf.f32.pop %v1235
          %v1300 = verf.f32.pop %v1236
          %v1301 = verf.f32.pop %v1237
          %v1302 = verf.f32.pop %v1238
          %v1303 = verf.f32.pop %v1239
          %v1304 = verf.f32.pop %v1240
          %v1305 = verf.f32.pop %v1241
          %v1306 = verf.f32.pop %v1242
          %v1307 = verf.f32.pop %v1243
          %v1308 = verf.f32.pop %v1244
          %v1309 = verf.f32.pop %v1245
          %v1310 = verf.f32.pop %v1246
          %v1311 = verf.f32.pop %v1247
          %v1312 = verf.f32.pop %v1248
          %v1313 = verf.f32.pop %v1249
          %v1314 = verf.f32.pop %v1250
          %v1315 = verf.f32.pop %v1251
          %v1316 = verf.f32.pop %v1252
          %v1317 = verf.f32.pop %v1253
          %v1318 = verf.f32.pop %v1254
          %v1319 = verf.f32.pop %v1255
          %v1320 = verf.f32.pop %v1256
          %v1321 = verf.f32.pop %v1257
          %v1322 = verf.f32.pop %v1258
          %v1323 = verf.f32.pop %v1259
          %v1324 = verf.f32.pop %v1260
          %v1325 = verf.f32.pop %v1261
          %v1326 = vadd.f32 %v1262, 1.0
          %v1327 = vadd.f32 %v1263, 1.0
          %v1328 = vadd.f32 %v1264, 1.0
          %v1329 = vadd.f32 %v1265, 1.0
          %v1330 = vadd.f32 %v1266, 1.0
          %v1331 = vadd.f32 %v1267, 1.0
          %v1332 = vadd.f32 %v1268, 1.0
          %v1333 = vadd.f32 %v1269, 1.0
          %v1334 = vadd.f32 %v1270, 1.0
          %v1335 = vadd.f32 %v1271, 1.0
          %v1336 = vadd.f32 %v1272, 1.0
          %v1337 = vadd.f32 %v1273, 1.0
          %v1338 = vadd.f32 %v1274, 1.0
          %v1339 = vadd.f32 %v1275, 1.0
          %v1340 = vadd.f32 %v1276, 1.0
          %v1341 = vadd.f32 %v1277, 1.0
          %v1342 = vadd.f32 %v1278, 1.0
          %v1343 = vadd.f32 %v1279, 1.0
          %v1344 = vadd.f32 %v1280, 1.0
          %v1345 = vadd.f32 %v1281, 1.0
          %v1346 = vadd.f32 %v1282, 1.0
          %v1347 = vadd.f32 %v1283, 1.0
          %v1348 = vadd.f32 %v1284, 1.0
          %v1349 = vadd.f32 %v1285, 1.0
          %v1350 = vadd.f32 %v1286, 1.0
          %v1351 = vadd.f32 %v1287, 1.0
          %v1352 = vadd.f32 %v1288, 1.0
          %v1353 = vadd.f32 %v1289, 1.0
          %v1354 = vadd.f32 %v1290, 1.0
          %v1355 = vadd.f32 %v1291, 1.0
          %v1356 = vadd.f32 %v1292, 1.0
          %v1357 = vadd.f32 %v1293, 1.0
          %v1358 = vadd.f32 %v1294, 1.0
          %v1359 = vadd.f32 %v1295, 1.0
          %v1360 = vadd.f32 %v1296, 1.0
          %v1361 = vadd.f32 %v1297, 1.0
          %v1362 = vadd.f32 %v1298, 1.0
          %v1363 = vadd.f32 %v1299, 1.0
          %v1364 = vadd.f32 %v1300, 1.0
          %v1365 = vadd.f32 %v1301, 1.0
          %v1366 = vadd.f32 %v1302, 1.0
          %v1367 = vadd.f32 %v1303, 1.0
          %v1368 = vadd.f32 %v1304, 1.0
          %v1369 = vadd.f32 %v1305, 1.0
          %v1370 = vadd.f32 %v1306, 1.0
          %v1371 = vadd.f32 %v1307, 1.0
          %v1372 = vadd.f32 %v1308, 1.0
          %v1373 = vadd.f32 %v1309, 1.0
          %v1374 = vadd.f32 %v1310, 1.0
          %v1375 = vadd.f32 %v1311, 1.0
          %v1376 = vadd.f32 %v1312, 1.0
          %v1377 = vadd.f32 %v1313, 1.0
          %v1378 = vadd.f32 %v1314, 1.0
          %v1379 = vadd.f32 %v1315, 1.0
          %v1380 = vadd.f32 %v1316, 1.0
          %v1381 = vadd.f32 %v1317, 1.0
          %v1382 = vadd.f32 %v1318, 1.0
          %v1383 = vadd.f32 %v1319, 1.0
          %v1384 = vadd.f32 %v1320, 1.0
          %v1385 = vadd.f32 %v1321, 1.0
          %v1386 = vadd.f32 %v1322, 1.0
          %v1387 = vadd.f32 %v1323, 1.0
          %v1388 = vadd.f32 %v1324, 1.0
          %v1389 = vadd.f32 %v1325, 1.0
          %v1390 = vmul.f32 %v1134, %v1326
          %v1391 = vmul.f32 %v1135, %v1327
          %v1392 = vmul.f32 %v1136, %v1328
          %v1393 = vmul.f32 %v1137, %v1329
          %v1394 = vmul.f32 %v1138, %v1330
          %v1395 = vmul.f32 %v1139, %v1331
          %v1396 = vmul.f32 %v1140, %v1332
          %v1397 = vmul.f32 %v1141, %v1333
          %v1398 = vmul.f32 %v1142, %v1334
          %v1399 = vmul.f32 %v1143, %v1335
          %v1400 = vmul.f32 %v1144, %v1336
          %v1401 = vmul.f32 %v1145, %v1337
          %v1402 = vmul.f32 %v1146, %v1338
          %v1403 = vmul.f32 %v1147, %v1339
          %v1404 = vmul.f32 %v1148, %v1340
          %v1405 = vmul.f32 %v1149, %v1341
          %v1406 = vmul.f32 %v1150, %v1342
          %v1407 = vmul.f32 %v1151, %v1343
          %v1408 = vmul.f32 %v1152, %v1344
          %v1409 = vmul.f32 %v1153, %v1345
          %v1410 = vmul.f32 %v1154, %v1346
          %v1411 = vmul.f32 %v1155, %v1347
          %v1412 = vmul.f32 %v1156, %v1348
          %v1413 = vmul.f32 %v1157, %v1349
          %v1414 = vmul.f32 %v1158, %v1350
          %v1415 = vmul.f32 %v1159, %v1351
          %v1416 = vmul.f32 %v1160, %v1352
          %v1417 = vmul.f32 %v1161, %v1353
          %v1418 = vmul.f32 %v1162, %v1354
          %v1419 = vmul.f32 %v1163, %v1355
          %v1420 = vmul.f32 %v1164, %v1356
          %v1421 = vmul.f32 %v1165, %v1357
          %v1422 = vmul.f32 %v1166, %v1358
          %v1423 = vmul.f32 %v1167, %v1359
          %v1424 = vmul.f32 %v1168, %v1360
          %v1425 = vmul.f32 %v1169, %v1361
          %v1426 = vmul.f32 %v1170, %v1362
          %v1427 = vmul.f32 %v1171, %v1363
          %v1428 = vmul.f32 %v1172, %v1364
          %v1429 = vmul.f32 %v1173, %v1365
          %v1430 = vmul.f32 %v1174, %v1366
          %v1431 = vmul.f32 %v1175, %v1367
          %v1432 = vmul.f32 %v1176, %v1368
          %v1433 = vmul.f32 %v1177, %v1369
          %v1434 = vmul.f32 %v1178, %v1370
          %v1435 = vmul.f32 %v1179, %v1371
          %v1436 = vmul.f32 %v1180, %v1372
          %v1437 = vmul.f32 %v1181, %v1373
          %v1438 = vmul.f32 %v1182, %v1374
          %v1439 = vmul.f32 %v1183, %v1375
          %v1440 = vmul.f32 %v1184, %v1376
          %v1441 = vmul.f32 %v1185, %v1377
          %v1442 = vmul.f32 %v1186, %v1378
          %v1443 = vmul.f32 %v1187, %v1379
          %v1444 = vmul.f32 %v1188, %v1380
          %v1445 = vmul.f32 %v1189, %v1381
          %v1446 = vmul.f32 %v1190, %v1382
          %v1447 = vmul.f32 %v1191, %v1383
          %v1448 = vmul.f32 %v1192, %v1384
          %v1449 = vmul.f32 %v1193, %v1385
          %v1450 = vmul.f32 %v1194, %v1386
          %v1451 = vmul.f32 %v1195, %v1387
          %v1452 = vmul.f32 %v1196, %v1388
          %v1453 = vmul.f32 %v1197, %v1389
          %v1454 = vld [vmem:[#allocation8] sm:$0xff]
          %v1455 = vld [vmem:[#allocation8 + $0x8] sm:$0xff]
          %v1456 = vld [vmem:[#allocation8 + $0x10] sm:$0xff]
          %v1457 = vld [vmem:[#allocation8 + $0x18] sm:$0xff]
          %v1458 = vld [vmem:[#allocation8 + $0x20] sm:$0xff]
          %v1459 = vld [vmem:[#allocation8 + $0x28] sm:$0xff]
          %v1460 = vld [vmem:[#allocation8 + $0x30] sm:$0xff]
          %v1461 = vld [vmem:[#allocation8 + $0x38] sm:$0xff]
          %v1462 = vld [vmem:[#allocation8 + $0x40] sm:$0xff]
          %v1463 = vld [vmem:[#allocation8 + $0x48] sm:$0xff]
          %v1464 = vld [vmem:[#allocation8 + $0x50] sm:$0xff]
          %v1465 = vld [vmem:[#allocation8 + $0x58] sm:$0xff]
          %v1466 = vld [vmem:[#allocation8 + $0x60] sm:$0xff]
          %v1467 = vld [vmem:[#allocation8 + $0x68] sm:$0xff]
          %v1468 = vld [vmem:[#allocation8 + $0x70] sm:$0xff]
          %v1469 = vld [vmem:[#allocation8 + $0x78] sm:$0xff]
          %v1470 = vld [vmem:[#allocation8 + $0x80] sm:$0xff]
          %v1471 = vld [vmem:[#allocation8 + $0x88] sm:$0xff]
          %v1472 = vld [vmem:[#allocation8 + $0x90] sm:$0xff]
          %v1473 = vld [vmem:[#allocation8 + $0x98] sm:$0xff]
          %v1474 = vld [vmem:[#allocation8 + $0xa0] sm:$0xff]
          %v1475 = vld [vmem:[#allocation8 + $0xa8] sm:$0xff]
          %v1476 = vld [vmem:[#allocation8 + $0xb0] sm:$0xff]
          %v1477 = vld [vmem:[#allocation8 + $0xb8] sm:$0xff]
          %v1478 = vld [vmem:[#allocation8 + $0xc0] sm:$0xff]
          %v1479 = vld [vmem:[#allocation8 + $0xc8] sm:$0xff]
          %v1480 = vld [vmem:[#allocation8 + $0xd0] sm:$0xff]
          %v1481 = vld [vmem:[#allocation8 + $0xd8] sm:$0xff]
          %v1482 = vld [vmem:[#allocation8 + $0xe0] sm:$0xff]
          %v1483 = vld [vmem:[#allocation8 + $0xe8] sm:$0xff]
          %v1484 = vld [vmem:[#allocation8 + $0xf0] sm:$0xff]
          %v1485 = vld [vmem:[#allocation8 + $0xf8] sm:$0xff]
          %v1486 = vld [vmem:[#allocation8 + $0x100] sm:$0xff]
          %v1487 = vld [vmem:[#allocation8 + $0x108] sm:$0xff]
          %v1488 = vld [vmem:[#allocation8 + $0x110] sm:$0xff]
          %v1489 = vld [vmem:[#allocation8 + $0x118] sm:$0xff]
          %v1490 = vld [vmem:[#allocation8 + $0x120] sm:$0xff]
          %v1491 = vld [vmem:[#allocation8 + $0x128] sm:$0xff]
          %v1492 = vld [vmem:[#allocation8 + $0x130] sm:$0xff]
          %v1493 = vld [vmem:[#allocation8 + $0x138] sm:$0xff]
          %v1494 = vld [vmem:[#allocation8 + $0x140] sm:$0xff]
          %v1495 = vld [vmem:[#allocation8 + $0x148] sm:$0xff]
          %v1496 = vld [vmem:[#allocation8 + $0x150] sm:$0xff]
          %v1497 = vld [vmem:[#allocation8 + $0x158] sm:$0xff]
          %v1498 = vld [vmem:[#allocation8 + $0x160] sm:$0xff]
          %v1499 = vld [vmem:[#allocation8 + $0x168] sm:$0xff]
          %v1500 = vld [vmem:[#allocation8 + $0x170] sm:$0xff]
          %v1501 = vld [vmem:[#allocation8 + $0x178] sm:$0xff]
          %v1502 = vld [vmem:[#allocation8 + $0x180] sm:$0xff]
          %v1503 = vld [vmem:[#allocation8 + $0x188] sm:$0xff]
          %v1504 = vld [vmem:[#allocation8 + $0x190] sm:$0xff]
          %v1505 = vld [vmem:[#allocation8 + $0x198] sm:$0xff]
          %v1506 = vld [vmem:[#allocation8 + $0x1a0] sm:$0xff]
          %v1507 = vld [vmem:[#allocation8 + $0x1a8] sm:$0xff]
          %v1508 = vld [vmem:[#allocation8 + $0x1b0] sm:$0xff]
          %v1509 = vld [vmem:[#allocation8 + $0x1b8] sm:$0xff]
          %v1510 = vld [vmem:[#allocation8 + $0x1c0] sm:$0xff]
          %v1511 = vld [vmem:[#allocation8 + $0x1c8] sm:$0xff]
          %v1512 = vld [vmem:[#allocation8 + $0x1d0] sm:$0xff]
          %v1513 = vld [vmem:[#allocation8 + $0x1d8] sm:$0xff]
          %v1514 = vld [vmem:[#allocation8 + $0x1e0] sm:$0xff]
          %v1515 = vld [vmem:[#allocation8 + $0x1e8] sm:$0xff]
          %v1516 = vld [vmem:[#allocation8 + $0x1f0] sm:$0xff]
          %v1517 = vld [vmem:[#allocation8 + $0x1f8] sm:$0xff]
          %v1518 = vld [vmem:[%s4] sm:$0x3]
          %v1520 = vlaneseq
          %v1521 = vshrl.u32 %v1520, 7
          %v1522 = vsub.s32 0, %v1521
          %v1523 = vrot.slane %v1518, %v1522
          %v1524 = vlaneseq
          %v1525 = vshrl.u32 %v1524, 7
          %v1526 = vsub.s32 1, %v1525
          %v1527 = vrot.slane %v1518, %v1526
          %1530 = vmatprep.subr.mxu0 %v1455
          %1531 = vmatpush1.msra.mxu0 %v1454
          %1532 = vmatprep.subr.mxu0 %v1457
          %1533 = vmatpush1.msra.mxu0 %v1456
          %1534 = vmatprep.subr.mxu0 %v1459
          %1535 = vmatpush1.msra.mxu0 %v1458
          %1536 = vmatprep.subr.mxu0 %v1461
          %1537 = vmatpush1.msra.mxu0 %v1460
          %1538 = vmatprep.subr.mxu0 %v1463
          %1539 = vmatpush1.msra.mxu0 %v1462
          %1540 = vmatprep.subr.mxu0 %v1465
          %1541 = vmatpush1.msra.mxu0 %v1464
          %1542 = vmatprep.subr.mxu0 %v1467
          %1543 = vmatpush1.msra.mxu0 %v1466
          %1544 = vmatprep.subr.mxu0 %v1469
          %1545 = vmatpush1.msra.mxu0 %v1468
          %1546 = vmatprep.subr.mxu0 %v1471
          %1547 = vmatpush1.msra.mxu0 %v1470
          %1548 = vmatprep.subr.mxu0 %v1473
          %1549 = vmatpush1.msra.mxu0 %v1472
          %1550 = vmatprep.subr.mxu0 %v1475
          %1551 = vmatpush1.msra.mxu0 %v1474
          %1552 = vmatprep.subr.mxu0 %v1477
          %1553 = vmatpush1.msra.mxu0 %v1476
          %1554 = vmatprep.subr.mxu0 %v1479
          %1555 = vmatpush1.msra.mxu0 %v1478
          %1556 = vmatprep.subr.mxu0 %v1481
          %1557 = vmatpush1.msra.mxu0 %v1480
          %1558 = vmatprep.subr.mxu0 %v1483
          %1559 = vmatpush1.msra.mxu0 %v1482
          %1560 = vmatprep.subr.mxu0 %v1485
          %1561 = vmatpush1.msra.mxu0 %v1484
          %1562 = vmatprep.subr.mxu0 %v1487
          %1563 = vmatpush1.msra.mxu0 %v1486
          %1564 = vmatprep.subr.mxu0 %v1489
          %1565 = vmatpush1.msra.mxu0 %v1488
          %1566 = vmatprep.subr.mxu0 %v1491
          %1567 = vmatpush1.msra.mxu0 %v1490
          %1568 = vmatprep.subr.mxu0 %v1493
          %1569 = vmatpush1.msra.mxu0 %v1492
          %1570 = vmatprep.subr.mxu0 %v1495
          %1571 = vmatpush1.msra.mxu0 %v1494
          %1572 = vmatprep.subr.mxu0 %v1497
          %1573 = vmatpush1.msra.mxu0 %v1496
          %1574 = vmatprep.subr.mxu0 %v1499
          %1575 = vmatpush1.msra.mxu0 %v1498
          %1576 = vmatprep.subr.mxu0 %v1501
          %1577 = vmatpush1.msra.mxu0 %v1500
          %1578 = vmatprep.subr.mxu0 %v1503
          %1579 = vmatpush1.msra.mxu0 %v1502
          %1580 = vmatprep.subr.mxu0 %v1505
          %1581 = vmatpush1.msra.mxu0 %v1504
          %1582 = vmatprep.subr.mxu0 %v1507
          %1583 = vmatpush1.msra.mxu0 %v1506
          %1584 = vmatprep.subr.mxu0 %v1509
          %1585 = vmatpush1.msra.mxu0 %v1508
          %1586 = vmatprep.subr.mxu0 %v1511
          %1587 = vmatpush1.msra.mxu0 %v1510
          %1588 = vmatprep.subr.mxu0 %v1513
          %1589 = vmatpush1.msra.mxu0 %v1512
          %1590 = vmatprep.subr.mxu0 %v1515
          %1591 = vmatpush1.msra.mxu0 %v1514
          %1592 = vmatprep.subr.mxu0 %v1517
          %1593 = vmatpush1.msra.mxu0 %v1516
          %1594 = vmatprep.mubr.f32.mxu0 %v1391
          %1595 = vmatmul.mubr.f32.gmra.mrb[0].mxu0 %v1390
          %v1596 = vpop.f32.mrb[0].mxu0
          %v1597 = vadd.f32 %v1523, %v1596
          %v1598 = vpop.f32.mrb[0].mxu0
          %v1599 = vadd.f32 %v1527, %v1598
          %1600 = vmatprep.mubr.f32.mxu0 %v1393
          %1601 = vmatmul.mubr.f32.gmra.mrb[0].mxu0 %v1392
          %v1602 = vpop.f32.mrb[0].mxu0
          %v1603 = vadd.f32 %v1523, %v1602
          %v1604 = vpop.f32.mrb[0].mxu0
          %v1605 = vadd.f32 %v1527, %v1604
          %1606 = vmatprep.mubr.f32.mxu0 %v1395
          %1607 = vmatmul.mubr.f32.gmra.mrb[0].mxu0 %v1394
          %v1608 = vpop.f32.mrb[0].mxu0
          %v1609 = vadd.f32 %v1523, %v1608
          %v1610 = vpop.f32.mrb[0].mxu0
          %v1611 = vadd.f32 %v1527, %v1610
          %1612 = vmatprep.mubr.f32.mxu0 %v1397
          %1613 = vmatmul.mubr.f32.gmra.mrb[0].mxu0 %v1396
          %v1614 = vpop.f32.mrb[0].mxu0
          %v1615 = vadd.f32 %v1523, %v1614
          %v1616 = vpop.f32.mrb[0].mxu0
          %v1617 = vadd.f32 %v1527, %v1616
          %1618 = vmatprep.mubr.f32.mxu0 %v1399
          %1619 = vmatmul.mubr.f32.gmra.mrb[0].mxu0 %v1398
          %v1620 = vpop.f32.mrb[0].mxu0
          %v1621 = vadd.f32 %v1523, %v1620
          %v1622 = vpop.f32.mrb[0].mxu0
          %v1623 = vadd.f32 %v1527, %v1622
          %1624 = vmatprep.mubr.f32.mxu0 %v1401
          %1625 = vmatmul.mubr.f32.gmra.mrb[0].mxu0 %v1400
          %v1626 = vpop.f32.mrb[0].mxu0
          %v1627 = vadd.f32 %v1523, %v1626
          %v1628 = vpop.f32.mrb[0].mxu0
          %v1629 = vadd.f32 %v1527, %v1628
          %1630 = vmatprep.mubr.f32.mxu0 %v1403
          %1631 = vmatmul.mubr.f32.gmra.mrb[0].mxu0 %v1402
          %v1632 = vpop.f32.mrb[0].mxu0
          %v1633 = vadd.f32 %v1523, %v1632
          %v1634 = vpop.f32.mrb[0].mxu0
          %v1635 = vadd.f32 %v1527, %v1634
          %1636 = vmatprep.mubr.f32.mxu0 %v1405
          %1637 = vmatmul.mubr.f32.gmra.mrb[0].mxu0 %v1404
          %v1638 = vpop.f32.mrb[0].mxu0
          %v1639 = vadd.f32 %v1523, %v1638
          %v1640 = vpop.f32.mrb[0].mxu0
          %v1641 = vadd.f32 %v1527, %v1640
          %1642 = vmatprep.mubr.f32.mxu0 %v1407
          %1643 = vmatmul.mubr.f32.gmra.mrb[0].mxu0 %v1406
          %v1644 = vpop.f32.mrb[0].mxu0
          %v1645 = vadd.f32 %v1523, %v1644
          %v1646 = vpop.f32.mrb[0].mxu0
          %v1647 = vadd.f32 %v1527, %v1646
          %1648 = vmatprep.mubr.f32.mxu0 %v1409
          %1649 = vmatmul.mubr.f32.gmra.mrb[0].mxu0 %v1408
          %v1650 = vpop.f32.mrb[0].mxu0
          %v1651 = vadd.f32 %v1523, %v1650
          %v1652 = vpop.f32.mrb[0].mxu0
          %v1653 = vadd.f32 %v1527, %v1652
          %1654 = vmatprep.mubr.f32.mxu0 %v1411
          %1655 = vmatmul.mubr.f32.gmra.mrb[0].mxu0 %v1410
          %v1656 = vpop.f32.mrb[0].mxu0
          %v1657 = vadd.f32 %v1523, %v1656
          %v1658 = vpop.f32.mrb[0].mxu0
          %v1659 = vadd.f32 %v1527, %v1658
          %1660 = vmatprep.mubr.f32.mxu0 %v1413
          %1661 = vmatmul.mubr.f32.gmra.mrb[0].mxu0 %v1412
          %v1662 = vpop.f32.mrb[0].mxu0
          %v1663 = vadd.f32 %v1523, %v1662
          %v1664 = vpop.f32.mrb[0].mxu0
          %v1665 = vadd.f32 %v1527, %v1664
          %1666 = vmatprep.mubr.f32.mxu0 %v1415
          %1667 = vmatmul.mubr.f32.gmra.mrb[0].mxu0 %v1414
          %v1668 = vpop.f32.mrb[0].mxu0
          %v1669 = vadd.f32 %v1523, %v1668
          %v1670 = vpop.f32.mrb[0].mxu0
          %v1671 = vadd.f32 %v1527, %v1670
          %1672 = vmatprep.mubr.f32.mxu0 %v1417
          %1673 = vmatmul.mubr.f32.gmra.mrb[0].mxu0 %v1416
          %v1674 = vpop.f32.mrb[0].mxu0
          %v1675 = vadd.f32 %v1523, %v1674
          %v1676 = vpop.f32.mrb[0].mxu0
          %v1677 = vadd.f32 %v1527, %v1676
          %1678 = vmatprep.mubr.f32.mxu0 %v1419
          %1679 = vmatmul.mubr.f32.gmra.mrb[0].mxu0 %v1418
          %v1680 = vpop.f32.mrb[0].mxu0
          %v1681 = vadd.f32 %v1523, %v1680
          %v1682 = vpop.f32.mrb[0].mxu0
          %v1683 = vadd.f32 %v1527, %v1682
          %1684 = vmatprep.mubr.f32.mxu0 %v1421
          %1685 = vmatmul.mubr.f32.gmra.mrb[0].mxu0 %v1420
          %v1686 = vpop.f32.mrb[0].mxu0
          %v1687 = vadd.f32 %v1523, %v1686
          %v1688 = vpop.f32.mrb[0].mxu0
          %v1689 = vadd.f32 %v1527, %v1688
          %1690 = vmatprep.mubr.f32.mxu0 %v1423
          %1691 = vmatmul.mubr.f32.gmra.mrb[0].mxu0 %v1422
          %v1692 = vpop.f32.mrb[0].mxu0
          %v1693 = vadd.f32 %v1523, %v1692
          %v1694 = vpop.f32.mrb[0].mxu0
          %v1695 = vadd.f32 %v1527, %v1694
          %1696 = vmatprep.mubr.f32.mxu0 %v1425
          %1697 = vmatmul.mubr.f32.gmra.mrb[0].mxu0 %v1424
          %v1698 = vpop.f32.mrb[0].mxu0
          %v1699 = vadd.f32 %v1523, %v1698
          %v1700 = vpop.f32.mrb[0].mxu0
          %v1701 = vadd.f32 %v1527, %v1700
          %1702 = vmatprep.mubr.f32.mxu0 %v1427
          %1703 = vmatmul.mubr.f32.gmra.mrb[0].mxu0 %v1426
          %v1704 = vpop.f32.mrb[0].mxu0
          %v1705 = vadd.f32 %v1523, %v1704
          %v1706 = vpop.f32.mrb[0].mxu0
          %v1707 = vadd.f32 %v1527, %v1706
          %1708 = vmatprep.mubr.f32.mxu0 %v1429
          %1709 = vmatmul.mubr.f32.gmra.mrb[0].mxu0 %v1428
          %v1710 = vpop.f32.mrb[0].mxu0
          %v1711 = vadd.f32 %v1523, %v1710
          %v1712 = vpop.f32.mrb[0].mxu0
          %v1713 = vadd.f32 %v1527, %v1712
          %1714 = vmatprep.mubr.f32.mxu0 %v1431
          %1715 = vmatmul.mubr.f32.gmra.mrb[0].mxu0 %v1430
          %v1716 = vpop.f32.mrb[0].mxu0
          %v1717 = vadd.f32 %v1523, %v1716
          %v1718 = vpop.f32.mrb[0].mxu0
          %v1719 = vadd.f32 %v1527, %v1718
          %1720 = vmatprep.mubr.f32.mxu0 %v1433
          %1721 = vmatmul.mubr.f32.gmra.mrb[0].mxu0 %v1432
          %v1722 = vpop.f32.mrb[0].mxu0
          %v1723 = vadd.f32 %v1523, %v1722
          %v1724 = vpop.f32.mrb[0].mxu0
          %v1725 = vadd.f32 %v1527, %v1724
          %1726 = vmatprep.mubr.f32.mxu0 %v1435
          %1727 = vmatmul.mubr.f32.gmra.mrb[0].mxu0 %v1434
          %v1728 = vpop.f32.mrb[0].mxu0
          %v1729 = vadd.f32 %v1523, %v1728
          %v1730 = vpop.f32.mrb[0].mxu0
          %v1731 = vadd.f32 %v1527, %v1730
          %1732 = vmatprep.mubr.f32.mxu0 %v1437
          %1733 = vmatmul.mubr.f32.gmra.mrb[0].mxu0 %v1436
          %v1734 = vpop.f32.mrb[0].mxu0
          %v1735 = vadd.f32 %v1523, %v1734
          %v1736 = vpop.f32.mrb[0].mxu0
          %v1737 = vadd.f32 %v1527, %v1736
          %1738 = vmatprep.mubr.f32.mxu0 %v1439
          %1739 = vmatmul.mubr.f32.gmra.mrb[0].mxu0 %v1438
          %v1740 = vpop.f32.mrb[0].mxu0
          %v1741 = vadd.f32 %v1523, %v1740
          %v1742 = vpop.f32.mrb[0].mxu0
          %v1743 = vadd.f32 %v1527, %v1742
          %1744 = vmatprep.mubr.f32.mxu0 %v1441
          %1745 = vmatmul.mubr.f32.gmra.mrb[0].mxu0 %v1440
          %v1746 = vpop.f32.mrb[0].mxu0
          %v1747 = vadd.f32 %v1523, %v1746
          %v1748 = vpop.f32.mrb[0].mxu0
          %v1749 = vadd.f32 %v1527, %v1748
          %1750 = vmatprep.mubr.f32.mxu0 %v1443
          %1751 = vmatmul.mubr.f32.gmra.mrb[0].mxu0 %v1442
          %v1752 = vpop.f32.mrb[0].mxu0
          %v1753 = vadd.f32 %v1523, %v1752
          %v1754 = vpop.f32.mrb[0].mxu0
          %v1755 = vadd.f32 %v1527, %v1754
          %1756 = vmatprep.mubr.f32.mxu0 %v1445
          %1757 = vmatmul.mubr.f32.gmra.mrb[0].mxu0 %v1444
          %v1758 = vpop.f32.mrb[0].mxu0
          %v1759 = vadd.f32 %v1523, %v1758
          %v1760 = vpop.f32.mrb[0].mxu0
          %v1761 = vadd.f32 %v1527, %v1760
          %1762 = vmatprep.mubr.f32.mxu0 %v1447
          %1763 = vmatmul.mubr.f32.gmra.mrb[0].mxu0 %v1446
          %v1764 = vpop.f32.mrb[0].mxu0
          %v1765 = vadd.f32 %v1523, %v1764
          %v1766 = vpop.f32.mrb[0].mxu0
          %v1767 = vadd.f32 %v1527, %v1766
          %1768 = vmatprep.mubr.f32.mxu0 %v1449
          %1769 = vmatmul.mubr.f32.gmra.mrb[0].mxu0 %v1448
          %v1770 = vpop.f32.mrb[0].mxu0
          %v1771 = vadd.f32 %v1523, %v1770
          %v1772 = vpop.f32.mrb[0].mxu0
          %v1773 = vadd.f32 %v1527, %v1772
          %1774 = vmatprep.mubr.f32.mxu0 %v1451
          %1775 = vmatmul.mubr.f32.gmra.mrb[0].mxu0 %v1450
          %v1776 = vpop.f32.mrb[0].mxu0
          %v1777 = vadd.f32 %v1523, %v1776
          %v1778 = vpop.f32.mrb[0].mxu0
          %v1779 = vadd.f32 %v1527, %v1778
          %1780 = vmatprep.mubr.f32.mxu0 %v1453
          %1781 = vmatmul.mubr.f32.gmra.mrb[0].mxu0 %v1452
          %v1782 = vpop.f32.mrb[0].mxu0
          %v1783 = vadd.f32 %v1523, %v1782
          %v1784 = vpop.f32.mrb[0].mxu0
          %v1785 = vadd.f32 %v1527, %v1784
          %1786 = vdwg.mxu0
          %v1787 = vadd.f32 %v1597, %v1070
          %v1788 = vadd.f32 %v1599, %v1071
          %v1789 = vadd.f32 %v1603, %v1072
          %v1790 = vadd.f32 %v1605, %v1073
          %v1791 = vadd.f32 %v1609, %v1074
          %v1792 = vadd.f32 %v1611, %v1075
          %v1793 = vadd.f32 %v1615, %v1076
          %v1794 = vadd.f32 %v1617, %v1077
          %v1795 = vadd.f32 %v1621, %v1078
          %v1796 = vadd.f32 %v1623, %v1079
          %v1797 = vadd.f32 %v1627, %v1080
          %v1798 = vadd.f32 %v1629, %v1081
          %v1799 = vadd.f32 %v1633, %v1082
          %v1800 = vadd.f32 %v1635, %v1083
          %v1801 = vadd.f32 %v1639, %v1084
          %v1802 = vadd.f32 %v1641, %v1085
          %v1803 = vadd.f32 %v1645, %v1086
          %v1804 = vadd.f32 %v1647, %v1087
          %v1805 = vadd.f32 %v1651, %v1088
          %v1806 = vadd.f32 %v1653, %v1089
          %v1807 = vadd.f32 %v1657, %v1090
          %v1808 = vadd.f32 %v1659, %v1091
          %v1809 = vadd.f32 %v1663, %v1092
          %v1810 = vadd.f32 %v1665, %v1093
          %v1811 = vadd.f32 %v1669, %v1094
          %v1812 = vadd.f32 %v1671, %v1095
          %v1813 = vadd.f32 %v1675, %v1096
          %v1814 = vadd.f32 %v1677, %v1097
          %v1815 = vadd.f32 %v1681, %v1098
          %v1816 = vadd.f32 %v1683, %v1099
          %v1817 = vadd.f32 %v1687, %v1100
          %v1818 = vadd.f32 %v1689, %v1101
          %v1819 = vadd.f32 %v1693, %v1102
          %v1820 = vadd.f32 %v1695, %v1103
          %v1821 = vadd.f32 %v1699, %v1104
          %v1822 = vadd.f32 %v1701, %v1105
          %v1823 = vadd.f32 %v1705, %v1106
          %v1824 = vadd.f32 %v1707, %v1107
          %v1825 = vadd.f32 %v1711, %v1108
          %v1826 = vadd.f32 %v1713, %v1109
          %v1827 = vadd.f32 %v1717, %v1110
          %v1828 = vadd.f32 %v1719, %v1111
          %v1829 = vadd.f32 %v1723, %v1112
          %v1830 = vadd.f32 %v1725, %v1113
          %v1831 = vadd.f32 %v1729, %v1114
          %v1832 = vadd.f32 %v1731, %v1115
          %v1833 = vadd.f32 %v1735, %v1116
          %v1834 = vadd.f32 %v1737, %v1117
          %v1835 = vadd.f32 %v1741, %v1118
          %v1836 = vadd.f32 %v1743, %v1119
          %v1837 = vadd.f32 %v1747, %v1120
          %v1838 = vadd.f32 %v1749, %v1121
          %v1839 = vadd.f32 %v1753, %v1122
          %v1840 = vadd.f32 %v1755, %v1123
          %v1841 = vadd.f32 %v1759, %v1124
          %v1842 = vadd.f32 %v1761, %v1125
          %v1843 = vadd.f32 %v1765, %v1126
          %v1844 = vadd.f32 %v1767, %v1127
          %v1845 = vadd.f32 %v1771, %v1128
          %v1846 = vadd.f32 %v1773, %v1129
          %v1847 = vadd.f32 %v1777, %v1130
          %v1848 = vadd.f32 %v1779, %v1131
          %v1849 = vadd.f32 %v1783, %v1132
          %v1850 = vadd.f32 %v1785, %v1133
          %v1851 = vadd.f32 %v1787, %v1788
          %1852 = vadd.xlane.f32.xlu0 %v1851
          %v1853 = vpop.xlane.xlu0 %1852
          %v1854 = vadd.f32 %v1789, %v1790
          %1855 = vadd.xlane.f32.xlu0 %v1854
          %v1856 = vpop.xlane.xlu0 %1855
          %v1857 = vadd.f32 %v1791, %v1792
          %1858 = vadd.xlane.f32.xlu0 %v1857
          %v1859 = vpop.xlane.xlu0 %1858
          %v1860 = vadd.f32 %v1793, %v1794
          %1861 = vadd.xlane.f32.xlu0 %v1860
          %v1862 = vpop.xlane.xlu0 %1861
          %v1863 = vadd.f32 %v1795, %v1796
          %1864 = vadd.xlane.f32.xlu0 %v1863
          %v1865 = vpop.xlane.xlu0 %1864
          %v1866 = vadd.f32 %v1797, %v1798
          %1867 = vadd.xlane.f32.xlu0 %v1866
          %v1868 = vpop.xlane.xlu0 %1867
          %v1869 = vadd.f32 %v1799, %v1800
          %1870 = vadd.xlane.f32.xlu0 %v1869
          %v1871 = vpop.xlane.xlu0 %1870
          %v1872 = vadd.f32 %v1801, %v1802
          %1873 = vadd.xlane.f32.xlu0 %v1872
          %v1874 = vpop.xlane.xlu0 %1873
          %v1875 = vadd.f32 %v1803, %v1804
          %1876 = vadd.xlane.f32.xlu0 %v1875
          %v1877 = vpop.xlane.xlu0 %1876
          %v1878 = vadd.f32 %v1805, %v1806
          %1879 = vadd.xlane.f32.xlu0 %v1878
          %v1880 = vpop.xlane.xlu0 %1879
          %v1881 = vadd.f32 %v1807, %v1808
          %1882 = vadd.xlane.f32.xlu0 %v1881
          %v1883 = vpop.xlane.xlu0 %1882
          %v1884 = vadd.f32 %v1809, %v1810
          %1885 = vadd.xlane.f32.xlu0 %v1884
          %v1886 = vpop.xlane.xlu0 %1885
          %v1887 = vadd.f32 %v1811, %v1812
          %1888 = vadd.xlane.f32.xlu0 %v1887
          %v1889 = vpop.xlane.xlu0 %1888
          %v1890 = vadd.f32 %v1813, %v1814
          %1891 = vadd.xlane.f32.xlu0 %v1890
          %v1892 = vpop.xlane.xlu0 %1891
          %v1893 = vadd.f32 %v1815, %v1816
          %1894 = vadd.xlane.f32.xlu0 %v1893
          %v1895 = vpop.xlane.xlu0 %1894
          %v1896 = vadd.f32 %v1817, %v1818
          %1897 = vadd.xlane.f32.xlu0 %v1896
          %v1898 = vpop.xlane.xlu0 %1897
          %v1899 = vadd.f32 %v1819, %v1820
          %1900 = vadd.xlane.f32.xlu0 %v1899
          %v1901 = vpop.xlane.xlu0 %1900
          %v1902 = vadd.f32 %v1821, %v1822
          %1903 = vadd.xlane.f32.xlu0 %v1902
          %v1904 = vpop.xlane.xlu0 %1903
          %v1905 = vadd.f32 %v1823, %v1824
          %1906 = vadd.xlane.f32.xlu0 %v1905
          %v1907 = vpop.xlane.xlu0 %1906
          %v1908 = vadd.f32 %v1825, %v1826
          %1909 = vadd.xlane.f32.xlu0 %v1908
          %v1910 = vpop.xlane.xlu0 %1909
          %v1911 = vadd.f32 %v1827, %v1828
          %1912 = vadd.xlane.f32.xlu0 %v1911
          %v1913 = vpop.xlane.xlu0 %1912
          %v1914 = vadd.f32 %v1829, %v1830
          %1915 = vadd.xlane.f32.xlu0 %v1914
          %v1916 = vpop.xlane.xlu0 %1915
          %v1917 = vadd.f32 %v1831, %v1832
          %1918 = vadd.xlane.f32.xlu0 %v1917
          %v1919 = vpop.xlane.xlu0 %1918
          %v1920 = vadd.f32 %v1833, %v1834
          %1921 = vadd.xlane.f32.xlu0 %v1920
          %v1922 = vpop.xlane.xlu0 %1921
          %v1923 = vadd.f32 %v1835, %v1836
          %1924 = vadd.xlane.f32.xlu0 %v1923
          %v1925 = vpop.xlane.xlu0 %1924
          %v1926 = vadd.f32 %v1837, %v1838
          %1927 = vadd.xlane.f32.xlu0 %v1926
          %v1928 = vpop.xlane.xlu0 %1927
          %v1929 = vadd.f32 %v1839, %v1840
          %1930 = vadd.xlane.f32.xlu0 %v1929
          %v1931 = vpop.xlane.xlu0 %1930
          %v1932 = vadd.f32 %v1841, %v1842
          %1933 = vadd.xlane.f32.xlu0 %v1932
          %v1934 = vpop.xlane.xlu0 %1933
          %v1935 = vadd.f32 %v1843, %v1844
          %1936 = vadd.xlane.f32.xlu0 %v1935
          %v1937 = vpop.xlane.xlu0 %1936
          %v1938 = vadd.f32 %v1845, %v1846
          %1939 = vadd.xlane.f32.xlu0 %v1938
          %v1940 = vpop.xlane.xlu0 %1939
          %v1941 = vadd.f32 %v1847, %v1848
          %1942 = vadd.xlane.f32.xlu0 %v1941
          %v1943 = vpop.xlane.xlu0 %1942
          %v1944 = vadd.f32 %v1849, %v1850
          %1945 = vadd.xlane.f32.xlu0 %v1944
          %v1946 = vpop.xlane.xlu0 %1945
          %v1947 = vrcp.pop 256.0
          %v1948 = vmul.f32 %v1853, %v1947
          %v1949 = vmul.f32 %v1856, %v1947
          %v1950 = vmul.f32 %v1859, %v1947
          %v1951 = vmul.f32 %v1862, %v1947
          %v1952 = vmul.f32 %v1865, %v1947
          %v1953 = vmul.f32 %v1868, %v1947
          %v1954 = vmul.f32 %v1871, %v1947
          %v1955 = vmul.f32 %v1874, %v1947
          %v1956 = vmul.f32 %v1877, %v1947
          %v1957 = vmul.f32 %v1880, %v1947
          %v1958 = vmul.f32 %v1883, %v1947
          %v1959 = vmul.f32 %v1886, %v1947
          %v1960 = vmul.f32 %v1889, %v1947
          %v1961 = vmul.f32 %v1892, %v1947
          %v1962 = vmul.f32 %v1895, %v1947
          %v1963 = vmul.f32 %v1898, %v1947
          %v1964 = vmul.f32 %v1901, %v1947
          %v1965 = vmul.f32 %v1904, %v1947
          %v1966 = vmul.f32 %v1907, %v1947
          %v1967 = vmul.f32 %v1910, %v1947
          %v1968 = vmul.f32 %v1913, %v1947
          %v1969 = vmul.f32 %v1916, %v1947
          %v1970 = vmul.f32 %v1919, %v1947
          %v1971 = vmul.f32 %v1922, %v1947
          %v1972 = vmul.f32 %v1925, %v1947
          %v1973 = vmul.f32 %v1928, %v1947
          %v1974 = vmul.f32 %v1931, %v1947
          %v1975 = vmul.f32 %v1934, %v1947
          %v1976 = vmul.f32 %v1937, %v1947
          %v1977 = vmul.f32 %v1940, %v1947
          %v1978 = vmul.f32 %v1943, %v1947
          %v1979 = vmul.f32 %v1946, %v1947
          %v1980 = vsub.f32 %v1787, %v1948
          %v1981 = vsub.f32 %v1788, %v1948
          %v1982 = vsub.f32 %v1789, %v1949
          %v1983 = vsub.f32 %v1790, %v1949
          %v1984 = vsub.f32 %v1791, %v1950
          %v1985 = vsub.f32 %v1792, %v1950
          %v1986 = vsub.f32 %v1793, %v1951
          %v1987 = vsub.f32 %v1794, %v1951
          %v1988 = vsub.f32 %v1795, %v1952
          %v1989 = vsub.f32 %v1796, %v1952
          %v1990 = vsub.f32 %v1797, %v1953
          %v1991 = vsub.f32 %v1798, %v1953
          %v1992 = vsub.f32 %v1799, %v1954
          %v1993 = vsub.f32 %v1800, %v1954
          %v1994 = vsub.f32 %v1801, %v1955
          %v1995 = vsub.f32 %v1802, %v1955
          %v1996 = vsub.f32 %v1803, %v1956
          %v1997 = vsub.f32 %v1804, %v1956
          %v1998 = vsub.f32 %v1805, %v1957
          %v1999 = vsub.f32 %v1806, %v1957
          %v2000 = vsub.f32 %v1807, %v1958
          %v2001 = vsub.f32 %v1808, %v1958
          %v2002 = vsub.f32 %v1809, %v1959
          %v2003 = vsub.f32 %v1810, %v1959
          %v2004 = vsub.f32 %v1811, %v1960
          %v2005 = vsub.f32 %v1812, %v1960
          %v2006 = vsub.f32 %v1813, %v1961
          %v2007 = vsub.f32 %v1814, %v1961
          %v2008 = vsub.f32 %v1815, %v1962
          %v2009 = vsub.f32 %v1816, %v1962
          %v2010 = vsub.f32 %v1817, %v1963
          %v2011 = vsub.f32 %v1818, %v1963
          %v2012 = vsub.f32 %v1819, %v1964
          %v2013 = vsub.f32 %v1820, %v1964
          %v2014 = vsub.f32 %v1821, %v1965
          %v2015 = vsub.f32 %v1822, %v1965
          %v2016 = vsub.f32 %v1823, %v1966
          %v2017 = vsub.f32 %v1824, %v1966
          %v2018 = vsub.f32 %v1825, %v1967
          %v2019 = vsub.f32 %v1826, %v1967
          %v2020 = vsub.f32 %v1827, %v1968
          %v2021 = vsub.f32 %v1828, %v1968
          %v2022 = vsub.f32 %v1829, %v1969
          %v2023 = vsub.f32 %v1830, %v1969
          %v2024 = vsub.f32 %v1831, %v1970
          %v2025 = vsub.f32 %v1832, %v1970
          %v2026 = vsub.f32 %v1833, %v1971
          %v2027 = vsub.f32 %v1834, %v1971
          %v2028 = vsub.f32 %v1835, %v1972
          %v2029 = vsub.f32 %v1836, %v1972
          %v2030 = vsub.f32 %v1837, %v1973
          %v2031 = vsub.f32 %v1838, %v1973
          %v2032 = vsub.f32 %v1839, %v1974
          %v2033 = vsub.f32 %v1840, %v1974
          %v2034 = vsub.f32 %v1841, %v1975
          %v2035 = vsub.f32 %v1842, %v1975
          %v2036 = vsub.f32 %v1843, %v1976
          %v2037 = vsub.f32 %v1844, %v1976
          %v2038 = vsub.f32 %v1845, %v1977
          %v2039 = vsub.f32 %v1846, %v1977
          %v2040 = vsub.f32 %v1847, %v1978
          %v2041 = vsub.f32 %v1848, %v1978
          %v2042 = vsub.f32 %v1849, %v1979
          %v2043 = vsub.f32 %v1850, %v1979
          %v2044 = vmul.f32 %v1980, %v1980
          %v2045 = vmul.f32 %v1981, %v1981
          %v2046 = vmul.f32 %v1982, %v1982
          %v2047 = vmul.f32 %v1983, %v1983
          %v2048 = vmul.f32 %v1984, %v1984
          %v2049 = vmul.f32 %v1985, %v1985
          %v2050 = vmul.f32 %v1986, %v1986
          %v2051 = vmul.f32 %v1987, %v1987
          %v2052 = vmul.f32 %v1988, %v1988
          %v2053 = vmul.f32 %v1989, %v1989
          %v2054 = vmul.f32 %v1990, %v1990
          %v2055 = vmul.f32 %v1991, %v1991
          %v2056 = vmul.f32 %v1992, %v1992
          %v2057 = vmul.f32 %v1993, %v1993
          %v2058 = vmul.f32 %v1994, %v1994
          %v2059 = vmul.f32 %v1995, %v1995
          %v2060 = vmul.f32 %v1996, %v1996
          %v2061 = vmul.f32 %v1997, %v1997
          %v2062 = vmul.f32 %v1998, %v1998
          %v2063 = vmul.f32 %v1999, %v1999
          %v2064 = vmul.f32 %v2000, %v2000
          %v2065 = vmul.f32 %v2001, %v2001
          %v2066 = vmul.f32 %v2002, %v2002
          %v2067 = vmul.f32 %v2003, %v2003
          %v2068 = vmul.f32 %v2004, %v2004
          %v2069 = vmul.f32 %v2005, %v2005
          %v2070 = vmul.f32 %v2006, %v2006
          %v2071 = vmul.f32 %v2007, %v2007
          %v2072 = vmul.f32 %v2008, %v2008
          %v2073 = vmul.f32 %v2009, %v2009
          %v2074 = vmul.f32 %v2010, %v2010
          %v2075 = vmul.f32 %v2011, %v2011
          %v2076 = vmul.f32 %v2012, %v2012
          %v2077 = vmul.f32 %v2013, %v2013
          %v2078 = vmul.f32 %v2014, %v2014
          %v2079 = vmul.f32 %v2015, %v2015
          %v2080 = vmul.f32 %v2016, %v2016
          %v2081 = vmul.f32 %v2017, %v2017
          %v2082 = vmul.f32 %v2018, %v2018
          %v2083 = vmul.f32 %v2019, %v2019
          %v2084 = vmul.f32 %v2020, %v2020
          %v2085 = vmul.f32 %v2021, %v2021
          %v2086 = vmul.f32 %v2022, %v2022
          %v2087 = vmul.f32 %v2023, %v2023
          %v2088 = vmul.f32 %v2024, %v2024
          %v2089 = vmul.f32 %v2025, %v2025
          %v2090 = vmul.f32 %v2026, %v2026
          %v2091 = vmul.f32 %v2027, %v2027
          %v2092 = vmul.f32 %v2028, %v2028
          %v2093 = vmul.f32 %v2029, %v2029
          %v2094 = vmul.f32 %v2030, %v2030
          %v2095 = vmul.f32 %v2031, %v2031
          %v2096 = vmul.f32 %v2032, %v2032
          %v2097 = vmul.f32 %v2033, %v2033
          %v2098 = vmul.f32 %v2034, %v2034
          %v2099 = vmul.f32 %v2035, %v2035
          %v2100 = vmul.f32 %v2036, %v2036
          %v2101 = vmul.f32 %v2037, %v2037
          %v2102 = vmul.f32 %v2038, %v2038
          %v2103 = vmul.f32 %v2039, %v2039
          %v2104 = vmul.f32 %v2040, %v2040
          %v2105 = vmul.f32 %v2041, %v2041
          %v2106 = vmul.f32 %v2042, %v2042
          %v2107 = vmul.f32 %v2043, %v2043
          %v2108 = vadd.f32 %v2044, %v2045
          %2109 = vadd.xlane.f32.xlu0 %v2108
          %v2110 = vpop.xlane.xlu0 %2109
          %v2111 = vadd.f32 %v2046, %v2047
          %2112 = vadd.xlane.f32.xlu0 %v2111
          %v2113 = vpop.xlane.xlu0 %2112
          %v2114 = vadd.f32 %v2048, %v2049
          %2115 = vadd.xlane.f32.xlu0 %v2114
          %v2116 = vpop.xlane.xlu0 %2115
          %v2117 = vadd.f32 %v2050, %v2051
          %2118 = vadd.xlane.f32.xlu0 %v2117
          %v2119 = vpop.xlane.xlu0 %2118
          %v2120 = vadd.f32 %v2052, %v2053
          %2121 = vadd.xlane.f32.xlu0 %v2120
          %v2122 = vpop.xlane.xlu0 %2121
          %v2123 = vadd.f32 %v2054, %v2055
          %2124 = vadd.xlane.f32.xlu0 %v2123
          %v2125 = vpop.xlane.xlu0 %2124
          %v2126 = vadd.f32 %v2056, %v2057
          %2127 = vadd.xlane.f32.xlu0 %v2126
          %v2128 = vpop.xlane.xlu0 %2127
          %v2129 = vadd.f32 %v2058, %v2059
          %2130 = vadd.xlane.f32.xlu0 %v2129
          %v2131 = vpop.xlane.xlu0 %2130
          %v2132 = vadd.f32 %v2060, %v2061
          %2133 = vadd.xlane.f32.xlu0 %v2132
          %v2134 = vpop.xlane.xlu0 %2133
          %v2135 = vadd.f32 %v2062, %v2063
          %2136 = vadd.xlane.f32.xlu0 %v2135
          %v2137 = vpop.xlane.xlu0 %2136
          %v2138 = vadd.f32 %v2064, %v2065
          %2139 = vadd.xlane.f32.xlu0 %v2138
          %v2140 = vpop.xlane.xlu0 %2139
          %v2141 = vadd.f32 %v2066, %v2067
          %2142 = vadd.xlane.f32.xlu0 %v2141
          %v2143 = vpop.xlane.xlu0 %2142
          %v2144 = vadd.f32 %v2068, %v2069
          %2145 = vadd.xlane.f32.xlu0 %v2144
          %v2146 = vpop.xlane.xlu0 %2145
          %v2147 = vadd.f32 %v2070, %v2071
          %2148 = vadd.xlane.f32.xlu0 %v2147
          %v2149 = vpop.xlane.xlu0 %2148
          %v2150 = vadd.f32 %v2072, %v2073
          %2151 = vadd.xlane.f32.xlu0 %v2150
          %v2152 = vpop.xlane.xlu0 %2151
          %v2153 = vadd.f32 %v2074, %v2075
          %2154 = vadd.xlane.f32.xlu0 %v2153
          %v2155 = vpop.xlane.xlu0 %2154
          %v2156 = vadd.f32 %v2076, %v2077
          %2157 = vadd.xlane.f32.xlu0 %v2156
          %v2158 = vpop.xlane.xlu0 %2157
          %v2159 = vadd.f32 %v2078, %v2079
          %2160 = vadd.xlane.f32.xlu0 %v2159
          %v2161 = vpop.xlane.xlu0 %2160
          %v2162 = vadd.f32 %v2080, %v2081
          %2163 = vadd.xlane.f32.xlu0 %v2162
          %v2164 = vpop.xlane.xlu0 %2163
          %v2165 = vadd.f32 %v2082, %v2083
          %2166 = vadd.xlane.f32.xlu0 %v2165
          %v2167 = vpop.xlane.xlu0 %2166
          %v2168 = vadd.f32 %v2084, %v2085
          %2169 = vadd.xlane.f32.xlu0 %v2168
          %v2170 = vpop.xlane.xlu0 %2169
          %v2171 = vadd.f32 %v2086, %v2087
          %2172 = vadd.xlane.f32.xlu0 %v2171
          %v2173 = vpop.xlane.xlu0 %2172
          %v2174 = vadd.f32 %v2088, %v2089
          %2175 = vadd.xlane.f32.xlu0 %v2174
          %v2176 = vpop.xlane.xlu0 %2175
          %v2177 = vadd.f32 %v2090, %v2091
          %2178 = vadd.xlane.f32.xlu0 %v2177
          %v2179 = vpop.xlane.xlu0 %2178
          %v2180 = vadd.f32 %v2092, %v2093
          %2181 = vadd.xlane.f32.xlu0 %v2180
          %v2182 = vpop.xlane.xlu0 %2181
          %v2183 = vadd.f32 %v2094, %v2095
          %2184 = vadd.xlane.f32.xlu0 %v2183
          %v2185 = vpop.xlane.xlu0 %2184
          %v2186 = vadd.f32 %v2096, %v2097
          %2187 = vadd.xlane.f32.xlu0 %v2186
          %v2188 = vpop.xlane.xlu0 %2187
          %v2189 = vadd.f32 %v2098, %v2099
          %2190 = vadd.xlane.f32.xlu0 %v2189
          %v2191 = vpop.xlane.xlu0 %2190
          %v2192 = vadd.f32 %v2100, %v2101
          %2193 = vadd.xlane.f32.xlu0 %v2192
          %v2194 = vpop.xlane.xlu0 %2193
          %v2195 = vadd.f32 %v2102, %v2103
          %2196 = vadd.xlane.f32.xlu0 %v2195
          %v2197 = vpop.xlane.xlu0 %2196
          %v2198 = vadd.f32 %v2104, %v2105
          %2199 = vadd.xlane.f32.xlu0 %v2198
          %v2200 = vpop.xlane.xlu0 %2199
          %v2201 = vadd.f32 %v2106, %v2107
          %2202 = vadd.xlane.f32.xlu0 %v2201
          %v2203 = vpop.xlane.xlu0 %2202
          %v2204 = vmul.f32 %v2110, %v1947
          %v2205 = vmul.f32 %v2113, %v1947
          %v2206 = vmul.f32 %v2116, %v1947
          %v2207 = vmul.f32 %v2119, %v1947
          %v2208 = vmul.f32 %v2122, %v1947
          %v2209 = vmul.f32 %v2125, %v1947
          %v2210 = vmul.f32 %v2128, %v1947
          %v2211 = vmul.f32 %v2131, %v1947
          %v2212 = vmul.f32 %v2134, %v1947
          %v2213 = vmul.f32 %v2137, %v1947
          %v2214 = vmul.f32 %v2140, %v1947
          %v2215 = vmul.f32 %v2143, %v1947
          %v2216 = vmul.f32 %v2146, %v1947
          %v2217 = vmul.f32 %v2149, %v1947
          %v2218 = vmul.f32 %v2152, %v1947
          %v2219 = vmul.f32 %v2155, %v1947
          %v2220 = vmul.f32 %v2158, %v1947
          %v2221 = vmul.f32 %v2161, %v1947
          %v2222 = vmul.f32 %v2164, %v1947
          %v2223 = vmul.f32 %v2167, %v1947
          %v2224 = vmul.f32 %v2170, %v1947
          %v2225 = vmul.f32 %v2173, %v1947
          %v2226 = vmul.f32 %v2176, %v1947
          %v2227 = vmul.f32 %v2179, %v1947
          %v2228 = vmul.f32 %v2182, %v1947
          %v2229 = vmul.f32 %v2185, %v1947
          %v2230 = vmul.f32 %v2188, %v1947
          %v2231 = vmul.f32 %v2191, %v1947
          %v2232 = vmul.f32 %v2194, %v1947
          %v2233 = vmul.f32 %v2197, %v1947
          %v2234 = vmul.f32 %v2200, %v1947
          %v2235 = vmul.f32 %v2203, %v1947
          %v2236 = vadd.f32 %v2204, 1e-05
          %v2237 = vadd.f32 %v2205, 1e-05
          %v2238 = vadd.f32 %v2206, 1e-05
          %v2239 = vadd.f32 %v2207, 1e-05
          %v2240 = vadd.f32 %v2208, 1e-05
          %v2241 = vadd.f32 %v2209, 1e-05
          %v2242 = vadd.f32 %v2210, 1e-05
          %v2243 = vadd.f32 %v2211, 1e-05
          %v2244 = vadd.f32 %v2212, 1e-05
          %v2245 = vadd.f32 %v2213, 1e-05
          %v2246 = vadd.f32 %v2214, 1e-05
          %v2247 = vadd.f32 %v2215, 1e-05
          %v2248 = vadd.f32 %v2216, 1e-05
          %v2249 = vadd.f32 %v2217, 1e-05
          %v2250 = vadd.f32 %v2218, 1e-05
          %v2251 = vadd.f32 %v2219, 1e-05
          %v2252 = vadd.f32 %v2220, 1e-05
          %v2253 = vadd.f32 %v2221, 1e-05
          %v2254 = vadd.f32 %v2222, 1e-05
          %v2255 = vadd.f32 %v2223, 1e-05
          %v2256 = vadd.f32 %v2224, 1e-05
          %v2257 = vadd.f32 %v2225, 1e-05
          %v2258 = vadd.f32 %v2226, 1e-05
          %v2259 = vadd.f32 %v2227, 1e-05
          %v2260 = vadd.f32 %v2228, 1e-05
          %v2261 = vadd.f32 %v2229, 1e-05
          %v2262 = vadd.f32 %v2230, 1e-05
          %v2263 = vadd.f32 %v2231, 1e-05
          %v2264 = vadd.f32 %v2232, 1e-05
          %v2265 = vadd.f32 %v2233, 1e-05
          %v2266 = vadd.f32 %v2234, 1e-05
          %v2267 = vadd.f32 %v2235, 1e-05
          %v2268 = vrsqrt.pop %v2236
          %v2269 = vrsqrt.pop %v2237
          %v2270 = vrsqrt.pop %v2238
          %v2271 = vrsqrt.pop %v2239
          %v2272 = vrsqrt.pop %v2240
          %v2273 = vrsqrt.pop %v2241
          %v2274 = vrsqrt.pop %v2242
          %v2275 = vrsqrt.pop %v2243
          %v2276 = vrsqrt.pop %v2244
          %v2277 = vrsqrt.pop %v2245
          %v2278 = vrsqrt.pop %v2246
          %v2279 = vrsqrt.pop %v2247
          %v2280 = vrsqrt.pop %v2248
          %v2281 = vrsqrt.pop %v2249
          %v2282 = vrsqrt.pop %v2250
          %v2283 = vrsqrt.pop %v2251
          %v2284 = vrsqrt.pop %v2252
          %v2285 = vrsqrt.pop %v2253
          %v2286 = vrsqrt.pop %v2254
          %v2287 = vrsqrt.pop %v2255
          %v2288 = vrsqrt.pop %v2256
          %v2289 = vrsqrt.pop %v2257
          %v2290 = vrsqrt.pop %v2258
          %v2291 = vrsqrt.pop %v2259
          %v2292 = vrsqrt.pop %v2260
          %v2293 = vrsqrt.pop %v2261
          %v2294 = vrsqrt.pop %v2262
          %v2295 = vrsqrt.pop %v2263
          %v2296 = vrsqrt.pop %v2264
          %v2297 = vrsqrt.pop %v2265
          %v2298 = vrsqrt.pop %v2266
          %v2299 = vrsqrt.pop %v2267
          %v2300 = vmul.f32 %v1980, %v2268
          %v2301 = vmul.f32 %v1981, %v2268
          %v2302 = vmul.f32 %v1982, %v2269
          %v2303 = vmul.f32 %v1983, %v2269
          %v2304 = vmul.f32 %v1984, %v2270
          %v2305 = vmul.f32 %v1985, %v2270
          %v2306 = vmul.f32 %v1986, %v2271
          %v2307 = vmul.f32 %v1987, %v2271
          %v2308 = vmul.f32 %v1988, %v2272
          %v2309 = vmul.f32 %v1989, %v2272
          %v2310 = vmul.f32 %v1990, %v2273
          %v2311 = vmul.f32 %v1991, %v2273
          %v2312 = vmul.f32 %v1992, %v2274
          %v2313 = vmul.f32 %v1993, %v2274
          %v2314 = vmul.f32 %v1994, %v2275
          %v2315 = vmul.f32 %v1995, %v2275
          %v2316 = vmul.f32 %v1996, %v2276
          %v2317 = vmul.f32 %v1997, %v2276
          %v2318 = vmul.f32 %v1998, %v2277
          %v2319 = vmul.f32 %v1999, %v2277
          %v2320 = vmul.f32 %v2000, %v2278
          %v2321 = vmul.f32 %v2001, %v2278
          %v2322 = vmul.f32 %v2002, %v2279
          %v2323 = vmul.f32 %v2003, %v2279
          %v2324 = vmul.f32 %v2004, %v2280
          %v2325 = vmul.f32 %v2005, %v2280
          %v2326 = vmul.f32 %v2006, %v2281
          %v2327 = vmul.f32 %v2007, %v2281
          %v2328 = vmul.f32 %v2008, %v2282
          %v2329 = vmul.f32 %v2009, %v2282
          %v2330 = vmul.f32 %v2010, %v2283
          %v2331 = vmul.f32 %v2011, %v2283
          %v2332 = vmul.f32 %v2012, %v2284
          %v2333 = vmul.f32 %v2013, %v2284
          %v2334 = vmul.f32 %v2014, %v2285
          %v2335 = vmul.f32 %v2015, %v2285
          %v2336 = vmul.f32 %v2016, %v2286
          %v2337 = vmul.f32 %v2017, %v2286
          %v2338 = vmul.f32 %v2018, %v2287
          %v2339 = vmul.f32 %v2019, %v2287
          %v2340 = vmul.f32 %v2020, %v2288
          %v2341 = vmul.f32 %v2021, %v2288
          %v2342 = vmul.f32 %v2022, %v2289
          %v2343 = vmul.f32 %v2023, %v2289
          %v2344 = vmul.f32 %v2024, %v2290
          %v2345 = vmul.f32 %v2025, %v2290
          %v2346 = vmul.f32 %v2026, %v2291
          %v2347 = vmul.f32 %v2027, %v2291
          %v2348 = vmul.f32 %v2028, %v2292
          %v2349 = vmul.f32 %v2029, %v2292
          %v2350 = vmul.f32 %v2030, %v2293
          %v2351 = vmul.f32 %v2031, %v2293
          %v2352 = vmul.f32 %v2032, %v2294
          %v2353 = vmul.f32 %v2033, %v2294
          %v2354 = vmul.f32 %v2034, %v2295
          %v2355 = vmul.f32 %v2035, %v2295
          %v2356 = vmul.f32 %v2036, %v2296
          %v2357 = vmul.f32 %v2037, %v2296
          %v2358 = vmul.f32 %v2038, %v2297
          %v2359 = vmul.f32 %v2039, %v2297
          %v2360 = vmul.f32 %v2040, %v2298
          %v2361 = vmul.f32 %v2041, %v2298
          %v2362 = vmul.f32 %v2042, %v2299
          %v2363 = vmul.f32 %v2043, %v2299
          %v2364 = vld [vmem:[%s5] sm:$0x3]
          %v2366 = vlaneseq
          %v2367 = vshrl.u32 %v2366, 7
          %v2368 = vsub.s32 0, %v2367
          %v2369 = vrot.slane %v2364, %v2368
          %v2370 = vlaneseq
          %v2371 = vshrl.u32 %v2370, 7
          %v2372 = vsub.s32 1, %v2371
          %v2373 = vrot.slane %v2364, %v2372
          %v2376 = vmul.f32 %v2300, %v2369
          %v2377 = vmul.f32 %v2301, %v2373
          %v2378 = vmul.f32 %v2302, %v2369
          %v2379 = vmul.f32 %v2303, %v2373
          %v2380 = vmul.f32 %v2304, %v2369
          %v2381 = vmul.f32 %v2305, %v2373
          %v2382 = vmul.f32 %v2306, %v2369
          %v2383 = vmul.f32 %v2307, %v2373
          %v2384 = vmul.f32 %v2308, %v2369
          %v2385 = vmul.f32 %v2309, %v2373
          %v2386 = vmul.f32 %v2310, %v2369
          %v2387 = vmul.f32 %v2311, %v2373
          %v2388 = vmul.f32 %v2312, %v2369
          %v2389 = vmul.f32 %v2313, %v2373
          %v2390 = vmul.f32 %v2314, %v2369
          %v2391 = vmul.f32 %v2315, %v2373
          %v2392 = vmul.f32 %v2316, %v2369
          %v2393 = vmul.f32 %v2317, %v2373
          %v2394 = vmul.f32 %v2318, %v2369
          %v2395 = vmul.f32 %v2319, %v2373
          %v2396 = vmul.f32 %v2320, %v2369
          %v2397 = vmul.f32 %v2321, %v2373
          %v2398 = vmul.f32 %v2322, %v2369
          %v2399 = vmul.f32 %v2323, %v2373
          %v2400 = vmul.f32 %v2324, %v2369
          %v2401 = vmul.f32 %v2325, %v2373
          %v2402 = vmul.f32 %v2326, %v2369
          %v2403 = vmul.f32 %v2327, %v2373
          %v2404 = vmul.f32 %v2328, %v2369
          %v2405 = vmul.f32 %v2329, %v2373
          %v2406 = vmul.f32 %v2330, %v2369
          %v2407 = vmul.f32 %v2331, %v2373
          %v2408 = vmul.f32 %v2332, %v2369
          %v2409 = vmul.f32 %v2333, %v2373
          %v2410 = vmul.f32 %v2334, %v2369
          %v2411 = vmul.f32 %v2335, %v2373
          %v2412 = vmul.f32 %v2336, %v2369
          %v2413 = vmul.f32 %v2337, %v2373
          %v2414 = vmul.f32 %v2338, %v2369
          %v2415 = vmul.f32 %v2339, %v2373
          %v2416 = vmul.f32 %v2340, %v2369
          %v2417 = vmul.f32 %v2341, %v2373
          %v2418 = vmul.f32 %v2342, %v2369
          %v2419 = vmul.f32 %v2343, %v2373
          %v2420 = vmul.f32 %v2344, %v2369
          %v2421 = vmul.f32 %v2345, %v2373
          %v2422 = vmul.f32 %v2346, %v2369
          %v2423 = vmul.f32 %v2347, %v2373
          %v2424 = vmul.f32 %v2348, %v2369
          %v2425 = vmul.f32 %v2349, %v2373
          %v2426 = vmul.f32 %v2350, %v2369
          %v2427 = vmul.f32 %v2351, %v2373
          %v2428 = vmul.f32 %v2352, %v2369
          %v2429 = vmul.f32 %v2353, %v2373
          %v2430 = vmul.f32 %v2354, %v2369
          %v2431 = vmul.f32 %v2355, %v2373
          %v2432 = vmul.f32 %v2356, %v2369
          %v2433 = vmul.f32 %v2357, %v2373
          %v2434 = vmul.f32 %v2358, %v2369
          %v2435 = vmul.f32 %v2359, %v2373
          %v2436 = vmul.f32 %v2360, %v2369
          %v2437 = vmul.f32 %v2361, %v2373
          %v2438 = vmul.f32 %v2362, %v2369
          %v2439 = vmul.f32 %v2363, %v2373
          %v2440 = vld [vmem:[%s6] sm:$0x3]
          %v2442 = vlaneseq
          %v2443 = vshrl.u32 %v2442, 7
          %v2444 = vsub.s32 0, %v2443
          %v2445 = vrot.slane %v2440, %v2444
          %v2446 = vlaneseq
          %v2447 = vshrl.u32 %v2446, 7
          %v2448 = vsub.s32 1, %v2447
          %v2449 = vrot.slane %v2440, %v2448
          %v2452 = vadd.f32 %v2376, %v2445
          %v2453 = vadd.f32 %v2377, %v2449
          %v2454 = vadd.f32 %v2378, %v2445
          %v2455 = vadd.f32 %v2379, %v2449
          %v2456 = vadd.f32 %v2380, %v2445
          %v2457 = vadd.f32 %v2381, %v2449
          %v2458 = vadd.f32 %v2382, %v2445
          %v2459 = vadd.f32 %v2383, %v2449
          %v2460 = vadd.f32 %v2384, %v2445
          %v2461 = vadd.f32 %v2385, %v2449
          %v2462 = vadd.f32 %v2386, %v2445
          %v2463 = vadd.f32 %v2387, %v2449
          %v2464 = vadd.f32 %v2388, %v2445
          %v2465 = vadd.f32 %v2389, %v2449
          %v2466 = vadd.f32 %v2390, %v2445
          %v2467 = vadd.f32 %v2391, %v2449
          %v2468 = vadd.f32 %v2392, %v2445
          %v2469 = vadd.f32 %v2393, %v2449
          %v2470 = vadd.f32 %v2394, %v2445
          %v2471 = vadd.f32 %v2395, %v2449
          %v2472 = vadd.f32 %v2396, %v2445
          %v2473 = vadd.f32 %v2397, %v2449
          %v2474 = vadd.f32 %v2398, %v2445
          %v2475 = vadd.f32 %v2399, %v2449
          %v2476 = vadd.f32 %v2400, %v2445
          %v2477 = vadd.f32 %v2401, %v2449
          %v2478 = vadd.f32 %v2402, %v2445
          %v2479 = vadd.f32 %v2403, %v2449
          %v2480 = vadd.f32 %v2404, %v2445
          %v2481 = vadd.f32 %v2405, %v2449
          %v2482 = vadd.f32 %v2406, %v2445
          %v2483 = vadd.f32 %v2407, %v2449
          %v2484 = vadd.f32 %v2408, %v2445
          %v2485 = vadd.f32 %v2409, %v2449
          %v2486 = vadd.f32 %v2410, %v2445
          %v2487 = vadd.f32 %v2411, %v2449
          %v2488 = vadd.f32 %v2412, %v2445
          %v2489 = vadd.f32 %v2413, %v2449
          %v2490 = vadd.f32 %v2414, %v2445
          %v2491 = vadd.f32 %v2415, %v2449
          %v2492 = vadd.f32 %v2416, %v2445
          %v2493 = vadd.f32 %v2417, %v2449
          %v2494 = vadd.f32 %v2418, %v2445
          %v2495 = vadd.f32 %v2419, %v2449
          %v2496 = vadd.f32 %v2420, %v2445
          %v2497 = vadd.f32 %v2421, %v2449
          %v2498 = vadd.f32 %v2422, %v2445
          %v2499 = vadd.f32 %v2423, %v2449
          %v2500 = vadd.f32 %v2424, %v2445
          %v2501 = vadd.f32 %v2425, %v2449
          %v2502 = vadd.f32 %v2426, %v2445
          %v2503 = vadd.f32 %v2427, %v2449
          %v2504 = vadd.f32 %v2428, %v2445
          %v2505 = vadd.f32 %v2429, %v2449
          %v2506 = vadd.f32 %v2430, %v2445
          %v2507 = vadd.f32 %v2431, %v2449
          %v2508 = vadd.f32 %v2432, %v2445
          %v2509 = vadd.f32 %v2433, %v2449
          %v2510 = vadd.f32 %v2434, %v2445
          %v2511 = vadd.f32 %v2435, %v2449
          %v2512 = vadd.f32 %v2436, %v2445
          %v2513 = vadd.f32 %v2437, %v2449
          %v2514 = vadd.f32 %v2438, %v2445
          %v2515 = vadd.f32 %v2439, %v2449
          %2516 = vst [vmem:[%s342] sm:$0xff] %v2452
          %2517 = vst [vmem:[%s342 + $0x8] sm:$0xff] %v2453
          %2518 = vst [vmem:[%s342 + $0x10] sm:$0xff] %v2454
          %2519 = vst [vmem:[%s342 + $0x18] sm:$0xff] %v2455
          %2520 = vst [vmem:[%s342 + $0x20] sm:$0xff] %v2456
          %2521 = vst [vmem:[%s342 + $0x28] sm:$0xff] %v2457
          %2522 = vst [vmem:[%s342 + $0x30] sm:$0xff] %v2458
          %2523 = vst [vmem:[%s342 + $0x38] sm:$0xff] %v2459
          %2524 = vst [vmem:[%s342 + $0x40] sm:$0xff] %v2460
          %2525 = vst [vmem:[%s342 + $0x48] sm:$0xff] %v2461
          %2526 = vst [vmem:[%s342 + $0x50] sm:$0xff] %v2462
          %2527 = vst [vmem:[%s342 + $0x58] sm:$0xff] %v2463
          %2528 = vst [vmem:[%s342 + $0x60] sm:$0xff] %v2464
          %2529 = vst [vmem:[%s342 + $0x68] sm:$0xff] %v2465
          %2530 = vst [vmem:[%s342 + $0x70] sm:$0xff] %v2466
          %2531 = vst [vmem:[%s342 + $0x78] sm:$0xff] %v2467
          %2532 = vst [vmem:[%s342 + $0x80] sm:$0xff] %v2468
          %2533 = vst [vmem:[%s342 + $0x88] sm:$0xff] %v2469
          %2534 = vst [vmem:[%s342 + $0x90] sm:$0xff] %v2470
          %2535 = vst [vmem:[%s342 + $0x98] sm:$0xff] %v2471
          %2536 = vst [vmem:[%s342 + $0xa0] sm:$0xff] %v2472
          %2537 = vst [vmem:[%s342 + $0xa8] sm:$0xff] %v2473
          %2538 = vst [vmem:[%s342 + $0xb0] sm:$0xff] %v2474
          %2539 = vst [vmem:[%s342 + $0xb8] sm:$0xff] %v2475
          %2540 = vst [vmem:[%s342 + $0xc0] sm:$0xff] %v2476
          %2541 = vst [vmem:[%s342 + $0xc8] sm:$0xff] %v2477
          %2542 = vst [vmem:[%s342 + $0xd0] sm:$0xff] %v2478
          %2543 = vst [vmem:[%s342 + $0xd8] sm:$0xff] %v2479
          %2544 = vst [vmem:[%s342 + $0xe0] sm:$0xff] %v2480
          %2545 = vst [vmem:[%s342 + $0xe8] sm:$0xff] %v2481
          %2546 = vst [vmem:[%s342 + $0xf0] sm:$0xff] %v2482
          %2547 = vst [vmem:[%s342 + $0xf8] sm:$0xff] %v2483
          %2548 = vst [vmem:[%s342 + $0x100] sm:$0xff] %v2484
          %2549 = vst [vmem:[%s342 + $0x108] sm:$0xff] %v2485
          %2550 = vst [vmem:[%s342 + $0x110] sm:$0xff] %v2486
          %2551 = vst [vmem:[%s342 + $0x118] sm:$0xff] %v2487
          %2552 = vst [vmem:[%s342 + $0x120] sm:$0xff] %v2488
          %2553 = vst [vmem:[%s342 + $0x128] sm:$0xff] %v2489
          %2554 = vst [vmem:[%s342 + $0x130] sm:$0xff] %v2490
          %2555 = vst [vmem:[%s342 + $0x138] sm:$0xff] %v2491
          %2556 = vst [vmem:[%s342 + $0x140] sm:$0xff] %v2492
          %2557 = vst [vmem:[%s342 + $0x148] sm:$0xff] %v2493
          %2558 = vst [vmem:[%s342 + $0x150] sm:$0xff] %v2494
          %2559 = vst [vmem:[%s342 + $0x158] sm:$0xff] %v2495
          %2560 = vst [vmem:[%s342 + $0x160] sm:$0xff] %v2496
          %2561 = vst [vmem:[%s342 + $0x168] sm:$0xff] %v2497
          %2562 = vst [vmem:[%s342 + $0x170] sm:$0xff] %v2498
          %2563 = vst [vmem:[%s342 + $0x178] sm:$0xff] %v2499
          %2564 = vst [vmem:[%s342 + $0x180] sm:$0xff] %v2500
          %2565 = vst [vmem:[%s342 + $0x188] sm:$0xff] %v2501
          %2566 = vst [vmem:[%s342 + $0x190] sm:$0xff] %v2502
          %2567 = vst [vmem:[%s342 + $0x198] sm:$0xff] %v2503
          %2568 = vst [vmem:[%s342 + $0x1a0] sm:$0xff] %v2504
          %2569 = vst [vmem:[%s342 + $0x1a8] sm:$0xff] %v2505
          %2570 = vst [vmem:[%s342 + $0x1b0] sm:$0xff] %v2506
          %2571 = vst [vmem:[%s342 + $0x1b8] sm:$0xff] %v2507
          %2572 = vst [vmem:[%s342 + $0x1c0] sm:$0xff] %v2508
          %2573 = vst [vmem:[%s342 + $0x1c8] sm:$0xff] %v2509
          %2574 = vst [vmem:[%s342 + $0x1d0] sm:$0xff] %v2510
          %2575 = vst [vmem:[%s342 + $0x1d8] sm:$0xff] %v2511
          %2576 = vst [vmem:[%s342 + $0x1e0] sm:$0xff] %v2512
          %2577 = vst [vmem:[%s342 + $0x1e8] sm:$0xff] %v2513
          %2578 = vst [vmem:[%s342 + $0x1f0] sm:$0xff] %v2514
          %2579 = vst [vmem:[%s342 + $0x1f8] sm:$0xff] %v2515
        $region68: #{tpu_custom_call.1} parent=47 // pred_fallthru
          _
        %s2580 = sand.u32 %s199, 1
        %s2581 = scalar_lea.sflag [#allocation5], %s2580
        %s2582 = sand.u32 %s199, 1
        %s2583 = smul.addr %s2582, 512
        %s2584 = scalar_lea.vmem [#allocation9], %s2583
        // Predicated region
        $region69: #{tpu_custom_call.1} parent=47 // pred_check
          %p2585 = pneg %p209
        $region70: #{tpu_custom_call.1} parent=47 // pred_check_branch
          %2587 = sbr.rel (%p2585) target = $region72
        $region71: #{tpu_custom_call.1} parent=47 // pred_region
          %s2588 = smul.u32 32, %s29
          %s2590 = ssub.s32 8192, 8192
          %2591 = vsyncadd %s2581, %s2590
          %s2592 = smul.addr %s2588, 2
          %s2593 = smul.addr %s2592, 128
          %s2594 = scalar_lea.hbm %s7, %s2593
          %s2595 = sshll.u32 %s2584, 4
          %s2596 = int_to_ptr.vmem [resolvable:$true] %s2595
          %2601 = dma.vmem_to_hbm [thread:$0]  %s2596, 8192, %s2594, %s2581, 256, 256, 16
        $region72: #{tpu_custom_call.1} parent=47 // pred_fallthru
          _
      $region48: #{tpu_custom_call.1} parent=5 // pred_fallthru
        _
      %p2602 = scmp.le.s32.totalorder 2, %s20
      // Predicated region
      $region73: #{tpu_custom_call.1} parent=5 // pred_check
        %p2603 = pneg %p2602
      $region74: #{tpu_custom_call.1} parent=5 // pred_check_branch
        %2605 = sbr.rel (%p2603) target = $region76
      $region75: #{tpu_custom_call.1} parent=5 // pred_region
        %s2606 = ssub.s32 %s20, 2
        // Predicated region
        $region77: #{tpu_custom_call.1} parent=75 // pred_check
          %p2607 = pneg %p215
        $region78: #{tpu_custom_call.1} parent=75 // pred_check_branch
          %2609 = sbr.rel (%p2607) target = $region80
        $region79: #{tpu_custom_call.1} parent=75 // pred_region
          %s2610 = sand.u32 %s200, 1
          %s2611 = scalar_lea.sflag [#allocation5], %s2610
          %s2612 = sand.u32 %s200, 1
          %s2613 = smul.addr %s2612, 512
          %s2614 = scalar_lea.vmem [#allocation9], %s2613
          %2615 = dma.done %s2611, 8192
        $region80: #{tpu_custom_call.1} parent=75 // pred_fallthru
          _
      $region76: #{tpu_custom_call.1} parent=5 // pred_fallthru
        _
    $region6: #{tpu_custom_call.1} parent=1 // loop_footer
      %s24 = sadd.s32 1, %s20
    $region7: #{tpu_custom_call.1} parent=1 // loop_footer_branch
      %19 = sbr.rel target = $region3
    $region8: #{tpu_custom_call.1} parent=1 // loop_exit
      _
    %2616 = vsyncpa [#allocation4], 1
    %s2617 = scalar_lea.sflag [#allocation4], 1
    %2618 = vsyncpa %s2617, 1
    %2619 = vsyncpa [#allocation7], 1
    %2620 = vsyncpa [#allocation5], 1
    %s2621 = scalar_lea.sflag [#allocation5], 1
    %2622 = vsyncpa %s2621, 1

// kernel: tpu_custom_call.1
$region0: #{tpu_custom_call.1}
  #allocation0 [shape = 'u32[]', space=smem, size = 0x4, offset = 0x4, fixed_abs, tag = 'smem constant byte address 0x4 - core index']
  #allocation1 [shape = 'u32[144,128]{1,0:T(1,128)}', space=vmem, size = 0x12000, scoped, tag = 'internal scratch']
  #allocation2 [shape = 'f32[256,256]{1,0:T(8,128)}', space=vmem, size = 0x40000, scoped, tag = 'scratch operand']
  %s0 = inlined_call_operand.hbm [shape: f32[512,256], index: 0, kind: input, shape index: {}]
  %s1 = inlined_call_operand.hbm [shape: f32[256,256], index: 1, kind: input, shape index: {}]
  %s2 = inlined_call_operand.vmem [shape: f32[1,256], index: 2, kind: input, shape index: {}]
  %s3 = inlined_call_operand.hbm [shape: f32[256,256], index: 3, kind: input, shape index: {}]
  %s4 = inlined_call_operand.vmem [shape: f32[1,256], index: 4, kind: input, shape index: {}]
  %s5 = inlined_call_operand.vmem [shape: f32[1,256], index: 5, kind: input, shape index: {}]
  %s6 = inlined_call_operand.vmem [shape: f32[1,256], index: 6, kind: input, shape index: {}]
  %s7 = inlined_call_operand.hbm [shape: f32[512,256], index: 7, kind: output, shape index: {}]
  %s8 = sld [smem:[#allocation0]]
  $region81: #{tpu_custom_call.1} parent=0
    _
  %s10 = ssub.s32 1, %s8
  %s11 = scalar_select 0, %s10, %s8
  $region1: #{tpu_custom_call.1} parent=0
    #allocation3 [shape = 'u8[524288]{0}', space=vmem, size = 0x80000, scoped, tag = 'input window, operand 0']
    #allocation4 [shape = 's32[2]{0}', space=sflag, size = 0x8, scoped, tag = 'scoped memory for tpu_custom_call.1']
    #allocation5 [shape = 's32[2]{0}', space=sflag, size = 0x8, scoped, tag = 'scoped memory for tpu_custom_call.1']
    #allocation6 [shape = 'u8[262144]{0}', space=vmem, size = 0x40000, scoped, tag = 'input window, operand 1, single buffered']
    #allocation7 [shape = 's32[1]{0}', space=sflag, size = 0x4, scoped, tag = 'scoped memory for tpu_custom_call.1']
    #allocation8 [shape = 'u8[262144]{0}', space=vmem, size = 0x40000, scoped, tag = 'input window, operand 3, single buffered']
    #allocation9 [shape = 'u8[524288]{0}', space=vmem, size = 0x80000, scoped, tag = 'output window, operand 0']
    %12 = vsyncpa [#allocation4], 0
    %s13 = scalar_lea.sflag [#allocation4], 1
    %14 = vsyncpa %s13, 0
    %15 = vsyncpa [#allocation7], 0
    %16 = vsyncpa [#allocation5], 0
    %s17 = scalar_lea.sflag [#allocation5], 1
    %18 = vsyncpa %s17, 0
    loop: start=0, step=1, limit=4
    $region2: #{tpu_custom_call.1} parent=1 // loop_pre_header
      _
    $region3: #{tpu_custom_call.1} parent=1 // loop_header
      %s20 = sphi 0, %s24
      %p21 = scmp.ge.s32.totalorder %s20, 4
      %s27 = sphi 0, %s39
      %s28 = sphi 0, %s35
      %s29 = sphi 0, %s27
      %s30 = sphi 0, %s28
      %s31 = sphi 0, %s29
      %s32 = sphi 0, %s30
      %s44 = sphi 0, %s46
      %s47 = sphi 0, %s44
      %s48 = sphi 0, %s47
      %s64 = sphi 0, %s48
      %s68 = sphi 0, %s68
      %s70 = sphi 0, %s68
      %s71 = sphi 0, %s70
      %s85 = sphi 0, %s71
      %s89 = sphi 0, %s89
      %s91 = sphi 0, %s89
      %s92 = sphi 0, %s91
      %s106 = sphi 0, %s92
      %s110 = sphi 0, %s110
      %s112 = sphi 0, %s110
      %s113 = sphi 0, %s112
      %s127 = sphi 0, %s113
      %s131 = sphi 0, %s131
      %s133 = sphi 0, %s131
      %s134 = sphi 0, %s133
      %s148 = sphi 0, %s134
      %s152 = sphi 0, %s152
      %s154 = sphi 0, %s152
      %s155 = sphi 0, %s154
      %s169 = sphi 0, %s155
      %s173 = sphi 0, %s173
      %s175 = sphi 0, %s173
      %s176 = sphi 0, %s175
      %s190 = sphi 0, %s176
      %s196 = sphi 0, %s198
      %s199 = sphi 0, %s196
      %s200 = sphi 0, %s199
      %s216 = sphi 0, %s200
    $region4: #{tpu_custom_call.1} parent=1 // loop_header_branch
      %23 = sbr.rel (%p21) target = $region8
    $region5: #{tpu_custom_call.1} parent=1 // loop_body
      %s25 = ssub.s32 %s20, 1
      %s26 = ssub.s32 %s20, 2
      %s33 = sadd.s32 1, %s28
      %p34 = scmp.ge.s32.totalorder %s33, 1
      %s35 = scalar_select %p34, 0, %s33
      %s36 = sadd.s32 1, %s27
      %s37 = scalar_select %p34, %s36, %s27
      %p38 = scmp.ge.s32.totalorder %s37, 2
      %s39 = scalar_select %p38, 0, %s37
      %s40 = ssub.s32 %s27, %s39
      %s41 = ssub.s32 %s28, %s35
      %s42 = sor.u32 %s40, %s41
      %p43 = scmp.eq.s32.totalorder %s42, 0
      %s45 = sadd.s32 %s44, 1
      %s46 = scalar_select %p43, %s44, %s45
      %p49 = pneg %p43
      %p50 = scmp.eq.s32.totalorder %s20, 1
      %p51 = por %p49, %p50
      %p52 = scmp.ne.s32.totalorder %s44, %s47
      %p53 = scmp.eq.s32.totalorder %s20, 0
      %p54 = por %p52, %p53
      %p55 = scmp.ne.s32.totalorder %s44, %s47
      %p56 = scmp.eq.s32.totalorder %s25, 1
      %p57 = por %p55, %p56
      %p58 = scmp.ne.s32.totalorder %s47, %s48
      %p59 = scmp.eq.s32.totalorder %s25, 0
      %p60 = por %p58, %p59
      %p61 = scmp.ne.s32.totalorder %s47, %s48
      %p62 = scmp.eq.s32.totalorder %s26, 1
      %p63 = por %p61, %p62
      %p65 = scmp.ne.s32.totalorder %s48, %s64
      %p66 = scmp.eq.s32.totalorder %s26, 0
      %p67 = por %p65, %p66
      %s69 = sadd.s32 %s68, 1
      %p72 = scmp.eq.s32.totalorder %s20, 1
      %p73 = scmp.ne.s32.totalorder %s68, %s70
      %p74 = scmp.eq.s32.totalorder %s20, 0
      %p75 = por %p73, %p74
      %p76 = scmp.ne.s32.totalorder %s68, %s70
      %p77 = scmp.eq.s32.totalorder %s25, 1
      %p78 = por %p76, %p77
      %p79 = scmp.ne.s32.totalorder %s70, %s71
      %p80 = scmp.eq.s32.totalorder %s25, 0
      %p81 = por %p79, %p80
      %p82 = scmp.ne.s32.totalorder %s70, %s71
      %p83 = scmp.eq.s32.totalorder %s26, 1
      %p84 = por %p82, %p83
      %p86 = scmp.ne.s32.totalorder %s71, %s85
      %p87 = scmp.eq.s32.totalorder %s26, 0
      %p88 = por %p86, %p87
      %s90 = sadd.s32 %s89, 1
      %p93 = scmp.eq.s32.totalorder %s20, 1
      %p94 = scmp.ne.s32.totalorder %s89, %s91
      %p95 = scmp.eq.s32.totalorder %s20, 0
      %p96 = por %p94, %p95
      %p97 = scmp.ne.s32.totalorder %s89, %s91
      %p98 = scmp.eq.s32.totalorder %s25, 1
      %p99 = por %p97, %p98
      %p100 = scmp.ne.s32.totalorder %s91, %s92
      %p101 = scmp.eq.s32.totalorder %s25, 0
      %p102 = por %p100, %p101
      %p103 = scmp.ne.s32.totalorder %s91, %s92
      %p104 = scmp.eq.s32.totalorder %s26, 1
      %p105 = por %p103, %p104
      %p107 = scmp.ne.s32.totalorder %s92, %s106
      %p108 = scmp.eq.s32.totalorder %s26, 0
      %p109 = por %p107, %p108
      %s111 = sadd.s32 %s110, 1
      %p114 = scmp.eq.s32.totalorder %s20, 1
      %p115 = scmp.ne.s32.totalorder %s110, %s112
      %p116 = scmp.eq.s32.totalorder %s20, 0
      %p117 = por %p115, %p116
      %p118 = scmp.ne.s32.totalorder %s110, %s112
      %p119 = scmp.eq.s32.totalorder %s25, 1
      %p120 = por %p118, %p119
      %p121 = scmp.ne.s32.totalorder %s112, %s113
      %p122 = scmp.eq.s32.totalorder %s25, 0
      %p123 = por %p121, %p122
      %p124 = scmp.ne.s32.totalorder %s112, %s113
      %p125 = scmp.eq.s32.totalorder %s26, 1
      %p126 = por %p124, %p125
      %p128 = scmp.ne.s32.totalorder %s113, %s127
      %p129 = scmp.eq.s32.totalorder %s26, 0
      %p130 = por %p128, %p129
      %s132 = sadd.s32 %s131, 1
      %p135 = scmp.eq.s32.totalorder %s20, 1
      %p136 = scmp.ne.s32.totalorder %s131, %s133
      %p137 = scmp.eq.s32.totalorder %s20, 0
      %p138 = por %p136, %p137
      %p139 = scmp.ne.s32.totalorder %s131, %s133
      %p140 = scmp.eq.s32.totalorder %s25, 1
      %p141 = por %p139, %p140
      %p142 = scmp.ne.s32.totalorder %s133, %s134
      %p143 = scmp.eq.s32.totalorder %s25, 0
      %p144 = por %p142, %p143
      %p145 = scmp.ne.s32.totalorder %s133, %s134
      %p146 = scmp.eq.s32.totalorder %s26, 1
      %p147 = por %p145, %p146
      %p149 = scmp.ne.s32.totalorder %s134, %s148
      %p150 = scmp.eq.s32.totalorder %s26, 0
      %p151 = por %p149, %p150
      %s153 = sadd.s32 %s152, 1
      %p156 = scmp.eq.s32.totalorder %s20, 1
      %p157 = scmp.ne.s32.totalorder %s152, %s154
      %p158 = scmp.eq.s32.totalorder %s20, 0
      %p159 = por %p157, %p158
      %p160 = scmp.ne.s32.totalorder %s152, %s154
      %p161 = scmp.eq.s32.totalorder %s25, 1
      %p162 = por %p160, %p161
      %p163 = scmp.ne.s32.totalorder %s154, %s155
      %p164 = scmp.eq.s32.totalorder %s25, 0
      %p165 = por %p163, %p164
      %p166 = scmp.ne.s32.totalorder %s154, %s155
      %p167 = scmp.eq.s32.totalorder %s26, 1
      %p168 = por %p166, %p167
      %p170 = scmp.ne.s32.totalorder %s155, %s169
      %p171 = scmp.eq.s32.totalorder %s26, 0
      %p172 = por %p170, %p171
      %s174 = sadd.s32 %s173, 1
      %p177 = scmp.eq.s32.totalorder %s20, 1
      %p178 = scmp.ne.s32.totalorder %s173, %s175
      %p179 = scmp.eq.s32.totalorder %s20, 0
      %p180 = por %p178, %p179
      %p181 = scmp.ne.s32.totalorder %s173, %s175
      %p182 = scmp.eq.s32.totalorder %s25, 1
      %p183 = por %p181, %p182
      %p184 = scmp.ne.s32.totalorder %s175, %s176
      %p185 = scmp.eq.s32.totalorder %s25, 0
      %p186 = por %p184, %p185
      %p187 = scmp.ne.s32.totalorder %s175, %s176
      %p188 = scmp.eq.s32.totalorder %s26, 1
      %p189 = por %p187, %p188
      %p191 = scmp.ne.s32.totalorder %s176, %s190
      %p192 = scmp.eq.s32.totalorder %s26, 0
      %p193 = por %p191, %p192
      %s194 = ssub.s32 %s27, %s39
      %p195 = scmp.eq.s32.totalorder %s194, 0
      %s197 = sadd.s32 %s196, 1
      %s198 = scalar_select %p195, %s196, %s197
      %p201 = pneg %p195
      %p202 = scmp.eq.s32.totalorder %s20, 1
      %p203 = por %p201, %p202
      %p204 = scmp.ne.s32.totalorder %s196, %s199
      %p205 = scmp.eq.s32.totalorder %s20, 0
      %p206 = por %p204, %p205
      %p207 = scmp.ne.s32.totalorder %s196, %s199
      %p208 = scmp.eq.s32.totalorder %s25, 1
      %p209 = por %p207, %p208
      %p210 = scmp.ne.s32.totalorder %s199, %s200
      %p211 = scmp.eq.s32.totalorder %s25, 0
      %p212 = por %p210, %p211
      %p213 = scmp.ne.s32.totalorder %s199, %s200
      %p214 = scmp.eq.s32.totalorder %s26, 1
      %p215 = por %p213, %p214
      %p217 = scmp.ne.s32.totalorder %s200, %s216
      %p218 = scmp.eq.s32.totalorder %s26, 0
      %p219 = por %p217, %p218
      %p220 = scmp.le.s32.totalorder 1, %s20
      %p221 = scmp.lt.s32.totalorder %s20, 3
      %p222 = pnand %p220, %p221
      %p223 = pneg %p222
      // Predicated region
      $region9: #{tpu_custom_call.1} parent=5 // pred_check
        _
      $region10: #{tpu_custom_call.1} parent=5 // pred_check_branch
        %225 = sbr.rel (%p222) target = $region12
      $region11: #{tpu_custom_call.1} parent=5 // pred_region
        %s226 = ssub.s32 %s20, 1
        // Predicated region
        $region13: #{tpu_custom_call.1} parent=11 // pred_check
          %p227 = pneg %p81
        $region14: #{tpu_custom_call.1} parent=11 // pred_check_branch
          %229 = sbr.rel (%p227) target = $region16
        $region15: #{tpu_custom_call.1} parent=11 // pred_region
          %s231 = ssub.s32 8192, 8192
          %232 = vsyncadd [#allocation7], %s231
          %s233 = sshll.u32 [#allocation6], 4
          %s234 = int_to_ptr.vmem [resolvable:$true] %s233
          %239 = dma.hbm_to_vmem [thread:$0]  %s1, 8192, %s234, [#allocation7], 256, 256, 16
        $region16: #{tpu_custom_call.1} parent=11 // pred_fallthru
          _
        // Predicated region
        $region17: #{tpu_custom_call.1} parent=11 // pred_check
          %p240 = pneg %p102
        $region18: #{tpu_custom_call.1} parent=11 // pred_check_branch
          %242 = sbr.rel (%p240) target = $region20
        $region19: #{tpu_custom_call.1} parent=11 // pred_region
          _
        $region20: #{tpu_custom_call.1} parent=11 // pred_fallthru
          _
        // Predicated region
        $region21: #{tpu_custom_call.1} parent=11 // pred_check
          %p243 = pneg %p123
        $region22: #{tpu_custom_call.1} parent=11 // pred_check_branch
          %245 = sbr.rel (%p243) target = $region24
        $region23: #{tpu_custom_call.1} parent=11 // pred_region
          %s247 = ssub.s32 8192, 8192
          %248 = vsyncadd [#allocation7], %s247
          %s249 = sshll.u32 [#allocation8], 4
          %s250 = int_to_ptr.vmem [resolvable:$true] %s249
          %255 = dma.hbm_to_vmem [thread:$0]  %s3, 8192, %s250, [#allocation7], 256, 256, 16
        $region24: #{tpu_custom_call.1} parent=11 // pred_fallthru
          _
        // Predicated region
        $region25: #{tpu_custom_call.1} parent=11 // pred_check
          %p256 = pneg %p144
        $region26: #{tpu_custom_call.1} parent=11 // pred_check_branch
          %258 = sbr.rel (%p256) target = $region28
        $region27: #{tpu_custom_call.1} parent=11 // pred_region
          _
        $region28: #{tpu_custom_call.1} parent=11 // pred_fallthru
          _
        // Predicated region
        $region29: #{tpu_custom_call.1} parent=11 // pred_check
          %p259 = pneg %p165
        $region30: #{tpu_custom_call.1} parent=11 // pred_check_branch
          %261 = sbr.rel (%p259) target = $region32
        $region31: #{tpu_custom_call.1} parent=11 // pred_region
          _
        $region32: #{tpu_custom_call.1} parent=11 // pred_fallthru
          _
        // Predicated region
        $region33: #{tpu_custom_call.1} parent=11 // pred_check
          %p262 = pneg %p186
        $region34: #{tpu_custom_call.1} parent=11 // pred_check_branch
          %264 = sbr.rel (%p262) target = $region36
        $region35: #{tpu_custom_call.1} parent=11 // pred_region
          _
        $region36: #{tpu_custom_call.1} parent=11 // pred_fallthru
          _
      $region12: #{tpu_custom_call.1} parent=5 // pred_fallthru
        _
      %p265 = scmp.lt.s32.totalorder %s20, 2
      // Predicated region
      $region37: #{tpu_custom_call.1} parent=5 // pred_check
        %p266 = pneg %p265
      $region38: #{tpu_custom_call.1} parent=5 // pred_check_branch
        %268 = sbr.rel (%p266) target = $region40
      $region39: #{tpu_custom_call.1} parent=5 // pred_region
        // Predicated region
        $region41: #{tpu_custom_call.1} parent=39 // pred_check
          %p269 = pneg %p54
        $region42: #{tpu_custom_call.1} parent=39 // pred_check_branch
          %271 = sbr.rel (%p269) target = $region44
        $region43: #{tpu_custom_call.1} parent=39 // pred_region
          %s272 = sand.u32 %s44, 1
          %s273 = scalar_lea.sflag [#allocation4], %s272
          %s274 = sand.u32 %s44, 1
          %s275 = smul.addr %s274, 512
          %s276 = scalar_lea.vmem [#allocation3], %s275
          %s277 = smul.u32 32, %s27
          %s278 = smul.u32 2, %s28
          %s280 = ssub.s32 8192, 8192
          %281 = vsyncadd %s273, %s280
          %s282 = smul.addr %s277, 2
          %s283 = sadd.s32 %s278, %s282
          %s284 = smul.addr %s283, 128
          %s285 = scalar_lea.hbm %s0, %s284
          %s286 = sshll.u32 %s276, 4
          %s287 = int_to_ptr.vmem [resolvable:$true] %s286
          %292 = dma.hbm_to_vmem [thread:$0]  %s285, 8192, %s287, %s273, 256, 256, 16
        $region44: #{tpu_custom_call.1} parent=39 // pred_fallthru
          _
      $region40: #{tpu_custom_call.1} parent=5 // pred_fallthru
        _
      %p293 = scmp.le.s32.totalorder 1, %s20
      %p294 = scmp.lt.s32.totalorder %s20, 3
      %p295 = pnand %p293, %p294
      %p296 = pneg %p295
      // Predicated region
      $region45: #{tpu_custom_call.1} parent=5 // pred_check
        _
      $region46: #{tpu_custom_call.1} parent=5 // pred_check_branch
        %298 = sbr.rel (%p295) target = $region48
      $region47: #{tpu_custom_call.1} parent=5 // pred_region
        %s299 = ssub.s32 %s20, 1
        %s300 = sand.u32 %s47, 1
        %s301 = scalar_lea.sflag [#allocation4], %s300
        %s302 = sand.u32 %s47, 1
        %s303 = smul.addr %s302, 512
        %s304 = scalar_lea.vmem [#allocation3], %s303
        // Predicated region
        $region49: #{tpu_custom_call.1} parent=47 // pred_check
          %p305 = pneg %p60
        $region50: #{tpu_custom_call.1} parent=47 // pred_check_branch
          %307 = sbr.rel (%p305) target = $region52
        $region51: #{tpu_custom_call.1} parent=47 // pred_region
          %308 = dma.done %s301, 8192
        $region52: #{tpu_custom_call.1} parent=47 // pred_fallthru
          _
        // Predicated region
        $region53: #{tpu_custom_call.1} parent=47 // pred_check
          %p309 = pneg %p81
        $region54: #{tpu_custom_call.1} parent=47 // pred_check_branch
          %311 = sbr.rel (%p309) target = $region56
        $region55: #{tpu_custom_call.1} parent=47 // pred_region
          %312 = dma.done [#allocation7], 8192
        $region56: #{tpu_custom_call.1} parent=47 // pred_fallthru
          _
        // Predicated region
        $region57: #{tpu_custom_call.1} parent=47 // pred_check
          %p313 = pneg %p123
        $region58: #{tpu_custom_call.1} parent=47 // pred_check_branch
          %315 = sbr.rel (%p313) target = $region60
        $region59: #{tpu_custom_call.1} parent=47 // pred_region
          %316 = dma.done [#allocation7], 8192
        $region60: #{tpu_custom_call.1} parent=47 // pred_fallthru
          _
        %s317 = sand.u32 %s47, 1
        %s318 = scalar_lea.sflag [#allocation4], %s317
        %s319 = sand.u32 %s47, 1
        %s320 = smul.addr %s319, 512
        %s321 = scalar_lea.vmem [#allocation3], %s320
        %p322 = pneg %p60
        %p323 = pneg %p57
        %p324 = pneg %p81
        %p325 = pneg %p78
        %p326 = pneg %p102
        %p327 = pneg %p99
        %p328 = pneg %p123
        %p329 = pneg %p120
        %p330 = pneg %p144
        %p331 = pneg %p141
        %p332 = pneg %p165
        %p333 = pneg %p162
        %p334 = pneg %p186
        %p335 = pneg %p183
        %p336 = pneg %p212
        %p337 = pneg %p209
        %s338 = sand.u32 %s199, 1
        %s339 = scalar_lea.sflag [#allocation5], %s338
        %s340 = sand.u32 %s199, 1
        %s341 = smul.addr %s340, 512
        %s342 = scalar_lea.vmem [#allocation9], %s341
        %s343 = smul.u32 32, %s29
        %s344 = smul.u32 2, %s30
        %s345 = smul.u32 32, %s29
        %p346 = scmp.eq.s32.totalorder %s30, 0
        // Predicated region
        $region61: #{tpu_custom_call.1} parent=47 // pred_check
          %p347 = pneg %p346
        $region62: #{tpu_custom_call.1} parent=47 // pred_check_branch
          %349 = sbr.rel (%p347) target = $region64
        $region63: #{tpu_custom_call.1} parent=47 // pred_region
          %350 = vst [vmem:[#allocation2] sm:$0xff] 0.0
          %351 = vst [vmem:[#allocation2 + $0x8] sm:$0xff] 0.0
          %352 = vst [vmem:[#allocation2 + $0x10] sm:$0xff] 0.0
          %353 = vst [vmem:[#allocation2 + $0x18] sm:$0xff] 0.0
          %354 = vst [vmem:[#allocation2 + $0x20] sm:$0xff] 0.0
          %355 = vst [vmem:[#allocation2 + $0x28] sm:$0xff] 0.0
          %356 = vst [vmem:[#allocation2 + $0x30] sm:$0xff] 0.0
          %357 = vst [vmem:[#allocation2 + $0x38] sm:$0xff] 0.0
          %358 = vst [vmem:[#allocation2 + $0x40] sm:$0xff] 0.0
          %359 = vst [vmem:[#allocation2 + $0x48] sm:$0xff] 0.0
          %360 = vst [vmem:[#allocation2 + $0x50] sm:$0xff] 0.0
          %361 = vst [vmem:[#allocation2 + $0x58] sm:$0xff] 0.0
          %362 = vst [vmem:[#allocation2 + $0x60] sm:$0xff] 0.0
          %363 = vst [vmem:[#allocation2 + $0x68] sm:$0xff] 0.0
          %364 = vst [vmem:[#allocation2 + $0x70] sm:$0xff] 0.0
          %365 = vst [vmem:[#allocation2 + $0x78] sm:$0xff] 0.0
          %366 = vst [vmem:[#allocation2 + $0x80] sm:$0xff] 0.0
          %367 = vst [vmem:[#allocation2 + $0x88] sm:$0xff] 0.0
          %368 = vst [vmem:[#allocation2 + $0x90] sm:$0xff] 0.0
          %369 = vst [vmem:[#allocation2 + $0x98] sm:$0xff] 0.0
          %370 = vst [vmem:[#allocation2 + $0xa0] sm:$0xff] 0.0
          %371 = vst [vmem:[#allocation2 + $0xa8] sm:$0xff] 0.0
          %372 = vst [vmem:[#allocation2 + $0xb0] sm:$0xff] 0.0
          %373 = vst [vmem:[#allocation2 + $0xb8] sm:$0xff] 0.0
          %374 = vst [vmem:[#allocation2 + $0xc0] sm:$0xff] 0.0
          %375 = vst [vmem:[#allocation2 + $0xc8] sm:$0xff] 0.0
          %376 = vst [vmem:[#allocation2 + $0xd0] sm:$0xff] 0.0
          %377 = vst [vmem:[#allocation2 + $0xd8] sm:$0xff] 0.0
          %378 = vst [vmem:[#allocation2 + $0xe0] sm:$0xff] 0.0
          %379 = vst [vmem:[#allocation2 + $0xe8] sm:$0xff] 0.0
          %380 = vst [vmem:[#allocation2 + $0xf0] sm:$0xff] 0.0
          %381 = vst [vmem:[#allocation2 + $0xf8] sm:$0xff] 0.0
          %382 = vst [vmem:[#allocation2 + $0x100] sm:$0xff] 0.0
          %383 = vst [vmem:[#allocation2 + $0x108] sm:$0xff] 0.0
          %384 = vst [vmem:[#allocation2 + $0x110] sm:$0xff] 0.0
          %385 = vst [vmem:[#allocation2 + $0x118] sm:$0xff] 0.0
          %386 = vst [vmem:[#allocation2 + $0x120] sm:$0xff] 0.0
          %387 = vst [vmem:[#allocation2 + $0x128] sm:$0xff] 0.0
          %388 = vst [vmem:[#allocation2 + $0x130] sm:$0xff] 0.0
          %389 = vst [vmem:[#allocation2 + $0x138] sm:$0xff] 0.0
          %390 = vst [vmem:[#allocation2 + $0x140] sm:$0xff] 0.0
          %391 = vst [vmem:[#allocation2 + $0x148] sm:$0xff] 0.0
          %392 = vst [vmem:[#allocation2 + $0x150] sm:$0xff] 0.0
          %393 = vst [vmem:[#allocation2 + $0x158] sm:$0xff] 0.0
          %394 = vst [vmem:[#allocation2 + $0x160] sm:$0xff] 0.0
          %395 = vst [vmem:[#allocation2 + $0x168] sm:$0xff] 0.0
          %396 = vst [vmem:[#allocation2 + $0x170] sm:$0xff] 0.0
          %397 = vst [vmem:[#allocation2 + $0x178] sm:$0xff] 0.0
          %398 = vst [vmem:[#allocation2 + $0x180] sm:$0xff] 0.0
          %399 = vst [vmem:[#allocation2 + $0x188] sm:$0xff] 0.0
          %400 = vst [vmem:[#allocation2 + $0x190] sm:$0xff] 0.0
          %401 = vst [vmem:[#allocation2 + $0x198] sm:$0xff] 0.0
          %402 = vst [vmem:[#allocation2 + $0x1a0] sm:$0xff] 0.0
          %403 = vst [vmem:[#allocation2 + $0x1a8] sm:$0xff] 0.0
          %404 = vst [vmem:[#allocation2 + $0x1b0] sm:$0xff] 0.0
          %405 = vst [vmem:[#allocation2 + $0x1b8] sm:$0xff] 0.0
          %406 = vst [vmem:[#allocation2 + $0x1c0] sm:$0xff] 0.0
          %407 = vst [vmem:[#allocation2 + $0x1c8] sm:$0xff] 0.0
          %408 = vst [vmem:[#allocation2 + $0x1d0] sm:$0xff] 0.0
          %409 = vst [vmem:[#allocation2 + $0x1d8] sm:$0xff] 0.0
          %410 = vst [vmem:[#allocation2 + $0x1e0] sm:$0xff] 0.0
          %411 = vst [vmem:[#allocation2 + $0x1e8] sm:$0xff] 0.0
          %412 = vst [vmem:[#allocation2 + $0x1f0] sm:$0xff] 0.0
          %413 = vst [vmem:[#allocation2 + $0x1f8] sm:$0xff] 0.0
        $region64: #{tpu_custom_call.1} parent=47 // pred_fallthru
          _
        %v414 = vld [vmem:[#allocation2] sm:$0xff]
        %v415 = vld [vmem:[#allocation2 + $0x8] sm:$0xff]
        %v416 = vld [vmem:[#allocation2 + $0x10] sm:$0xff]
        %v417 = vld [vmem:[#allocation2 + $0x18] sm:$0xff]
        %v418 = vld [vmem:[#allocation2 + $0x20] sm:$0xff]
        %v419 = vld [vmem:[#allocation2 + $0x28] sm:$0xff]
        %v420 = vld [vmem:[#allocation2 + $0x30] sm:$0xff]
        %v421 = vld [vmem:[#allocation2 + $0x38] sm:$0xff]
        %v422 = vld [vmem:[#allocation2 + $0x40] sm:$0xff]
        %v423 = vld [vmem:[#allocation2 + $0x48] sm:$0xff]
        %v424 = vld [vmem:[#allocation2 + $0x50] sm:$0xff]
        %v425 = vld [vmem:[#allocation2 + $0x58] sm:$0xff]
        %v426 = vld [vmem:[#allocation2 + $0x60] sm:$0xff]
        %v427 = vld [vmem:[#allocation2 + $0x68] sm:$0xff]
        %v428 = vld [vmem:[#allocation2 + $0x70] sm:$0xff]
        %v429 = vld [vmem:[#allocation2 + $0x78] sm:$0xff]
        %v430 = vld [vmem:[#allocation2 + $0x80] sm:$0xff]
        %v431 = vld [vmem:[#allocation2 + $0x88] sm:$0xff]
        %v432 = vld [vmem:[#allocation2 + $0x90] sm:$0xff]
        %v433 = vld [vmem:[#allocation2 + $0x98] sm:$0xff]
        %v434 = vld [vmem:[#allocation2 + $0xa0] sm:$0xff]
        %v435 = vld [vmem:[#allocation2 + $0xa8] sm:$0xff]
        %v436 = vld [vmem:[#allocation2 + $0xb0] sm:$0xff]
        %v437 = vld [vmem:[#allocation2 + $0xb8] sm:$0xff]
        %v438 = vld [vmem:[#allocation2 + $0xc0] sm:$0xff]
        %v439 = vld [vmem:[#allocation2 + $0xc8] sm:$0xff]
        %v440 = vld [vmem:[#allocation2 + $0xd0] sm:$0xff]
        %v441 = vld [vmem:[#allocation2 + $0xd8] sm:$0xff]
        %v442 = vld [vmem:[#allocation2 + $0xe0] sm:$0xff]
        %v443 = vld [vmem:[#allocation2 + $0xe8] sm:$0xff]
        %v444 = vld [vmem:[#allocation2 + $0xf0] sm:$0xff]
        %v445 = vld [vmem:[#allocation2 + $0xf8] sm:$0xff]
        %v446 = vld [vmem:[#allocation2 + $0x100] sm:$0xff]
        %v447 = vld [vmem:[#allocation2 + $0x108] sm:$0xff]
        %v448 = vld [vmem:[#allocation2 + $0x110] sm:$0xff]
        %v449 = vld [vmem:[#allocation2 + $0x118] sm:$0xff]
        %v450 = vld [vmem:[#allocation2 + $0x120] sm:$0xff]
        %v451 = vld [vmem:[#allocation2 + $0x128] sm:$0xff]
        %v452 = vld [vmem:[#allocation2 + $0x130] sm:$0xff]
        %v453 = vld [vmem:[#allocation2 + $0x138] sm:$0xff]
        %v454 = vld [vmem:[#allocation2 + $0x140] sm:$0xff]
        %v455 = vld [vmem:[#allocation2 + $0x148] sm:$0xff]
        %v456 = vld [vmem:[#allocation2 + $0x150] sm:$0xff]
        %v457 = vld [vmem:[#allocation2 + $0x158] sm:$0xff]
        %v458 = vld [vmem:[#allocation2 + $0x160] sm:$0xff]
        %v459 = vld [vmem:[#allocation2 + $0x168] sm:$0xff]
        %v460 = vld [vmem:[#allocation2 + $0x170] sm:$0xff]
        %v461 = vld [vmem:[#allocation2 + $0x178] sm:$0xff]
        %v462 = vld [vmem:[#allocation2 + $0x180] sm:$0xff]
        %v463 = vld [vmem:[#allocation2 + $0x188] sm:$0xff]
        %v464 = vld [vmem:[#allocation2 + $0x190] sm:$0xff]
        %v465 = vld [vmem:[#allocation2 + $0x198] sm:$0xff]
        %v466 = vld [vmem:[#allocation2 + $0x1a0] sm:$0xff]
        %v467 = vld [vmem:[#allocation2 + $0x1a8] sm:$0xff]
        %v468 = vld [vmem:[#allocation2 + $0x1b0] sm:$0xff]
        %v469 = vld [vmem:[#allocation2 + $0x1b8] sm:$0xff]
        %v470 = vld [vmem:[#allocation2 + $0x1c0] sm:$0xff]
        %v471 = vld [vmem:[#allocation2 + $0x1c8] sm:$0xff]
        %v472 = vld [vmem:[#allocation2 + $0x1d0] sm:$0xff]
        %v473 = vld [vmem:[#allocation2 + $0x1d8] sm:$0xff]
        %v474 = vld [vmem:[#allocation2 + $0x1e0] sm:$0xff]
        %v475 = vld [vmem:[#allocation2 + $0x1e8] sm:$0xff]
        %v476 = vld [vmem:[#allocation2 + $0x1f0] sm:$0xff]
        %v477 = vld [vmem:[#allocation2 + $0x1f8] sm:$0xff]
        %v478 = vld [vmem:[%s304] sm:$0xff]
        %v479 = vld [vmem:[%s304 + $0x8] sm:$0xff]
        %v480 = vld [vmem:[%s304 + $0x10] sm:$0xff]
        %v481 = vld [vmem:[%s304 + $0x18] sm:$0xff]
        %v482 = vld [vmem:[%s304 + $0x20] sm:$0xff]
        %v483 = vld [vmem:[%s304 + $0x28] sm:$0xff]
        %v484 = vld [vmem:[%s304 + $0x30] sm:$0xff]
        %v485 = vld [vmem:[%s304 + $0x38] sm:$0xff]
        %v486 = vld [vmem:[%s304 + $0x40] sm:$0xff]
        %v487 = vld [vmem:[%s304 + $0x48] sm:$0xff]
        %v488 = vld [vmem:[%s304 + $0x50] sm:$0xff]
        %v489 = vld [vmem:[%s304 + $0x58] sm:$0xff]
        %v490 = vld [vmem:[%s304 + $0x60] sm:$0xff]
        %v491 = vld [vmem:[%s304 + $0x68] sm:$0xff]
        %v492 = vld [vmem:[%s304 + $0x70] sm:$0xff]
        %v493 = vld [vmem:[%s304 + $0x78] sm:$0xff]
        %v494 = vld [vmem:[%s304 + $0x80] sm:$0xff]
        %v495 = vld [vmem:[%s304 + $0x88] sm:$0xff]
        %v496 = vld [vmem:[%s304 + $0x90] sm:$0xff]
        %v497 = vld [vmem:[%s304 + $0x98] sm:$0xff]
        %v498 = vld [vmem:[%s304 + $0xa0] sm:$0xff]
        %v499 = vld [vmem:[%s304 + $0xa8] sm:$0xff]
        %v500 = vld [vmem:[%s304 + $0xb0] sm:$0xff]
        %v501 = vld [vmem:[%s304 + $0xb8] sm:$0xff]
        %v502 = vld [vmem:[%s304 + $0xc0] sm:$0xff]
        %v503 = vld [vmem:[%s304 + $0xc8] sm:$0xff]
        %v504 = vld [vmem:[%s304 + $0xd0] sm:$0xff]
        %v505 = vld [vmem:[%s304 + $0xd8] sm:$0xff]
        %v506 = vld [vmem:[%s304 + $0xe0] sm:$0xff]
        %v507 = vld [vmem:[%s304 + $0xe8] sm:$0xff]
        %v508 = vld [vmem:[%s304 + $0xf0] sm:$0xff]
        %v509 = vld [vmem:[%s304 + $0xf8] sm:$0xff]
        %v510 = vld [vmem:[%s304 + $0x100] sm:$0xff]
        %v511 = vld [vmem:[%s304 + $0x108] sm:$0xff]
        %v512 = vld [vmem:[%s304 + $0x110] sm:$0xff]
        %v513 = vld [vmem:[%s304 + $0x118] sm:$0xff]
        %v514 = vld [vmem:[%s304 + $0x120] sm:$0xff]
        %v515 = vld [vmem:[%s304 + $0x128] sm:$0xff]
        %v516 = vld [vmem:[%s304 + $0x130] sm:$0xff]
        %v517 = vld [vmem:[%s304 + $0x138] sm:$0xff]
        %v518 = vld [vmem:[%s304 + $0x140] sm:$0xff]
        %v519 = vld [vmem:[%s304 + $0x148] sm:$0xff]
        %v520 = vld [vmem:[%s304 + $0x150] sm:$0xff]
        %v521 = vld [vmem:[%s304 + $0x158] sm:$0xff]
        %v522 = vld [vmem:[%s304 + $0x160] sm:$0xff]
        %v523 = vld [vmem:[%s304 + $0x168] sm:$0xff]
        %v524 = vld [vmem:[%s304 + $0x170] sm:$0xff]
        %v525 = vld [vmem:[%s304 + $0x178] sm:$0xff]
        %v526 = vld [vmem:[%s304 + $0x180] sm:$0xff]
        %v527 = vld [vmem:[%s304 + $0x188] sm:$0xff]
        %v528 = vld [vmem:[%s304 + $0x190] sm:$0xff]
        %v529 = vld [vmem:[%s304 + $0x198] sm:$0xff]
        %v530 = vld [vmem:[%s304 + $0x1a0] sm:$0xff]
        %v531 = vld [vmem:[%s304 + $0x1a8] sm:$0xff]
        %v532 = vld [vmem:[%s304 + $0x1b0] sm:$0xff]
        %v533 = vld [vmem:[%s304 + $0x1b8] sm:$0xff]
        %v534 = vld [vmem:[%s304 + $0x1c0] sm:$0xff]
        %v535 = vld [vmem:[%s304 + $0x1c8] sm:$0xff]
        %v536 = vld [vmem:[%s304 + $0x1d0] sm:$0xff]
        %v537 = vld [vmem:[%s304 + $0x1d8] sm:$0xff]
        %v538 = vld [vmem:[%s304 + $0x1e0] sm:$0xff]
        %v539 = vld [vmem:[%s304 + $0x1e8] sm:$0xff]
        %v540 = vld [vmem:[%s304 + $0x1f0] sm:$0xff]
        %v541 = vld [vmem:[%s304 + $0x1f8] sm:$0xff]
        %v542 = vld [vmem:[#allocation6] sm:$0xff]
        %v543 = vld [vmem:[#allocation6 + $0x8] sm:$0xff]
        %v544 = vld [vmem:[#allocation6 + $0x10] sm:$0xff]
        %v545 = vld [vmem:[#allocation6 + $0x18] sm:$0xff]
        %v546 = vld [vmem:[#allocation6 + $0x20] sm:$0xff]
        %v547 = vld [vmem:[#allocation6 + $0x28] sm:$0xff]
        %v548 = vld [vmem:[#allocation6 + $0x30] sm:$0xff]
        %v549 = vld [vmem:[#allocation6 + $0x38] sm:$0xff]
        %v550 = vld [vmem:[#allocation6 + $0x40] sm:$0xff]
        %v551 = vld [vmem:[#allocation6 + $0x48] sm:$0xff]
        %v552 = vld [vmem:[#allocation6 + $0x50] sm:$0xff]
        %v553 = vld [vmem:[#allocation6 + $0x58] sm:$0xff]
        %v554 = vld [vmem:[#allocation6 + $0x60] sm:$0xff]
        %v555 = vld [vmem:[#allocation6 + $0x68] sm:$0xff]
        %v556 = vld [vmem:[#allocation6 + $0x70] sm:$0xff]
        %v557 = vld [vmem:[#allocation6 + $0x78] sm:$0xff]
        %v558 = vld [vmem:[#allocation6 + $0x80] sm:$0xff]
        %v559 = vld [vmem:[#allocation6 + $0x88] sm:$0xff]
        %v560 = vld [vmem:[#allocation6 + $0x90] sm:$0xff]
        %v561 = vld [vmem:[#allocation6 + $0x98] sm:$0xff]
        %v562 = vld [vmem:[#allocation6 + $0xa0] sm:$0xff]
        %v563 = vld [vmem:[#allocation6 + $0xa8] sm:$0xff]
        %v564 = vld [vmem:[#allocation6 + $0xb0] sm:$0xff]
        %v565 = vld [vmem:[#allocation6 + $0xb8] sm:$0xff]
        %v566 = vld [vmem:[#allocation6 + $0xc0] sm:$0xff]
        %v567 = vld [vmem:[#allocation6 + $0xc8] sm:$0xff]
        %v568 = vld [vmem:[#allocation6 + $0xd0] sm:$0xff]
        %v569 = vld [vmem:[#allocation6 + $0xd8] sm:$0xff]
        %v570 = vld [vmem:[#allocation6 + $0xe0] sm:$0xff]
        %v571 = vld [vmem:[#allocation6 + $0xe8] sm:$0xff]
        %v572 = vld [vmem:[#allocation6 + $0xf0] sm:$0xff]
        %v573 = vld [vmem:[#allocation6 + $0xf8] sm:$0xff]
        %v574 = vld [vmem:[#allocation6 + $0x100] sm:$0xff]
        %v575 = vld [vmem:[#allocation6 + $0x108] sm:$0xff]
        %v576 = vld [vmem:[#allocation6 + $0x110] sm:$0xff]
        %v577 = vld [vmem:[#allocation6 + $0x118] sm:$0xff]
        %v578 = vld [vmem:[#allocation6 + $0x120] sm:$0xff]
        %v579 = vld [vmem:[#allocation6 + $0x128] sm:$0xff]
        %v580 = vld [vmem:[#allocation6 + $0x130] sm:$0xff]
        %v581 = vld [vmem:[#allocation6 + $0x138] sm:$0xff]
        %v582 = vld [vmem:[#allocation6 + $0x140] sm:$0xff]
        %v583 = vld [vmem:[#allocation6 + $0x148] sm:$0xff]
        %v584 = vld [vmem:[#allocation6 + $0x150] sm:$0xff]
        %v585 = vld [vmem:[#allocation6 + $0x158] sm:$0xff]
        %v586 = vld [vmem:[#allocation6 + $0x160] sm:$0xff]
        %v587 = vld [vmem:[#allocation6 + $0x168] sm:$0xff]
        %v588 = vld [vmem:[#allocation6 + $0x170] sm:$0xff]
        %v589 = vld [vmem:[#allocation6 + $0x178] sm:$0xff]
        %v590 = vld [vmem:[#allocation6 + $0x180] sm:$0xff]
        %v591 = vld [vmem:[#allocation6 + $0x188] sm:$0xff]
        %v592 = vld [vmem:[#allocation6 + $0x190] sm:$0xff]
        %v593 = vld [vmem:[#allocation6 + $0x198] sm:$0xff]
        %v594 = vld [vmem:[#allocation6 + $0x1a0] sm:$0xff]
        %v595 = vld [vmem:[#allocation6 + $0x1a8] sm:$0xff]
        %v596 = vld [vmem:[#allocation6 + $0x1b0] sm:$0xff]
        %v597 = vld [vmem:[#allocation6 + $0x1b8] sm:$0xff]
        %v598 = vld [vmem:[#allocation6 + $0x1c0] sm:$0xff]
        %v599 = vld [vmem:[#allocation6 + $0x1c8] sm:$0xff]
        %v600 = vld [vmem:[#allocation6 + $0x1d0] sm:$0xff]
        %v601 = vld [vmem:[#allocation6 + $0x1d8] sm:$0xff]
        %v602 = vld [vmem:[#allocation6 + $0x1e0] sm:$0xff]
        %v603 = vld [vmem:[#allocation6 + $0x1e8] sm:$0xff]
        %v604 = vld [vmem:[#allocation6 + $0x1f0] sm:$0xff]
        %v605 = vld [vmem:[#allocation6 + $0x1f8] sm:$0xff]
        %606 = vmatprep.subr.mxu0 %v543
        %607 = vmatpush1.msra.mxu0 %v542
        %608 = vmatprep.subr.mxu0 %v545
        %609 = vmatpush1.msra.mxu0 %v544
        %610 = vmatprep.subr.mxu0 %v547
        %611 = vmatpush1.msra.mxu0 %v546
        %612 = vmatprep.subr.mxu0 %v549
        %613 = vmatpush1.msra.mxu0 %v548
        %614 = vmatprep.subr.mxu0 %v551
        %615 = vmatpush1.msra.mxu0 %v550
        %616 = vmatprep.subr.mxu0 %v553
        %617 = vmatpush1.msra.mxu0 %v552
        %618 = vmatprep.subr.mxu0 %v555
        %619 = vmatpush1.msra.mxu0 %v554
        %620 = vmatprep.subr.mxu0 %v557
        %621 = vmatpush1.msra.mxu0 %v556
        %622 = vmatprep.subr.mxu0 %v559
        %623 = vmatpush1.msra.mxu0 %v558
        %624 = vmatprep.subr.mxu0 %v561
        %625 = vmatpush1.msra.mxu0 %v560
        %626 = vmatprep.subr.mxu0 %v563
        %627 = vmatpush1.msra.mxu0 %v562
        %628 = vmatprep.subr.mxu0 %v565
        %629 = vmatpush1.msra.mxu0 %v564
        %630 = vmatprep.subr.mxu0 %v567
        %631 = vmatpush1.msra.mxu0 %v566
        %632 = vmatprep.subr.mxu0 %v569
        %633 = vmatpush1.msra.mxu0 %v568
        %634 = vmatprep.subr.mxu0 %v571
        %635 = vmatpush1.msra.mxu0 %v570
        %636 = vmatprep.subr.mxu0 %v573
        %637 = vmatpush1.msra.mxu0 %v572
        %638 = vmatprep.subr.mxu0 %v575
        %639 = vmatpush1.msra.mxu0 %v574
        %640 = vmatprep.subr.mxu0 %v577
        %641 = vmatpush1.msra.mxu0 %v576
        %642 = vmatprep.subr.mxu0 %v579
        %643 = vmatpush1.msra.mxu0 %v578
        %644 = vmatprep.subr.mxu0 %v581
        %645 = vmatpush1.msra.mxu0 %v580
        %646 = vmatprep.subr.mxu0 %v583
        %647 = vmatpush1.msra.mxu0 %v582
        %648 = vmatprep.subr.mxu0 %v585
        %649 = vmatpush1.msra.mxu0 %v584
        %650 = vmatprep.subr.mxu0 %v587
        %651 = vmatpush1.msra.mxu0 %v586
        %652 = vmatprep.subr.mxu0 %v589
        %653 = vmatpush1.msra.mxu0 %v588
        %654 = vmatprep.subr.mxu0 %v591
        %655 = vmatpush1.msra.mxu0 %v590
        %656 = vmatprep.subr.mxu0 %v593
        %657 = vmatpush1.msra.mxu0 %v592
        %658 = vmatprep.subr.mxu0 %v595
        %659 = vmatpush1.msra.mxu0 %v594
        %660 = vmatprep.subr.mxu0 %v597
        %661 = vmatpush1.msra.mxu0 %v596
        %662 = vmatprep.subr.mxu0 %v599
        %663 = vmatpush1.msra.mxu0 %v598
        %664 = vmatprep.subr.mxu0 %v601
        %665 = vmatpush1.msra.mxu0 %v600
        %666 = vmatprep.subr.mxu0 %v603
        %667 = vmatpush1.msra.mxu0 %v602
        %668 = vmatprep.subr.mxu0 %v605
        %669 = vmatpush1.msra.mxu0 %v604
        %670 = vmatprep.mubr.f32.mxu0 %v479
        %671 = vmatmul.mubr.f32.gmra.mrb[0].mxu0 %v478
        %v672 = vpop.f32.mrb[0].mxu0
        %v673 = vadd.f32 0.0, %v672
        %v674 = vpop.f32.mrb[0].mxu0
        %v675 = vadd.f32 0.0, %v674
        %676 = vmatprep.mubr.f32.mxu0 %v481
        %677 = vmatmul.mubr.f32.gmra.mrb[0].mxu0 %v480
        %v678 = vpop.f32.mrb[0].mxu0
        %v679 = vadd.f32 0.0, %v678
        %v680 = vpop.f32.mrb[0].mxu0
        %v681 = vadd.f32 0.0, %v680
        %682 = vmatprep.mubr.f32.mxu0 %v483
        %683 = vmatmul.mubr.f32.gmra.mrb[0].mxu0 %v482
        %v684 = vpop.f32.mrb[0].mxu0
        %v685 = vadd.f32 0.0, %v684
        %v686 = vpop.f32.mrb[0].mxu0
        %v687 = vadd.f32 0.0, %v686
        %688 = vmatprep.mubr.f32.mxu0 %v485
        %689 = vmatmul.mubr.f32.gmra.mrb[0].mxu0 %v484
        %v690 = vpop.f32.mrb[0].mxu0
        %v691 = vadd.f32 0.0, %v690
        %v692 = vpop.f32.mrb[0].mxu0
        %v693 = vadd.f32 0.0, %v692
        %694 = vmatprep.mubr.f32.mxu0 %v487
        %695 = vmatmul.mubr.f32.gmra.mrb[0].mxu0 %v486
        %v696 = vpop.f32.mrb[0].mxu0
        %v697 = vadd.f32 0.0, %v696
        %v698 = vpop.f32.mrb[0].mxu0
        %v699 = vadd.f32 0.0, %v698
        %700 = vmatprep.mubr.f32.mxu0 %v489
        %701 = vmatmul.mubr.f32.gmra.mrb[0].mxu0 %v488
        %v702 = vpop.f32.mrb[0].mxu0
        %v703 = vadd.f32 0.0, %v702
        %v704 = vpop.f32.mrb[0].mxu0
        %v705 = vadd.f32 0.0, %v704
        %706 = vmatprep.mubr.f32.mxu0 %v491
        %707 = vmatmul.mubr.f32.gmra.mrb[0].mxu0 %v490
        %v708 = vpop.f32.mrb[0].mxu0
        %v709 = vadd.f32 0.0, %v708
        %v710 = vpop.f32.mrb[0].mxu0
        %v711 = vadd.f32 0.0, %v710
        %712 = vmatprep.mubr.f32.mxu0 %v493
        %713 = vmatmul.mubr.f32.gmra.mrb[0].mxu0 %v492
        %v714 = vpop.f32.mrb[0].mxu0
        %v715 = vadd.f32 0.0, %v714
        %v716 = vpop.f32.mrb[0].mxu0
        %v717 = vadd.f32 0.0, %v716
        %718 = vmatprep.mubr.f32.mxu0 %v495
        %719 = vmatmul.mubr.f32.gmra.mrb[0].mxu0 %v494
        %v720 = vpop.f32.mrb[0].mxu0
        %v721 = vadd.f32 0.0, %v720
        %v722 = vpop.f32.mrb[0].mxu0
        %v723 = vadd.f32 0.0, %v722
        %724 = vmatprep.mubr.f32.mxu0 %v497
        %725 = vmatmul.mubr.f32.gmra.mrb[0].mxu0 %v496
        %v726 = vpop.f32.mrb[0].mxu0
        %v727 = vadd.f32 0.0, %v726
        %v728 = vpop.f32.mrb[0].mxu0
        %v729 = vadd.f32 0.0, %v728
        %730 = vmatprep.mubr.f32.mxu0 %v499
        %731 = vmatmul.mubr.f32.gmra.mrb[0].mxu0 %v498
        %v732 = vpop.f32.mrb[0].mxu0
        %v733 = vadd.f32 0.0, %v732
        %v734 = vpop.f32.mrb[0].mxu0
        %v735 = vadd.f32 0.0, %v734
        %736 = vmatprep.mubr.f32.mxu0 %v501
        %737 = vmatmul.mubr.f32.gmra.mrb[0].mxu0 %v500
        %v738 = vpop.f32.mrb[0].mxu0
        %v739 = vadd.f32 0.0, %v738
        %v740 = vpop.f32.mrb[0].mxu0
        %v741 = vadd.f32 0.0, %v740
        %742 = vmatprep.mubr.f32.mxu0 %v503
        %743 = vmatmul.mubr.f32.gmra.mrb[0].mxu0 %v502
        %v744 = vpop.f32.mrb[0].mxu0
        %v745 = vadd.f32 0.0, %v744
        %v746 = vpop.f32.mrb[0].mxu0
        %v747 = vadd.f32 0.0, %v746
        %748 = vmatprep.mubr.f32.mxu0 %v505
        %749 = vmatmul.mubr.f32.gmra.mrb[0].mxu0 %v504
        %v750 = vpop.f32.mrb[0].mxu0
        %v751 = vadd.f32 0.0, %v750
        %v752 = vpop.f32.mrb[0].mxu0
        %v753 = vadd.f32 0.0, %v752
        %754 = vmatprep.mubr.f32.mxu0 %v507
        %755 = vmatmul.mubr.f32.gmra.mrb[0].mxu0 %v506
        %v756 = vpop.f32.mrb[0].mxu0
        %v757 = vadd.f32 0.0, %v756
        %v758 = vpop.f32.mrb[0].mxu0
        %v759 = vadd.f32 0.0, %v758
        %760 = vmatprep.mubr.f32.mxu0 %v509
        %761 = vmatmul.mubr.f32.gmra.mrb[0].mxu0 %v508
        %v762 = vpop.f32.mrb[0].mxu0
        %v763 = vadd.f32 0.0, %v762
        %v764 = vpop.f32.mrb[0].mxu0
        %v765 = vadd.f32 0.0, %v764
        %766 = vmatprep.mubr.f32.mxu0 %v511
        %767 = vmatmul.mubr.f32.gmra.mrb[0].mxu0 %v510
        %v768 = vpop.f32.mrb[0].mxu0
        %v769 = vadd.f32 0.0, %v768
        %v770 = vpop.f32.mrb[0].mxu0
        %v771 = vadd.f32 0.0, %v770
        %772 = vmatprep.mubr.f32.mxu0 %v513
        %773 = vmatmul.mubr.f32.gmra.mrb[0].mxu0 %v512
        %v774 = vpop.f32.mrb[0].mxu0
        %v775 = vadd.f32 0.0, %v774
        %v776 = vpop.f32.mrb[0].mxu0
        %v777 = vadd.f32 0.0, %v776
        %778 = vmatprep.mubr.f32.mxu0 %v515
        %779 = vmatmul.mubr.f32.gmra.mrb[0].mxu0 %v514
        %v780 = vpop.f32.mrb[0].mxu0
        %v781 = vadd.f32 0.0, %v780
        %v782 = vpop.f32.mrb[0].mxu0
        %v783 = vadd.f32 0.0, %v782
        %784 = vmatprep.mubr.f32.mxu0 %v517
        %785 = vmatmul.mubr.f32.gmra.mrb[0].mxu0 %v516
        %v786 = vpop.f32.mrb[0].mxu0
        %v787 = vadd.f32 0.0, %v786
        %v788 = vpop.f32.mrb[0].mxu0
        %v789 = vadd.f32 0.0, %v788
        %790 = vmatprep.mubr.f32.mxu0 %v519
        %791 = vmatmul.mubr.f32.gmra.mrb[0].mxu0 %v518
        %v792 = vpop.f32.mrb[0].mxu0
        %v793 = vadd.f32 0.0, %v792
        %v794 = vpop.f32.mrb[0].mxu0
        %v795 = vadd.f32 0.0, %v794
        %796 = vmatprep.mubr.f32.mxu0 %v521
        %797 = vmatmul.mubr.f32.gmra.mrb[0].mxu0 %v520
        %v798 = vpop.f32.mrb[0].mxu0
        %v799 = vadd.f32 0.0, %v798
        %v800 = vpop.f32.mrb[0].mxu0
        %v801 = vadd.f32 0.0, %v800
        %802 = vmatprep.mubr.f32.mxu0 %v523
        %803 = vmatmul.mubr.f32.gmra.mrb[0].mxu0 %v522
        %v804 = vpop.f32.mrb[0].mxu0
        %v805 = vadd.f32 0.0, %v804
        %v806 = vpop.f32.mrb[0].mxu0
        %v807 = vadd.f32 0.0, %v806
        %808 = vmatprep.mubr.f32.mxu0 %v525
        %809 = vmatmul.mubr.f32.gmra.mrb[0].mxu0 %v524
        %v810 = vpop.f32.mrb[0].mxu0
        %v811 = vadd.f32 0.0, %v810
        %v812 = vpop.f32.mrb[0].mxu0
        %v813 = vadd.f32 0.0, %v812
        %814 = vmatprep.mubr.f32.mxu0 %v527
        %815 = vmatmul.mubr.f32.gmra.mrb[0].mxu0 %v526
        %v816 = vpop.f32.mrb[0].mxu0
        %v817 = vadd.f32 0.0, %v816
        %v818 = vpop.f32.mrb[0].mxu0
        %v819 = vadd.f32 0.0, %v818
        %820 = vmatprep.mubr.f32.mxu0 %v529
        %821 = vmatmul.mubr.f32.gmra.mrb[0].mxu0 %v528
        %v822 = vpop.f32.mrb[0].mxu0
        %v823 = vadd.f32 0.0, %v822
        %v824 = vpop.f32.mrb[0].mxu0
        %v825 = vadd.f32 0.0, %v824
        %826 = vmatprep.mubr.f32.mxu0 %v531
        %827 = vmatmul.mubr.f32.gmra.mrb[0].mxu0 %v530
        %v828 = vpop.f32.mrb[0].mxu0
        %v829 = vadd.f32 0.0, %v828
        %v830 = vpop.f32.mrb[0].mxu0
        %v831 = vadd.f32 0.0, %v830
        %832 = vmatprep.mubr.f32.mxu0 %v533
        %833 = vmatmul.mubr.f32.gmra.mrb[0].mxu0 %v532
        %v834 = vpop.f32.mrb[0].mxu0
        %v835 = vadd.f32 0.0, %v834
        %v836 = vpop.f32.mrb[0].mxu0
        %v837 = vadd.f32 0.0, %v836
        %838 = vmatprep.mubr.f32.mxu0 %v535
        %839 = vmatmul.mubr.f32.gmra.mrb[0].mxu0 %v534
        %v840 = vpop.f32.mrb[0].mxu0
        %v841 = vadd.f32 0.0, %v840
        %v842 = vpop.f32.mrb[0].mxu0
        %v843 = vadd.f32 0.0, %v842
        %844 = vmatprep.mubr.f32.mxu0 %v537
        %845 = vmatmul.mubr.f32.gmra.mrb[0].mxu0 %v536
        %v846 = vpop.f32.mrb[0].mxu0
        %v847 = vadd.f32 0.0, %v846
        %v848 = vpop.f32.mrb[0].mxu0
        %v849 = vadd.f32 0.0, %v848
        %850 = vmatprep.mubr.f32.mxu0 %v539
        %851 = vmatmul.mubr.f32.gmra.mrb[0].mxu0 %v538
        %v852 = vpop.f32.mrb[0].mxu0
        %v853 = vadd.f32 0.0, %v852
        %v854 = vpop.f32.mrb[0].mxu0
        %v855 = vadd.f32 0.0, %v854
        %856 = vmatprep.mubr.f32.mxu0 %v541
        %857 = vmatmul.mubr.f32.gmra.mrb[0].mxu0 %v540
        %v858 = vpop.f32.mrb[0].mxu0
        %v859 = vadd.f32 0.0, %v858
        %v860 = vpop.f32.mrb[0].mxu0
        %v861 = vadd.f32 0.0, %v860
        %862 = vdwg.mxu0
        %v863 = vadd.f32 %v414, %v673
        %v864 = vadd.f32 %v415, %v675
        %v865 = vadd.f32 %v416, %v679
        %v866 = vadd.f32 %v417, %v681
        %v867 = vadd.f32 %v418, %v685
        %v868 = vadd.f32 %v419, %v687
        %v869 = vadd.f32 %v420, %v691
        %v870 = vadd.f32 %v421, %v693
        %v871 = vadd.f32 %v422, %v697
        %v872 = vadd.f32 %v423, %v699
        %v873 = vadd.f32 %v424, %v703
        %v874 = vadd.f32 %v425, %v705
        %v875 = vadd.f32 %v426, %v709
        %v876 = vadd.f32 %v427, %v711
        %v877 = vadd.f32 %v428, %v715
        %v878 = vadd.f32 %v429, %v717
        %v879 = vadd.f32 %v430, %v721
        %v880 = vadd.f32 %v431, %v723
        %v881 = vadd.f32 %v432, %v727
        %v882 = vadd.f32 %v433, %v729
        %v883 = vadd.f32 %v434, %v733
        %v884 = vadd.f32 %v435, %v735
        %v885 = vadd.f32 %v436, %v739
        %v886 = vadd.f32 %v437, %v741
        %v887 = vadd.f32 %v438, %v745
        %v888 = vadd.f32 %v439, %v747
        %v889 = vadd.f32 %v440, %v751
        %v890 = vadd.f32 %v441, %v753
        %v891 = vadd.f32 %v442, %v757
        %v892 = vadd.f32 %v443, %v759
        %v893 = vadd.f32 %v444, %v763
        %v894 = vadd.f32 %v445, %v765
        %v895 = vadd.f32 %v446, %v769
        %v896 = vadd.f32 %v447, %v771
        %v897 = vadd.f32 %v448, %v775
        %v898 = vadd.f32 %v449, %v777
        %v899 = vadd.f32 %v450, %v781
        %v900 = vadd.f32 %v451, %v783
        %v901 = vadd.f32 %v452, %v787
        %v902 = vadd.f32 %v453, %v789
        %v903 = vadd.f32 %v454, %v793
        %v904 = vadd.f32 %v455, %v795
        %v905 = vadd.f32 %v456, %v799
        %v906 = vadd.f32 %v457, %v801
        %v907 = vadd.f32 %v458, %v805
        %v908 = vadd.f32 %v459, %v807
        %v909 = vadd.f32 %v460, %v811
        %v910 = vadd.f32 %v461, %v813
        %v911 = vadd.f32 %v462, %v817
        %v912 = vadd.f32 %v463, %v819
        %v913 = vadd.f32 %v464, %v823
        %v914 = vadd.f32 %v465, %v825
        %v915 = vadd.f32 %v466, %v829
        %v916 = vadd.f32 %v467, %v831
        %v917 = vadd.f32 %v468, %v835
        %v918 = vadd.f32 %v469, %v837
        %v919 = vadd.f32 %v470, %v841
        %v920 = vadd.f32 %v471, %v843
        %v921 = vadd.f32 %v472, %v847
        %v922 = vadd.f32 %v473, %v849
        %v923 = vadd.f32 %v474, %v853
        %v924 = vadd.f32 %v475, %v855
        %v925 = vadd.f32 %v476, %v859
        %v926 = vadd.f32 %v477, %v861
        %927 = vst [vmem:[#allocation2] sm:$0xff] %v863
        %928 = vst [vmem:[#allocation2 + $0x8] sm:$0xff] %v864
        %929 = vst [vmem:[#allocation2 + $0x10] sm:$0xff] %v865
        %930 = vst [vmem:[#allocation2 + $0x18] sm:$0xff] %v866
        %931 = vst [vmem:[#allocation2 + $0x20] sm:$0xff] %v867
        %932 = vst [vmem:[#allocation2 + $0x28] sm:$0xff] %v868
        %933 = vst [vmem:[#allocation2 + $0x30] sm:$0xff] %v869
        %934 = vst [vmem:[#allocation2 + $0x38] sm:$0xff] %v870
        %935 = vst [vmem:[#allocation2 + $0x40] sm:$0xff] %v871
        %936 = vst [vmem:[#allocation2 + $0x48] sm:$0xff] %v872
        %937 = vst [vmem:[#allocation2 + $0x50] sm:$0xff] %v873
        %938 = vst [vmem:[#allocation2 + $0x58] sm:$0xff] %v874
        %939 = vst [vmem:[#allocation2 + $0x60] sm:$0xff] %v875
        %940 = vst [vmem:[#allocation2 + $0x68] sm:$0xff] %v876
        %941 = vst [vmem:[#allocation2 + $0x70] sm:$0xff] %v877
        %942 = vst [vmem:[#allocation2 + $0x78] sm:$0xff] %v878
        %943 = vst [vmem:[#allocation2 + $0x80] sm:$0xff] %v879
        %944 = vst [vmem:[#allocation2 + $0x88] sm:$0xff] %v880
        %945 = vst [vmem:[#allocation2 + $0x90] sm:$0xff] %v881
        %946 = vst [vmem:[#allocation2 + $0x98] sm:$0xff] %v882
        %947 = vst [vmem:[#allocation2 + $0xa0] sm:$0xff] %v883
        %948 = vst [vmem:[#allocation2 + $0xa8] sm:$0xff] %v884
        %949 = vst [vmem:[#allocation2 + $0xb0] sm:$0xff] %v885
        %950 = vst [vmem:[#allocation2 + $0xb8] sm:$0xff] %v886
        %951 = vst [vmem:[#allocation2 + $0xc0] sm:$0xff] %v887
        %952 = vst [vmem:[#allocation2 + $0xc8] sm:$0xff] %v888
        %953 = vst [vmem:[#allocation2 + $0xd0] sm:$0xff] %v889
        %954 = vst [vmem:[#allocation2 + $0xd8] sm:$0xff] %v890
        %955 = vst [vmem:[#allocation2 + $0xe0] sm:$0xff] %v891
        %956 = vst [vmem:[#allocation2 + $0xe8] sm:$0xff] %v892
        %957 = vst [vmem:[#allocation2 + $0xf0] sm:$0xff] %v893
        %958 = vst [vmem:[#allocation2 + $0xf8] sm:$0xff] %v894
        %959 = vst [vmem:[#allocation2 + $0x100] sm:$0xff] %v895
        %960 = vst [vmem:[#allocation2 + $0x108] sm:$0xff] %v896
        %961 = vst [vmem:[#allocation2 + $0x110] sm:$0xff] %v897
        %962 = vst [vmem:[#allocation2 + $0x118] sm:$0xff] %v898
        %963 = vst [vmem:[#allocation2 + $0x120] sm:$0xff] %v899
        %964 = vst [vmem:[#allocation2 + $0x128] sm:$0xff] %v900
        %965 = vst [vmem:[#allocation2 + $0x130] sm:$0xff] %v901
        %966 = vst [vmem:[#allocation2 + $0x138] sm:$0xff] %v902
        %967 = vst [vmem:[#allocation2 + $0x140] sm:$0xff] %v903
        %968 = vst [vmem:[#allocation2 + $0x148] sm:$0xff] %v904
        %969 = vst [vmem:[#allocation2 + $0x150] sm:$0xff] %v905
        %970 = vst [vmem:[#allocation2 + $0x158] sm:$0xff] %v906
        %971 = vst [vmem:[#allocation2 + $0x160] sm:$0xff] %v907
        %972 = vst [vmem:[#allocation2 + $0x168] sm:$0xff] %v908
        %973 = vst [vmem:[#allocation2 + $0x170] sm:$0xff] %v909
        %974 = vst [vmem:[#allocation2 + $0x178] sm:$0xff] %v910
        %975 = vst [vmem:[#allocation2 + $0x180] sm:$0xff] %v911
        %976 = vst [vmem:[#allocation2 + $0x188] sm:$0xff] %v912
        %977 = vst [vmem:[#allocation2 + $0x190] sm:$0xff] %v913
        %978 = vst [vmem:[#allocation2 + $0x198] sm:$0xff] %v914
        %979 = vst [vmem:[#allocation2 + $0x1a0] sm:$0xff] %v915
        %980 = vst [vmem:[#allocation2 + $0x1a8] sm:$0xff] %v916
        %981 = vst [vmem:[#allocation2 + $0x1b0] sm:$0xff] %v917
        %982 = vst [vmem:[#allocation2 + $0x1b8] sm:$0xff] %v918
        %983 = vst [vmem:[#allocation2 + $0x1c0] sm:$0xff] %v919
        %984 = vst [vmem:[#allocation2 + $0x1c8] sm:$0xff] %v920
        %985 = vst [vmem:[#allocation2 + $0x1d0] sm:$0xff] %v921
        %986 = vst [vmem:[#allocation2 + $0x1d8] sm:$0xff] %v922
        %987 = vst [vmem:[#allocation2 + $0x1e0] sm:$0xff] %v923
        %988 = vst [vmem:[#allocation2 + $0x1e8] sm:$0xff] %v924
        %989 = vst [vmem:[#allocation2 + $0x1f0] sm:$0xff] %v925
        %990 = vst [vmem:[#allocation2 + $0x1f8] sm:$0xff] %v926
        // Predicated region
        $region65: #{tpu_custom_call.1} parent=47 // pred_check
          %p991 = pneg %p346
        $region66: #{tpu_custom_call.1} parent=47 // pred_check_branch
          %993 = sbr.rel (%p991) target = $region68
        $region67: #{tpu_custom_call.1} parent=47 // pred_region
          %v994 = vld [vmem:[#allocation2] sm:$0xff]
          %v995 = vld [vmem:[#allocation2 + $0x8] sm:$0xff]
          %v996 = vld [vmem:[#allocation2 + $0x10] sm:$0xff]
          %v997 = vld [vmem:[#allocation2 + $0x18] sm:$0xff]
          %v998 = vld [vmem:[#allocation2 + $0x20] sm:$0xff]
          %v999 = vld [vmem:[#allocation2 + $0x28] sm:$0xff]
          %v1000 = vld [vmem:[#allocation2 + $0x30] sm:$0xff]
          %v1001 = vld [vmem:[#allocation2 + $0x38] sm:$0xff]
          %v1002 = vld [vmem:[#allocation2 + $0x40] sm:$0xff]
          %v1003 = vld [vmem:[#allocation2 + $0x48] sm:$0xff]
          %v1004 = vld [vmem:[#allocation2 + $0x50] sm:$0xff]
          %v1005 = vld [vmem:[#allocation2 + $0x58] sm:$0xff]
          %v1006 = vld [vmem:[#allocation2 + $0x60] sm:$0xff]
          %v1007 = vld [vmem:[#allocation2 + $0x68] sm:$0xff]
          %v1008 = vld [vmem:[#allocation2 + $0x70] sm:$0xff]
          %v1009 = vld [vmem:[#allocation2 + $0x78] sm:$0xff]
          %v1010 = vld [vmem:[#allocation2 + $0x80] sm:$0xff]
          %v1011 = vld [vmem:[#allocation2 + $0x88] sm:$0xff]
          %v1012 = vld [vmem:[#allocation2 + $0x90] sm:$0xff]
          %v1013 = vld [vmem:[#allocation2 + $0x98] sm:$0xff]
          %v1014 = vld [vmem:[#allocation2 + $0xa0] sm:$0xff]
          %v1015 = vld [vmem:[#allocation2 + $0xa8] sm:$0xff]
          %v1016 = vld [vmem:[#allocation2 + $0xb0] sm:$0xff]
          %v1017 = vld [vmem:[#allocation2 + $0xb8] sm:$0xff]
          %v1018 = vld [vmem:[#allocation2 + $0xc0] sm:$0xff]
          %v1019 = vld [vmem:[#allocation2 + $0xc8] sm:$0xff]
          %v1020 = vld [vmem:[#allocation2 + $0xd0] sm:$0xff]
          %v1021 = vld [vmem:[#allocation2 + $0xd8] sm:$0xff]
          %v1022 = vld [vmem:[#allocation2 + $0xe0] sm:$0xff]
          %v1023 = vld [vmem:[#allocation2 + $0xe8] sm:$0xff]
          %v1024 = vld [vmem:[#allocation2 + $0xf0] sm:$0xff]
          %v1025 = vld [vmem:[#allocation2 + $0xf8] sm:$0xff]
          %v1026 = vld [vmem:[#allocation2 + $0x100] sm:$0xff]
          %v1027 = vld [vmem:[#allocation2 + $0x108] sm:$0xff]
          %v1028 = vld [vmem:[#allocation2 + $0x110] sm:$0xff]
          %v1029 = vld [vmem:[#allocation2 + $0x118] sm:$0xff]
          %v1030 = vld [vmem:[#allocation2 + $0x120] sm:$0xff]
          %v1031 = vld [vmem:[#allocation2 + $0x128] sm:$0xff]
          %v1032 = vld [vmem:[#allocation2 + $0x130] sm:$0xff]
          %v1033 = vld [vmem:[#allocation2 + $0x138] sm:$0xff]
          %v1034 = vld [vmem:[#allocation2 + $0x140] sm:$0xff]
          %v1035 = vld [vmem:[#allocation2 + $0x148] sm:$0xff]
          %v1036 = vld [vmem:[#allocation2 + $0x150] sm:$0xff]
          %v1037 = vld [vmem:[#allocation2 + $0x158] sm:$0xff]
          %v1038 = vld [vmem:[#allocation2 + $0x160] sm:$0xff]
          %v1039 = vld [vmem:[#allocation2 + $0x168] sm:$0xff]
          %v1040 = vld [vmem:[#allocation2 + $0x170] sm:$0xff]
          %v1041 = vld [vmem:[#allocation2 + $0x178] sm:$0xff]
          %v1042 = vld [vmem:[#allocation2 + $0x180] sm:$0xff]
          %v1043 = vld [vmem:[#allocation2 + $0x188] sm:$0xff]
          %v1044 = vld [vmem:[#allocation2 + $0x190] sm:$0xff]
          %v1045 = vld [vmem:[#allocation2 + $0x198] sm:$0xff]
          %v1046 = vld [vmem:[#allocation2 + $0x1a0] sm:$0xff]
          %v1047 = vld [vmem:[#allocation2 + $0x1a8] sm:$0xff]
          %v1048 = vld [vmem:[#allocation2 + $0x1b0] sm:$0xff]
          %v1049 = vld [vmem:[#allocation2 + $0x1b8] sm:$0xff]
          %v1050 = vld [vmem:[#allocation2 + $0x1c0] sm:$0xff]
          %v1051 = vld [vmem:[#allocation2 + $0x1c8] sm:$0xff]
          %v1052 = vld [vmem:[#allocation2 + $0x1d0] sm:$0xff]
          %v1053 = vld [vmem:[#allocation2 + $0x1d8] sm:$0xff]
          %v1054 = vld [vmem:[#allocation2 + $0x1e0] sm:$0xff]
          %v1055 = vld [vmem:[#allocation2 + $0x1e8] sm:$0xff]
          %v1056 = vld [vmem:[#allocation2 + $0x1f0] sm:$0xff]
          %v1057 = vld [vmem:[#allocation2 + $0x1f8] sm:$0xff]
          %v1058 = vld [vmem:[%s2] sm:$0x3]
          %v1060 = vlaneseq
          %v1061 = vshrl.u32 %v1060, 7
          %v1062 = vsub.s32 0, %v1061
          %v1063 = vrot.slane %v1058, %v1062
          %v1064 = vlaneseq
          %v1065 = vshrl.u32 %v1064, 7
          %v1066 = vsub.s32 1, %v1065
          %v1067 = vrot.slane %v1058, %v1066
          %v1070 = vadd.f32 %v994, %v1063
          %v1071 = vadd.f32 %v995, %v1067
          %v1072 = vadd.f32 %v996, %v1063
          %v1073 = vadd.f32 %v997, %v1067
          %v1074 = vadd.f32 %v998, %v1063
          %v1075 = vadd.f32 %v999, %v1067
          %v1076 = vadd.f32 %v1000, %v1063
          %v1077 = vadd.f32 %v1001, %v1067
          %v1078 = vadd.f32 %v1002, %v1063
          %v1079 = vadd.f32 %v1003, %v1067
          %v1080 = vadd.f32 %v1004, %v1063
          %v1081 = vadd.f32 %v1005, %v1067
          %v1082 = vadd.f32 %v1006, %v1063
          %v1083 = vadd.f32 %v1007, %v1067
          %v1084 = vadd.f32 %v1008, %v1063
          %v1085 = vadd.f32 %v1009, %v1067
          %v1086 = vadd.f32 %v1010, %v1063
          %v1087 = vadd.f32 %v1011, %v1067
          %v1088 = vadd.f32 %v1012, %v1063
          %v1089 = vadd.f32 %v1013, %v1067
          %v1090 = vadd.f32 %v1014, %v1063
          %v1091 = vadd.f32 %v1015, %v1067
          %v1092 = vadd.f32 %v1016, %v1063
          %v1093 = vadd.f32 %v1017, %v1067
          %v1094 = vadd.f32 %v1018, %v1063
          %v1095 = vadd.f32 %v1019, %v1067
          %v1096 = vadd.f32 %v1020, %v1063
          %v1097 = vadd.f32 %v1021, %v1067
          %v1098 = vadd.f32 %v1022, %v1063
          %v1099 = vadd.f32 %v1023, %v1067
          %v1100 = vadd.f32 %v1024, %v1063
          %v1101 = vadd.f32 %v1025, %v1067
          %v1102 = vadd.f32 %v1026, %v1063
          %v1103 = vadd.f32 %v1027, %v1067
          %v1104 = vadd.f32 %v1028, %v1063
          %v1105 = vadd.f32 %v1029, %v1067
          %v1106 = vadd.f32 %v1030, %v1063
          %v1107 = vadd.f32 %v1031, %v1067
          %v1108 = vadd.f32 %v1032, %v1063
          %v1109 = vadd.f32 %v1033, %v1067
          %v1110 = vadd.f32 %v1034, %v1063
          %v1111 = vadd.f32 %v1035, %v1067
          %v1112 = vadd.f32 %v1036, %v1063
          %v1113 = vadd.f32 %v1037, %v1067
          %v1114 = vadd.f32 %v1038, %v1063
          %v1115 = vadd.f32 %v1039, %v1067
          %v1116 = vadd.f32 %v1040, %v1063
          %v1117 = vadd.f32 %v1041, %v1067
          %v1118 = vadd.f32 %v1042, %v1063
          %v1119 = vadd.f32 %v1043, %v1067
          %v1120 = vadd.f32 %v1044, %v1063
          %v1121 = vadd.f32 %v1045, %v1067
          %v1122 = vadd.f32 %v1046, %v1063
          %v1123 = vadd.f32 %v1047, %v1067
          %v1124 = vadd.f32 %v1048, %v1063
          %v1125 = vadd.f32 %v1049, %v1067
          %v1126 = vadd.f32 %v1050, %v1063
          %v1127 = vadd.f32 %v1051, %v1067
          %v1128 = vadd.f32 %v1052, %v1063
          %v1129 = vadd.f32 %v1053, %v1067
          %v1130 = vadd.f32 %v1054, %v1063
          %v1131 = vadd.f32 %v1055, %v1067
          %v1132 = vadd.f32 %v1056, %v1063
          %v1133 = vadd.f32 %v1057, %v1067
          %v1134 = vmul.f32 %v1070, 0.5
          %v1135 = vmul.f32 %v1071, 0.5
          %v1136 = vmul.f32 %v1072, 0.5
          %v1137 = vmul.f32 %v1073, 0.5
          %v1138 = vmul.f32 %v1074, 0.5
          %v1139 = vmul.f32 %v1075, 0.5
          %v1140 = vmul.f32 %v1076, 0.5
          %v1141 = vmul.f32 %v1077, 0.5
          %v1142 = vmul.f32 %v1078, 0.5
          %v1143 = vmul.f32 %v1079, 0.5
          %v1144 = vmul.f32 %v1080, 0.5
          %v1145 = vmul.f32 %v1081, 0.5
          %v1146 = vmul.f32 %v1082, 0.5
          %v1147 = vmul.f32 %v1083, 0.5
          %v1148 = vmul.f32 %v1084, 0.5
          %v1149 = vmul.f32 %v1085, 0.5
          %v1150 = vmul.f32 %v1086, 0.5
          %v1151 = vmul.f32 %v1087, 0.5
          %v1152 = vmul.f32 %v1088, 0.5
          %v1153 = vmul.f32 %v1089, 0.5
          %v1154 = vmul.f32 %v1090, 0.5
          %v1155 = vmul.f32 %v1091, 0.5
          %v1156 = vmul.f32 %v1092, 0.5
          %v1157 = vmul.f32 %v1093, 0.5
          %v1158 = vmul.f32 %v1094, 0.5
          %v1159 = vmul.f32 %v1095, 0.5
          %v1160 = vmul.f32 %v1096, 0.5
          %v1161 = vmul.f32 %v1097, 0.5
          %v1162 = vmul.f32 %v1098, 0.5
          %v1163 = vmul.f32 %v1099, 0.5
          %v1164 = vmul.f32 %v1100, 0.5
          %v1165 = vmul.f32 %v1101, 0.5
          %v1166 = vmul.f32 %v1102, 0.5
          %v1167 = vmul.f32 %v1103, 0.5
          %v1168 = vmul.f32 %v1104, 0.5
          %v1169 = vmul.f32 %v1105, 0.5
          %v1170 = vmul.f32 %v1106, 0.5
          %v1171 = vmul.f32 %v1107, 0.5
          %v1172 = vmul.f32 %v1108, 0.5
          %v1173 = vmul.f32 %v1109, 0.5
          %v1174 = vmul.f32 %v1110, 0.5
          %v1175 = vmul.f32 %v1111, 0.5
          %v1176 = vmul.f32 %v1112, 0.5
          %v1177 = vmul.f32 %v1113, 0.5
          %v1178 = vmul.f32 %v1114, 0.5
          %v1179 = vmul.f32 %v1115, 0.5
          %v1180 = vmul.f32 %v1116, 0.5
          %v1181 = vmul.f32 %v1117, 0.5
          %v1182 = vmul.f32 %v1118, 0.5
          %v1183 = vmul.f32 %v1119, 0.5
          %v1184 = vmul.f32 %v1120, 0.5
          %v1185 = vmul.f32 %v1121, 0.5
          %v1186 = vmul.f32 %v1122, 0.5
          %v1187 = vmul.f32 %v1123, 0.5
          %v1188 = vmul.f32 %v1124, 0.5
          %v1189 = vmul.f32 %v1125, 0.5
          %v1190 = vmul.f32 %v1126, 0.5
          %v1191 = vmul.f32 %v1127, 0.5
          %v1192 = vmul.f32 %v1128, 0.5
          %v1193 = vmul.f32 %v1129, 0.5
          %v1194 = vmul.f32 %v1130, 0.5
          %v1195 = vmul.f32 %v1131, 0.5
          %v1196 = vmul.f32 %v1132, 0.5
          %v1197 = vmul.f32 %v1133, 0.5
          %v1198 = vmul.f32 %v1070, 0.70710677
          %v1199 = vmul.f32 %v1071, 0.70710677
          %v1200 = vmul.f32 %v1072, 0.70710677
          %v1201 = vmul.f32 %v1073, 0.70710677
          %v1202 = vmul.f32 %v1074, 0.70710677
          %v1203 = vmul.f32 %v1075, 0.70710677
          %v1204 = vmul.f32 %v1076, 0.70710677
          %v1205 = vmul.f32 %v1077, 0.70710677
          %v1206 = vmul.f32 %v1078, 0.70710677
          %v1207 = vmul.f32 %v1079, 0.70710677
          %v1208 = vmul.f32 %v1080, 0.70710677
          %v1209 = vmul.f32 %v1081, 0.70710677
          %v1210 = vmul.f32 %v1082, 0.70710677
          %v1211 = vmul.f32 %v1083, 0.70710677
          %v1212 = vmul.f32 %v1084, 0.70710677
          %v1213 = vmul.f32 %v1085, 0.70710677
          %v1214 = vmul.f32 %v1086, 0.70710677
          %v1215 = vmul.f32 %v1087, 0.70710677
          %v1216 = vmul.f32 %v1088, 0.70710677
          %v1217 = vmul.f32 %v1089, 0.70710677
          %v1218 = vmul.f32 %v1090, 0.70710677
          %v1219 = vmul.f32 %v1091, 0.70710677
          %v1220 = vmul.f32 %v1092, 0.70710677
          %v1221 = vmul.f32 %v1093, 0.70710677
          %v1222 = vmul.f32 %v1094, 0.70710677
          %v1223 = vmul.f32 %v1095, 0.70710677
          %v1224 = vmul.f32 %v1096, 0.70710677
          %v1225 = vmul.f32 %v1097, 0.70710677
          %v1226 = vmul.f32 %v1098, 0.70710677
          %v1227 = vmul.f32 %v1099, 0.70710677
          %v1228 = vmul.f32 %v1100, 0.70710677
          %v1229 = vmul.f32 %v1101, 0.70710677
          %v1230 = vmul.f32 %v1102, 0.70710677
          %v1231 = vmul.f32 %v1103, 0.70710677
          %v1232 = vmul.f32 %v1104, 0.70710677
          %v1233 = vmul.f32 %v1105, 0.70710677
          %v1234 = vmul.f32 %v1106, 0.70710677
          %v1235 = vmul.f32 %v1107, 0.70710677
          %v1236 = vmul.f32 %v1108, 0.70710677
          %v1237 = vmul.f32 %v1109, 0.70710677
          %v1238 = vmul.f32 %v1110, 0.70710677
          %v1239 = vmul.f32 %v1111, 0.70710677
          %v1240 = vmul.f32 %v1112, 0.70710677
          %v1241 = vmul.f32 %v1113, 0.70710677
          %v1242 = vmul.f32 %v1114, 0.70710677
          %v1243 = vmul.f32 %v1115, 0.70710677
          %v1244 = vmul.f32 %v1116, 0.70710677
          %v1245 = vmul.f32 %v1117, 0.70710677
          %v1246 = vmul.f32 %v1118, 0.70710677
          %v1247 = vmul.f32 %v1119, 0.70710677
          %v1248 = vmul.f32 %v1120, 0.70710677
          %v1249 = vmul.f32 %v1121, 0.70710677
          %v1250 = vmul.f32 %v1122, 0.70710677
          %v1251 = vmul.f32 %v1123, 0.70710677
          %v1252 = vmul.f32 %v1124, 0.70710677
          %v1253 = vmul.f32 %v1125, 0.70710677
          %v1254 = vmul.f32 %v1126, 0.70710677
          %v1255 = vmul.f32 %v1127, 0.70710677
          %v1256 = vmul.f32 %v1128, 0.70710677
          %v1257 = vmul.f32 %v1129, 0.70710677
          %v1258 = vmul.f32 %v1130, 0.70710677
          %v1259 = vmul.f32 %v1131, 0.70710677
          %v1260 = vmul.f32 %v1132, 0.70710677
          %v1261 = vmul.f32 %v1133, 0.70710677
          %v1262 = verf.f32.pop %v1198
          %v1263 = verf.f32.pop %v1199
          %v1264 = verf.f32.pop %v1200
          %v1265 = verf.f32.pop %v1201
          %v1266 = verf.f32.pop %v1202
          %v1267 = verf.f32.pop %v1203
          %v1268 = verf.f32.pop %v1204
          %v1269 = verf.f32.pop %v1205
          %v1270 = verf.f32.pop %v1206
          %v1271 = verf.f32.pop %v1207
          %v1272 = verf.f32.pop %v1208
          %v1273 = verf.f32.pop %v1209
          %v1274 = verf.f32.pop %v1210
          %v1275 = verf.f32.pop %v1211
          %v1276 = verf.f32.pop %v1212
          %v1277 = verf.f32.pop %v1213
          %v1278 = verf.f32.pop %v1214
          %v1279 = verf.f32.pop %v1215
          %v1280 = verf.f32.pop %v1216
          %v1281 = verf.f32.pop %v1217
          %v1282 = verf.f32.pop %v1218
          %v1283 = verf.f32.pop %v1219
          %v1284 = verf.f32.pop %v1220
          %v1285 = verf.f32.pop %v1221
          %v1286 = verf.f32.pop %v1222
          %v1287 = verf.f32.pop %v1223
          %v1288 = verf.f32.pop %v1224
          %v1289 = verf.f32.pop %v1225
          %v1290 = verf.f32.pop %v1226
          %v1291 = verf.f32.pop %v1227
          %v1292 = verf.f32.pop %v1228
          %v1293 = verf.f32.pop %v1229
          %v1294 = verf.f32.pop %v1230
          %v1295 = verf.f32.pop %v1231
          %v1296 = verf.f32.pop %v1232
          %v1297 = verf.f32.pop %v1233
          %v1298 = verf.f32.pop %v1234
          %v1299 = verf.f32.pop %v1235
          %v1300 = verf.f32.pop %v1236
          %v1301 = verf.f32.pop %v1237
          %v1302 = verf.f32.pop %v1238
          %v1303 = verf.f32.pop %v1239
          %v1304 = verf.f32.pop %v1240
          %v1305 = verf.f32.pop %v1241
          %v1306 = verf.f32.pop %v1242
          %v1307 = verf.f32.pop %v1243
          %v1308 = verf.f32.pop %v1244
          %v1309 = verf.f32.pop %v1245
          %v1310 = verf.f32.pop %v1246
          %v1311 = verf.f32.pop %v1247
          %v1312 = verf.f32.pop %v1248
          %v1313 = verf.f32.pop %v1249
          %v1314 = verf.f32.pop %v1250
          %v1315 = verf.f32.pop %v1251
          %v1316 = verf.f32.pop %v1252
          %v1317 = verf.f32.pop %v1253
          %v1318 = verf.f32.pop %v1254
          %v1319 = verf.f32.pop %v1255
          %v1320 = verf.f32.pop %v1256
          %v1321 = verf.f32.pop %v1257
          %v1322 = verf.f32.pop %v1258
          %v1323 = verf.f32.pop %v1259
          %v1324 = verf.f32.pop %v1260
          %v1325 = verf.f32.pop %v1261
          %v1326 = vadd.f32 %v1262, 1.0
          %v1327 = vadd.f32 %v1263, 1.0
          %v1328 = vadd.f32 %v1264, 1.0
          %v1329 = vadd.f32 %v1265, 1.0
          %v1330 = vadd.f32 %v1266, 1.0
          %v1331 = vadd.f32 %v1267, 1.0
          %v1332 = vadd.f32 %v1268, 1.0
          %v1333 = vadd.f32 %v1269, 1.0
          %v1334 = vadd.f32 %v1270, 1.0
          %v1335 = vadd.f32 %v1271, 1.0
          %v1336 = vadd.f32 %v1272, 1.0
          %v1337 = vadd.f32 %v1273, 1.0
          %v1338 = vadd.f32 %v1274, 1.0
          %v1339 = vadd.f32 %v1275, 1.0
          %v1340 = vadd.f32 %v1276, 1.0
          %v1341 = vadd.f32 %v1277, 1.0
          %v1342 = vadd.f32 %v1278, 1.0
          %v1343 = vadd.f32 %v1279, 1.0
          %v1344 = vadd.f32 %v1280, 1.0
          %v1345 = vadd.f32 %v1281, 1.0
          %v1346 = vadd.f32 %v1282, 1.0
          %v1347 = vadd.f32 %v1283, 1.0
          %v1348 = vadd.f32 %v1284, 1.0
          %v1349 = vadd.f32 %v1285, 1.0
          %v1350 = vadd.f32 %v1286, 1.0
          %v1351 = vadd.f32 %v1287, 1.0
          %v1352 = vadd.f32 %v1288, 1.0
          %v1353 = vadd.f32 %v1289, 1.0
          %v1354 = vadd.f32 %v1290, 1.0
          %v1355 = vadd.f32 %v1291, 1.0
          %v1356 = vadd.f32 %v1292, 1.0
          %v1357 = vadd.f32 %v1293, 1.0
          %v1358 = vadd.f32 %v1294, 1.0
          %v1359 = vadd.f32 %v1295, 1.0
          %v1360 = vadd.f32 %v1296, 1.0
          %v1361 = vadd.f32 %v1297, 1.0
          %v1362 = vadd.f32 %v1298, 1.0
          %v1363 = vadd.f32 %v1299, 1.0
          %v1364 = vadd.f32 %v1300, 1.0
          %v1365 = vadd.f32 %v1301, 1.0
          %v1366 = vadd.f32 %v1302, 1.0
          %v1367 = vadd.f32 %v1303, 1.0
          %v1368 = vadd.f32 %v1304, 1.0
          %v1369 = vadd.f32 %v1305, 1.0
          %v1370 = vadd.f32 %v1306, 1.0
          %v1371 = vadd.f32 %v1307, 1.0
          %v1372 = vadd.f32 %v1308, 1.0
          %v1373 = vadd.f32 %v1309, 1.0
          %v1374 = vadd.f32 %v1310, 1.0
          %v1375 = vadd.f32 %v1311, 1.0
          %v1376 = vadd.f32 %v1312, 1.0
          %v1377 = vadd.f32 %v1313, 1.0
          %v1378 = vadd.f32 %v1314, 1.0
          %v1379 = vadd.f32 %v1315, 1.0
          %v1380 = vadd.f32 %v1316, 1.0
          %v1381 = vadd.f32 %v1317, 1.0
          %v1382 = vadd.f32 %v1318, 1.0
          %v1383 = vadd.f32 %v1319, 1.0
          %v1384 = vadd.f32 %v1320, 1.0
          %v1385 = vadd.f32 %v1321, 1.0
          %v1386 = vadd.f32 %v1322, 1.0
          %v1387 = vadd.f32 %v1323, 1.0
          %v1388 = vadd.f32 %v1324, 1.0
          %v1389 = vadd.f32 %v1325, 1.0
          %v1390 = vmul.f32 %v1134, %v1326
          %v1391 = vmul.f32 %v1135, %v1327
          %v1392 = vmul.f32 %v1136, %v1328
          %v1393 = vmul.f32 %v1137, %v1329
          %v1394 = vmul.f32 %v1138, %v1330
          %v1395 = vmul.f32 %v1139, %v1331
          %v1396 = vmul.f32 %v1140, %v1332
          %v1397 = vmul.f32 %v1141, %v1333
          %v1398 = vmul.f32 %v1142, %v1334
          %v1399 = vmul.f32 %v1143, %v1335
          %v1400 = vmul.f32 %v1144, %v1336
          %v1401 = vmul.f32 %v1145, %v1337
          %v1402 = vmul.f32 %v1146, %v1338
          %v1403 = vmul.f32 %v1147, %v1339
          %v1404 = vmul.f32 %v1148, %v1340
          %v1405 = vmul.f32 %v1149, %v1341
          %v1406 = vmul.f32 %v1150, %v1342
          %v1407 = vmul.f32 %v1151, %v1343
          %v1408 = vmul.f32 %v1152, %v1344
          %v1409 = vmul.f32 %v1153, %v1345
          %v1410 = vmul.f32 %v1154, %v1346
          %v1411 = vmul.f32 %v1155, %v1347
          %v1412 = vmul.f32 %v1156, %v1348
          %v1413 = vmul.f32 %v1157, %v1349
          %v1414 = vmul.f32 %v1158, %v1350
          %v1415 = vmul.f32 %v1159, %v1351
          %v1416 = vmul.f32 %v1160, %v1352
          %v1417 = vmul.f32 %v1161, %v1353
          %v1418 = vmul.f32 %v1162, %v1354
          %v1419 = vmul.f32 %v1163, %v1355
          %v1420 = vmul.f32 %v1164, %v1356
          %v1421 = vmul.f32 %v1165, %v1357
          %v1422 = vmul.f32 %v1166, %v1358
          %v1423 = vmul.f32 %v1167, %v1359
          %v1424 = vmul.f32 %v1168, %v1360
          %v1425 = vmul.f32 %v1169, %v1361
          %v1426 = vmul.f32 %v1170, %v1362
          %v1427 = vmul.f32 %v1171, %v1363
          %v1428 = vmul.f32 %v1172, %v1364
          %v1429 = vmul.f32 %v1173, %v1365
          %v1430 = vmul.f32 %v1174, %v1366
          %v1431 = vmul.f32 %v1175, %v1367
          %v1432 = vmul.f32 %v1176, %v1368
          %v1433 = vmul.f32 %v1177, %v1369
          %v1434 = vmul.f32 %v1178, %v1370
          %v1435 = vmul.f32 %v1179, %v1371
          %v1436 = vmul.f32 %v1180, %v1372
          %v1437 = vmul.f32 %v1181, %v1373
          %v1438 = vmul.f32 %v1182, %v1374
          %v1439 = vmul.f32 %v1183, %v1375
          %v1440 = vmul.f32 %v1184, %v1376
          %v1441 = vmul.f32 %v1185, %v1377
          %v1442 = vmul.f32 %v1186, %v1378
          %v1443 = vmul.f32 %v1187, %v1379
          %v1444 = vmul.f32 %v1188, %v1380
          %v1445 = vmul.f32 %v1189, %v1381
          %v1446 = vmul.f32 %v1190, %v1382
          %v1447 = vmul.f32 %v1191, %v1383
          %v1448 = vmul.f32 %v1192, %v1384
          %v1449 = vmul.f32 %v1193, %v1385
          %v1450 = vmul.f32 %v1194, %v1386
          %v1451 = vmul.f32 %v1195, %v1387
          %v1452 = vmul.f32 %v1196, %v1388
          %v1453 = vmul.f32 %v1197, %v1389
          %v1454 = vld [vmem:[#allocation8] sm:$0xff]
          %v1455 = vld [vmem:[#allocation8 + $0x8] sm:$0xff]
          %v1456 = vld [vmem:[#allocation8 + $0x10] sm:$0xff]
          %v1457 = vld [vmem:[#allocation8 + $0x18] sm:$0xff]
          %v1458 = vld [vmem:[#allocation8 + $0x20] sm:$0xff]
          %v1459 = vld [vmem:[#allocation8 + $0x28] sm:$0xff]
          %v1460 = vld [vmem:[#allocation8 + $0x30] sm:$0xff]
          %v1461 = vld [vmem:[#allocation8 + $0x38] sm:$0xff]
          %v1462 = vld [vmem:[#allocation8 + $0x40] sm:$0xff]
          %v1463 = vld [vmem:[#allocation8 + $0x48] sm:$0xff]
          %v1464 = vld [vmem:[#allocation8 + $0x50] sm:$0xff]
          %v1465 = vld [vmem:[#allocation8 + $0x58] sm:$0xff]
          %v1466 = vld [vmem:[#allocation8 + $0x60] sm:$0xff]
          %v1467 = vld [vmem:[#allocation8 + $0x68] sm:$0xff]
          %v1468 = vld [vmem:[#allocation8 + $0x70] sm:$0xff]
          %v1469 = vld [vmem:[#allocation8 + $0x78] sm:$0xff]
          %v1470 = vld [vmem:[#allocation8 + $0x80] sm:$0xff]
          %v1471 = vld [vmem:[#allocation8 + $0x88] sm:$0xff]
          %v1472 = vld [vmem:[#allocation8 + $0x90] sm:$0xff]
          %v1473 = vld [vmem:[#allocation8 + $0x98] sm:$0xff]
          %v1474 = vld [vmem:[#allocation8 + $0xa0] sm:$0xff]
          %v1475 = vld [vmem:[#allocation8 + $0xa8] sm:$0xff]
          %v1476 = vld [vmem:[#allocation8 + $0xb0] sm:$0xff]
          %v1477 = vld [vmem:[#allocation8 + $0xb8] sm:$0xff]
          %v1478 = vld [vmem:[#allocation8 + $0xc0] sm:$0xff]
          %v1479 = vld [vmem:[#allocation8 + $0xc8] sm:$0xff]
          %v1480 = vld [vmem:[#allocation8 + $0xd0] sm:$0xff]
          %v1481 = vld [vmem:[#allocation8 + $0xd8] sm:$0xff]
          %v1482 = vld [vmem:[#allocation8 + $0xe0] sm:$0xff]
          %v1483 = vld [vmem:[#allocation8 + $0xe8] sm:$0xff]
          %v1484 = vld [vmem:[#allocation8 + $0xf0] sm:$0xff]
          %v1485 = vld [vmem:[#allocation8 + $0xf8] sm:$0xff]
          %v1486 = vld [vmem:[#allocation8 + $0x100] sm:$0xff]
          %v1487 = vld [vmem:[#allocation8 + $0x108] sm:$0xff]
          %v1488 = vld [vmem:[#allocation8 + $0x110] sm:$0xff]
          %v1489 = vld [vmem:[#allocation8 + $0x118] sm:$0xff]
          %v1490 = vld [vmem:[#allocation8 + $0x120] sm:$0xff]
          %v1491 = vld [vmem:[#allocation8 + $0x128] sm:$0xff]
          %v1492 = vld [vmem:[#allocation8 + $0x130] sm:$0xff]
          %v1493 = vld [vmem:[#allocation8 + $0x138] sm:$0xff]
          %v1494 = vld [vmem:[#allocation8 + $0x140] sm:$0xff]
          %v1495 = vld [vmem:[#allocation8 + $0x148] sm:$0xff]
          %v1496 = vld [vmem:[#allocation8 + $0x150] sm:$0xff]
          %v1497 = vld [vmem:[#allocation8 + $0x158] sm:$0xff]
          %v1498 = vld [vmem:[#allocation8 + $0x160] sm:$0xff]
          %v1499 = vld [vmem:[#allocation8 + $0x168] sm:$0xff]
          %v1500 = vld [vmem:[#allocation8 + $0x170] sm:$0xff]
          %v1501 = vld [vmem:[#allocation8 + $0x178] sm:$0xff]
          %v1502 = vld [vmem:[#allocation8 + $0x180] sm:$0xff]
          %v1503 = vld [vmem:[#allocation8 + $0x188] sm:$0xff]
          %v1504 = vld [vmem:[#allocation8 + $0x190] sm:$0xff]
          %v1505 = vld [vmem:[#allocation8 + $0x198] sm:$0xff]
          %v1506 = vld [vmem:[#allocation8 + $0x1a0] sm:$0xff]
          %v1507 = vld [vmem:[#allocation8 + $0x1a8] sm:$0xff]
          %v1508 = vld [vmem:[#allocation8 + $0x1b0] sm:$0xff]
          %v1509 = vld [vmem:[#allocation8 + $0x1b8] sm:$0xff]
          %v1510 = vld [vmem:[#allocation8 + $0x1c0] sm:$0xff]
          %v1511 = vld [vmem:[#allocation8 + $0x1c8] sm:$0xff]
          %v1512 = vld [vmem:[#allocation8 + $0x1d0] sm:$0xff]
          %v1513 = vld [vmem:[#allocation8 + $0x1d8] sm:$0xff]
          %v1514 = vld [vmem:[#allocation8 + $0x1e0] sm:$0xff]
          %v1515 = vld [vmem:[#allocation8 + $0x1e8] sm:$0xff]
          %v1516 = vld [vmem:[#allocation8 + $0x1f0] sm:$0xff]
          %v1517 = vld [vmem:[#allocation8 + $0x1f8] sm:$0xff]
          %v1518 = vld [vmem:[%s4] sm:$0x3]
          %v1520 = vlaneseq
          %v1521 = vshrl.u32 %v1520, 7
          %v1522 = vsub.s32 0, %v1521
          %v1523 = vrot.slane %v1518, %v1522
          %v1524 = vlaneseq
          %v1525 = vshrl.u32 %v1524, 7
          %v1526 = vsub.s32 1, %v1525
          %v1527 = vrot.slane %v1518, %v1526
          %1530 = vmatprep.subr.mxu0 %v1455
          %1531 = vmatpush1.msra.mxu0 %v1454
          %1532 = vmatprep.subr.mxu0 %v1457
          %1533 = vmatpush1.msra.mxu0 %v1456
          %1534 = vmatprep.subr.mxu0 %v1459
          %1535 = vmatpush1.msra.mxu0 %v1458
          %1536 = vmatprep.subr.mxu0 %v1461
          %1537 = vmatpush1.msra.mxu0 %v1460
          %1538 = vmatprep.subr.mxu0 %v1463
          %1539 = vmatpush1.msra.mxu0 %v1462
          %1540 = vmatprep.subr.mxu0 %v1465
          %1541 = vmatpush1.msra.mxu0 %v1464
          %1542 = vmatprep.subr.mxu0 %v1467
          %1543 = vmatpush1.msra.mxu0 %v1466
          %1544 = vmatprep.subr.mxu0 %v1469
          %1545 = vmatpush1.msra.mxu0 %v1468
          %1546 = vmatprep.subr.mxu0 %v1471
          %1547 = vmatpush1.msra.mxu0 %v1470
          %1548 = vmatprep.subr.mxu0 %v1473
          %1549 = vmatpush1.msra.mxu0 %v1472
          %1550 = vmatprep.subr.mxu0 %v1475
          %1551 = vmatpush1.msra.mxu0 %v1474
          %1552 = vmatprep.subr.mxu0 %v1477
          %1553 = vmatpush1.msra.mxu0 %v1476
          %1554 = vmatprep.subr.mxu0 %v1479
          %1555 = vmatpush1.msra.mxu0 %v1478
          %1556 = vmatprep.subr.mxu0 %v1481
          %1557 = vmatpush1.msra.mxu0 %v1480
          %1558 = vmatprep.subr.mxu0 %v1483
          %1559 = vmatpush1.msra.mxu0 %v1482
          %1560 = vmatprep.subr.mxu0 %v1485
          %1561 = vmatpush1.msra.mxu0 %v1484
          %1562 = vmatprep.subr.mxu0 %v1487
          %1563 = vmatpush1.msra.mxu0 %v1486
          %1564 = vmatprep.subr.mxu0 %v1489
          %1565 = vmatpush1.msra.mxu0 %v1488
          %1566 = vmatprep.subr.mxu0 %v1491
          %1567 = vmatpush1.msra.mxu0 %v1490
          %1568 = vmatprep.subr.mxu0 %v1493
          %1569 = vmatpush1.msra.mxu0 %v1492
          %1570 = vmatprep.subr.mxu0 %v1495
          %1571 = vmatpush1.msra.mxu0 %v1494
          %1572 = vmatprep.subr.mxu0 %v1497
          %1573 = vmatpush1.msra.mxu0 %v1496
          %1574 = vmatprep.subr.mxu0 %v1499
          %1575 = vmatpush1.msra.mxu0 %v1498
          %1576 = vmatprep.subr.mxu0 %v1501
          %1577 = vmatpush1.msra.mxu0 %v1500
          %1578 = vmatprep.subr.mxu0 %v1503
          %1579 = vmatpush1.msra.mxu0 %v1502
          %1580 = vmatprep.subr.mxu0 %v1505
          %1581 = vmatpush1.msra.mxu0 %v1504
          %1582 = vmatprep.subr.mxu0 %v1507
          %1583 = vmatpush1.msra.mxu0 %v1506
          %1584 = vmatprep.subr.mxu0 %v1509
          %1585 = vmatpush1.msra.mxu0 %v1508
          %1586 = vmatprep.subr.mxu0 %v1511
          %1587 = vmatpush1.msra.mxu0 %v1510
          %1588 = vmatprep.subr.mxu0 %v1513
          %1589 = vmatpush1.msra.mxu0 %v1512
          %1590 = vmatprep.subr.mxu0 %v1515
          %1591 = vmatpush1.msra.mxu0 %v1514
          %1592 = vmatprep.subr.mxu0 %v1517
          %1593 = vmatpush1.msra.mxu0 %v1516
          %1594 = vmatprep.mubr.f32.mxu0 %v1391
          %1595 = vmatmul.mubr.f32.gmra.mrb[0].mxu0 %v1390
          %v1596 = vpop.f32.mrb[0].mxu0
          %v1597 = vadd.f32 %v1523, %v1596
          %v1598 = vpop.f32.mrb[0].mxu0
          %v1599 = vadd.f32 %v1527, %v1598
          %1600 = vmatprep.mubr.f32.mxu0 %v1393
          %1601 = vmatmul.mubr.f32.gmra.mrb[0].mxu0 %v1392
          %v1602 = vpop.f32.mrb[0].mxu0
          %v1603 = vadd.f32 %v1523, %v1602
          %v1604 = vpop.f32.mrb[0].mxu0
          %v1605 = vadd.f32 %v1527, %v1604
          %1606 = vmatprep.mubr.f32.mxu0 %v1395
          %1607 = vmatmul.mubr.f32.gmra.mrb[0].mxu0 %v1394
          %v1608 = vpop.f32.mrb[0].mxu0
          %v1609 = vadd.f32 %v1523, %v1608
          %v1610 = vpop.f32.mrb[0].mxu0
          %v1611 = vadd.f32 %v1527, %v1610
          %1612 = vmatprep.mubr.f32.mxu0 %v1397
          %1613 = vmatmul.mubr.f32.gmra.mrb[0].mxu0 %v1396
          %v1614 = vpop.f32.mrb[0].mxu0
          %v1615 = vadd.f32 %v1523, %v1614
          %v1616 = vpop.f32.mrb[0].mxu0
          %v1617 = vadd.f32 %v1527, %v1616
          %1618 = vmatprep.mubr.f32.mxu0 %v1399
          %1619 = vmatmul.mubr.f32.gmra.mrb[0].mxu0 %v1398
          %v1620 = vpop.f32.mrb[0].mxu0
          %v1621 = vadd.f32 %v1523, %v1620
          %v1622 = vpop.f32.mrb[0].mxu0
          %v1623 = vadd.f32 %v1527, %v1622
          %1624 = vmatprep.mubr.f32.mxu0 %v1401
          %1625 = vmatmul.mubr.f32.gmra.mrb[0].mxu0 %v1400
          %v1626 = vpop.f32.mrb[0].mxu0
          %v1627 = vadd.f32 %v1523, %v1626
          %v1628 = vpop.f32.mrb[0].mxu0
          %v1629 = vadd.f32 %v1527, %v1628
          %1630 = vmatprep.mubr.f32.mxu0 %v1403
          %1631 = vmatmul.mubr.f32.gmra.mrb[0].mxu0 %v1402
          %v1632 = vpop.f32.mrb[0].mxu0
          %v1633 = vadd.f32 %v1523, %v1632
          %v1634 = vpop.f32.mrb[0].mxu0
          %v1635 = vadd.f32 %v1527, %v1634
          %1636 = vmatprep.mubr.f32.mxu0 %v1405
          %1637 = vmatmul.mubr.f32.gmra.mrb[0].mxu0 %v1404
          %v1638 = vpop.f32.mrb[0].mxu0
          %v1639 = vadd.f32 %v1523, %v1638
          %v1640 = vpop.f32.mrb[0].mxu0
          %v1641 = vadd.f32 %v1527, %v1640
          %1642 = vmatprep.mubr.f32.mxu0 %v1407
          %1643 = vmatmul.mubr.f32.gmra.mrb[0].mxu0 %v1406
          %v1644 = vpop.f32.mrb[0].mxu0
          %v1645 = vadd.f32 %v1523, %v1644
          %v1646 = vpop.f32.mrb[0].mxu0
          %v1647 = vadd.f32 %v1527, %v1646
          %1648 = vmatprep.mubr.f32.mxu0 %v1409
          %1649 = vmatmul.mubr.f32.gmra.mrb[0].mxu0 %v1408
          %v1650 = vpop.f32.mrb[0].mxu0
          %v1651 = vadd.f32 %v1523, %v1650
          %v1652 = vpop.f32.mrb[0].mxu0
          %v1653 = vadd.f32 %v1527, %v1652
          %1654 = vmatprep.mubr.f32.mxu0 %v1411
          %1655 = vmatmul.mubr.f32.gmra.mrb[0].mxu0 %v1410
          %v1656 = vpop.f32.mrb[0].mxu0
          %v1657 = vadd.f32 %v1523, %v1656
          %v1658 = vpop.f32.mrb[0].mxu0
          %v1659 = vadd.f32 %v1527, %v1658
          %1660 = vmatprep.mubr.f32.mxu0 %v1413
          %1661 = vmatmul.mubr.f32.gmra.mrb[0].mxu0 %v1412
          %v1662 = vpop.f32.mrb[0].mxu0
          %v1663 = vadd.f32 %v1523, %v1662
          %v1664 = vpop.f32.mrb[0].mxu0
          %v1665 = vadd.f32 %v1527, %v1664
          %1666 = vmatprep.mubr.f32.mxu0 %v1415
          %1667 = vmatmul.mubr.f32.gmra.mrb[0].mxu0 %v1414
          %v1668 = vpop.f32.mrb[0].mxu0
          %v1669 = vadd.f32 %v1523, %v1668
          %v1670 = vpop.f32.mrb[0].mxu0
          %v1671 = vadd.f32 %v1527, %v1670
          %1672 = vmatprep.mubr.f32.mxu0 %v1417
          %1673 = vmatmul.mubr.f32.gmra.mrb[0].mxu0 %v1416
          %v1674 = vpop.f32.mrb[0].mxu0
          %v1675 = vadd.f32 %v1523, %v1674
          %v1676 = vpop.f32.mrb[0].mxu0
          %v1677 = vadd.f32 %v1527, %v1676
          %1678 = vmatprep.mubr.f32.mxu0 %v1419
          %1679 = vmatmul.mubr.f32.gmra.mrb[0].mxu0 %v1418
          %v1680 = vpop.f32.mrb[0].mxu0
          %v1681 = vadd.f32 %v1523, %v1680
          %v1682 = vpop.f32.mrb[0].mxu0
          %v1683 = vadd.f32 %v1527, %v1682
          %1684 = vmatprep.mubr.f32.mxu0 %v1421
          %1685 = vmatmul.mubr.f32.gmra.mrb[0].mxu0 %v1420
          %v1686 = vpop.f32.mrb[0].mxu0
          %v1687 = vadd.f32 %v1523, %v1686
          %v1688 = vpop.f32.mrb[0].mxu0
          %v1689 = vadd.f32 %v1527, %v1688
          %1690 = vmatprep.mubr.f32.mxu0 %v1423
          %1691 = vmatmul.mubr.f32.gmra.mrb[0].mxu0 %v1422
          %v1692 = vpop.f32.mrb[0].mxu0
          %v1693 = vadd.f32 %v1523, %v1692
          %v1694 = vpop.f32.mrb[0].mxu0
          %v1695 = vadd.f32 %v1527, %v1694
          %1696 = vmatprep.mubr.f32.mxu0 %v1425
          %1697 = vmatmul.mubr.f32.gmra.mrb[0].mxu0 %v1424
          %v1698 = vpop.f32.mrb[0].mxu0
          %v1699 = vadd.f32 %v1523, %v1698
          %v1700 = vpop.f32.mrb[0].mxu0
          %v1701 = vadd.f32 %v1527, %v1700
          %1702 = vmatprep.mubr.f32.mxu0 %v1427
          %1703 = vmatmul.mubr.f32.gmra.mrb[0].mxu0 %v1426
          %v1704 = vpop.f32.mrb[0].mxu0
          %v1705 = vadd.f32 %v1523, %v1704
          %v1706 = vpop.f32.mrb[0].mxu0
          %v1707 = vadd.f32 %v1527, %v1706
          %1708 = vmatprep.mubr.f32.mxu0 %v1429
          %1709 = vmatmul.mubr.f32.gmra.mrb[0].mxu0 %v1428
          %v1710 = vpop.f32.mrb[0].mxu0
          %v1711 = vadd.f32 %v1523, %v1710
          %v1712 = vpop.f32.mrb[0].mxu0
          %v1713 = vadd.f32 %v1527, %v1712
          %1714 = vmatprep.mubr.f32.mxu0 %v1431
          %1715 = vmatmul.mubr.f32.gmra.mrb[0].mxu0 %v1430
          %v1716 = vpop.f32.mrb[0].mxu0
          %v1717 = vadd.f32 %v1523, %v1716
          %v1718 = vpop.f32.mrb[0].mxu0
          %v1719 = vadd.f32 %v1527, %v1718
          %1720 = vmatprep.mubr.f32.mxu0 %v1433
          %1721 = vmatmul.mubr.f32.gmra.mrb[0].mxu0 %v1432
          %v1722 = vpop.f32.mrb[0].mxu0
          %v1723 = vadd.f32 %v1523, %v1722
          %v1724 = vpop.f32.mrb[0].mxu0
          %v1725 = vadd.f32 %v1527, %v1724
          %1726 = vmatprep.mubr.f32.mxu0 %v1435
          %1727 = vmatmul.mubr.f32.gmra.mrb[0].mxu0 %v1434
          %v1728 = vpop.f32.mrb[0].mxu0
          %v1729 = vadd.f32 %v1523, %v1728
          %v1730 = vpop.f32.mrb[0].mxu0
          %v1731 = vadd.f32 %v1527, %v1730
          %1732 = vmatprep.mubr.f32.mxu0 %v1437
          %1733 = vmatmul.mubr.f32.gmra.mrb[0].mxu0 %v1436
          %v1734 = vpop.f32.mrb[0].mxu0
          %v1735 = vadd.f32 %v1523, %v1734
          %v1736 = vpop.f32.mrb[0].mxu0
          %v1737 = vadd.f32 %v1527, %v1736
          %1738 = vmatprep.mubr.f32.mxu0 %v1439
          %1739 = vmatmul.mubr.f32.gmra.mrb[0].mxu0 %v1438
          %v1740 = vpop.f32.mrb[0].mxu0
          %v1741 = vadd.f32 %v1523, %v1740
          %v1742 = vpop.f32.mrb[0].mxu0
          %v1743 = vadd.f32 %v1527, %v1742
          %1744 = vmatprep.mubr.f32.mxu0 %v1441
          %1745 = vmatmul.mubr.f32.gmra.mrb[0].mxu0 %v1440
          %v1746 = vpop.f32.mrb[0].mxu0
          %v1747 = vadd.f32 %v1523, %v1746
          %v1748 = vpop.f32.mrb[0].mxu0
          %v1749 = vadd.f32 %v1527, %v1748
          %1750 = vmatprep.mubr.f32.mxu0 %v1443
          %1751 = vmatmul.mubr.f32.gmra.mrb[0].mxu0 %v1442
          %v1752 = vpop.f32.mrb[0].mxu0
          %v1753 = vadd.f32 %v1523, %v1752
          %v1754 = vpop.f32.mrb[0].mxu0
          %v1755 = vadd.f32 %v1527, %v1754
          %1756 = vmatprep.mubr.f32.mxu0 %v1445
          %1757 = vmatmul.mubr.f32.gmra.mrb[0].mxu0 %v1444
          %v1758 = vpop.f32.mrb[0].mxu0
          %v1759 = vadd.f32 %v1523, %v1758
          %v1760 = vpop.f32.mrb[0].mxu0
          %v1761 = vadd.f32 %v1527, %v1760
          %1762 = vmatprep.mubr.f32.mxu0 %v1447
          %1763 = vmatmul.mubr.f32.gmra.mrb[0].mxu0 %v1446
          %v1764 = vpop.f32.mrb[0].mxu0
          %v1765 = vadd.f32 %v1523, %v1764
          %v1766 = vpop.f32.mrb[0].mxu0
          %v1767 = vadd.f32 %v1527, %v1766
          %1768 = vmatprep.mubr.f32.mxu0 %v1449
          %1769 = vmatmul.mubr.f32.gmra.mrb[0].mxu0 %v1448
          %v1770 = vpop.f32.mrb[0].mxu0
          %v1771 = vadd.f32 %v1523, %v1770
          %v1772 = vpop.f32.mrb[0].mxu0
          %v1773 = vadd.f32 %v1527, %v1772
          %1774 = vmatprep.mubr.f32.mxu0 %v1451
          %1775 = vmatmul.mubr.f32.gmra.mrb[0].mxu0 %v1450
          %v1776 = vpop.f32.mrb[0].mxu0
          %v1777 = vadd.f32 %v1523, %v1776
          %v1778 = vpop.f32.mrb[0].mxu0
          %v1779 = vadd.f32 %v1527, %v1778
          %1780 = vmatprep.mubr.f32.mxu0 %v1453
          %1781 = vmatmul.mubr.f32.gmra.mrb[0].mxu0 %v1452
          %v1782 = vpop.f32.mrb[0].mxu0
          %v1783 = vadd.f32 %v1523, %v1782
          %v1784 = vpop.f32.mrb[0].mxu0
          %v1785 = vadd.f32 %v1527, %v1784
          %1786 = vdwg.mxu0
          %v1787 = vadd.f32 %v1597, %v1070
          %v1788 = vadd.f32 %v1599, %v1071
          %v1789 = vadd.f32 %v1603, %v1072
          %v1790 = vadd.f32 %v1605, %v1073
          %v1791 = vadd.f32 %v1609, %v1074
          %v1792 = vadd.f32 %v1611, %v1075
          %v1793 = vadd.f32 %v1615, %v1076
          %v1794 = vadd.f32 %v1617, %v1077
          %v1795 = vadd.f32 %v1621, %v1078
          %v1796 = vadd.f32 %v1623, %v1079
          %v1797 = vadd.f32 %v1627, %v1080
          %v1798 = vadd.f32 %v1629, %v1081
          %v1799 = vadd.f32 %v1633, %v1082
          %v1800 = vadd.f32 %v1635, %v1083
          %v1801 = vadd.f32 %v1639, %v1084
          %v1802 = vadd.f32 %v1641, %v1085
          %v1803 = vadd.f32 %v1645, %v1086
          %v1804 = vadd.f32 %v1647, %v1087
          %v1805 = vadd.f32 %v1651, %v1088
          %v1806 = vadd.f32 %v1653, %v1089
          %v1807 = vadd.f32 %v1657, %v1090
          %v1808 = vadd.f32 %v1659, %v1091
          %v1809 = vadd.f32 %v1663, %v1092
          %v1810 = vadd.f32 %v1665, %v1093
          %v1811 = vadd.f32 %v1669, %v1094
          %v1812 = vadd.f32 %v1671, %v1095
          %v1813 = vadd.f32 %v1675, %v1096
          %v1814 = vadd.f32 %v1677, %v1097
          %v1815 = vadd.f32 %v1681, %v1098
          %v1816 = vadd.f32 %v1683, %v1099
          %v1817 = vadd.f32 %v1687, %v1100
          %v1818 = vadd.f32 %v1689, %v1101
          %v1819 = vadd.f32 %v1693, %v1102
          %v1820 = vadd.f32 %v1695, %v1103
          %v1821 = vadd.f32 %v1699, %v1104
          %v1822 = vadd.f32 %v1701, %v1105
          %v1823 = vadd.f32 %v1705, %v1106
          %v1824 = vadd.f32 %v1707, %v1107
          %v1825 = vadd.f32 %v1711, %v1108
          %v1826 = vadd.f32 %v1713, %v1109
          %v1827 = vadd.f32 %v1717, %v1110
          %v1828 = vadd.f32 %v1719, %v1111
          %v1829 = vadd.f32 %v1723, %v1112
          %v1830 = vadd.f32 %v1725, %v1113
          %v1831 = vadd.f32 %v1729, %v1114
          %v1832 = vadd.f32 %v1731, %v1115
          %v1833 = vadd.f32 %v1735, %v1116
          %v1834 = vadd.f32 %v1737, %v1117
          %v1835 = vadd.f32 %v1741, %v1118
          %v1836 = vadd.f32 %v1743, %v1119
          %v1837 = vadd.f32 %v1747, %v1120
          %v1838 = vadd.f32 %v1749, %v1121
          %v1839 = vadd.f32 %v1753, %v1122
          %v1840 = vadd.f32 %v1755, %v1123
          %v1841 = vadd.f32 %v1759, %v1124
          %v1842 = vadd.f32 %v1761, %v1125
          %v1843 = vadd.f32 %v1765, %v1126
          %v1844 = vadd.f32 %v1767, %v1127
          %v1845 = vadd.f32 %v1771, %v1128
          %v1846 = vadd.f32 %v1773, %v1129
          %v1847 = vadd.f32 %v1777, %v1130
          %v1848 = vadd.f32 %v1779, %v1131
          %v1849 = vadd.f32 %v1783, %v1132
          %v1850 = vadd.f32 %v1785, %v1133
          %v1851 = vadd.f32 %v1787, %v1788
          %1852 = vadd.xlane.f32.xlu0 %v1851
          %v1853 = vpop.xlane.xlu0 %1852
          %v1854 = vadd.f32 %v1789, %v1790
          %1855 = vadd.xlane.f32.xlu0 %v1854
          %v1856 = vpop.xlane.xlu0 %1855
          %v1857 = vadd.f32 %v1791, %v1792
          %1858 = vadd.xlane.f32.xlu0 %v1857
          %v1859 = vpop.xlane.xlu0 %1858
          %v1860 = vadd.f32 %v1793, %v1794
          %1861 = vadd.xlane.f32.xlu0 %v1860
          %v1862 = vpop.xlane.xlu0 %1861
          %v1863 = vadd.f32 %v1795, %v1796
          %1864 = vadd.xlane.f32.xlu0 %v1863
          %v1865 = vpop.xlane.xlu0 %1864
          %v1866 = vadd.f32 %v1797, %v1798
          %1867 = vadd.xlane.f32.xlu0 %v1866
          %v1868 = vpop.xlane.xlu0 %1867
          %v1869 = vadd.f32 %v1799, %v1800
          %1870 = vadd.xlane.f32.xlu0 %v1869
          %v1871 = vpop.xlane.xlu0 %1870
          %v1872 = vadd.f32 %v1801, %v1802
          %1873 = vadd.xlane.f32.xlu0 %v1872
          %v1874 = vpop.xlane.xlu0 %1873
          %v1875 = vadd.f32 %v1803, %v1804
          %1876 = vadd.xlane.f32.xlu0 %v1875
          %v1877 = vpop.xlane.xlu0 %1876
          %v1878 = vadd.f32 %v1805, %v1806
          %1879 = vadd.xlane.f32.xlu0 %v1878
          %v1880 = vpop.xlane.xlu0 %1879
          %v1881 = vadd.f32 %v1807, %v1808
          %1882 = vadd.xlane.f32.xlu0 %v1881
          %v1883 = vpop.xlane.xlu0 %1882
          %v1884 = vadd.f32 %v1809, %v1810
          %1885 = vadd.xlane.f32.xlu0 %v1884
          %v1886 = vpop.xlane.xlu0 %1885
          %v1887 = vadd.f32 %v1811, %v1812
          %1888 = vadd.xlane.f32.xlu0 %v1887
          %v1889 = vpop.xlane.xlu0 %1888
          %v1890 = vadd.f32 %v1813, %v1814
          %1891 = vadd.xlane.f32.xlu0 %v1890
          %v1892 = vpop.xlane.xlu0 %1891
          %v1893 = vadd.f32 %v1815, %v1816
          %1894 = vadd.xlane.f32.xlu0 %v1893
          %v1895 = vpop.xlane.xlu0 %1894
          %v1896 = vadd.f32 %v1817, %v1818
          %1897 = vadd.xlane.f32.xlu0 %v1896
          %v1898 = vpop.xlane.xlu0 %1897
          %v1899 = vadd.f32 %v1819, %v1820
          %1900 = vadd.xlane.f32.xlu0 %v1899
          %v1901 = vpop.xlane.xlu0 %1900
          %v1902 = vadd.f32 %v1821, %v1822
          %1903 = vadd.xlane.f32.xlu0 %v1902
          %v1904 = vpop.xlane.xlu0 %1903
          %v1905 = vadd.f32 %v1823, %v1824
          %1906 = vadd.xlane.f32.xlu0 %v1905
          %v1907 = vpop.xlane.xlu0 %1906
          %v1908 = vadd.f32 %v1825, %v1826
          %1909 = vadd.xlane.f32.xlu0 %v1908
          %v1910 = vpop.xlane.xlu0 %1909
          %v1911 = vadd.f32 %v1827, %v1828
          %1912 = vadd.xlane.f32.xlu0 %v1911
          %v1913 = vpop.xlane.xlu0 %1912
          %v1914 = vadd.f32 %v1829, %v1830
          %1915 = vadd.xlane.f32.xlu0 %v1914
          %v1916 = vpop.xlane.xlu0 %1915
          %v1917 = vadd.f32 %v1831, %v1832
          %1918 = vadd.xlane.f32.xlu0 %v1917
          %v1919 = vpop.xlane.xlu0 %1918
          %v1920 = vadd.f32 %v1833, %v1834
          %1921 = vadd.xlane.f32.xlu0 %v1920
          %v1922 = vpop.xlane.xlu0 %1921
          %v1923 = vadd.f32 %v1835, %v1836
          %1924 = vadd.xlane.f32.xlu0 %v1923
          %v1925 = vpop.xlane.xlu0 %1924
          %v1926 = vadd.f32 %v1837, %v1838
          %1927 = vadd.xlane.f32.xlu0 %v1926
          %v1928 = vpop.xlane.xlu0 %1927
          %v1929 = vadd.f32 %v1839, %v1840
          %1930 = vadd.xlane.f32.xlu0 %v1929
          %v1931 = vpop.xlane.xlu0 %1930
          %v1932 = vadd.f32 %v1841, %v1842
          %1933 = vadd.xlane.f32.xlu0 %v1932
          %v1934 = vpop.xlane.xlu0 %1933
          %v1935 = vadd.f32 %v1843, %v1844
          %1936 = vadd.xlane.f32.xlu0 %v1935
          %v1937 = vpop.xlane.xlu0 %1936
          %v1938 = vadd.f32 %v1845, %v1846
          %1939 = vadd.xlane.f32.xlu0 %v1938
          %v1940 = vpop.xlane.xlu0 %1939
          %v1941 = vadd.f32 %v1847, %v1848
          %1942 = vadd.xlane.f32.xlu0 %v1941
          %v1943 = vpop.xlane.xlu0 %1942
          %v1944 = vadd.f32 %v1849, %v1850
          %1945 = vadd.xlane.f32.xlu0 %v1944
          %v1946 = vpop.xlane.xlu0 %1945
          %v1947 = vrcp.pop 256.0
          %v1948 = vmul.f32 %v1853, %v1947
          %v1949 = vmul.f32 %v1856, %v1947
          %v1950 = vmul.f32 %v1859, %v1947
          %v1951 = vmul.f32 %v1862, %v1947
          %v1952 = vmul.f32 %v1865, %v1947
          %v1953 = vmul.f32 %v1868, %v1947
          %v1954 = vmul.f32 %v1871, %v1947
          %v1955 = vmul.f32 %v1874, %v1947
          %v1956 = vmul.f32 %v1877, %v1947
          %v1957 = vmul.f32 %v1880, %v1947
          %v1958 = vmul.f32 %v1883, %v1947
          %v1959 = vmul.f32 %v1886, %v1947
          %v1960 = vmul.f32 %v1889, %v1947
          %v1961 = vmul.f32 %v1892, %v1947
          %v1962 = vmul.f32 %v1895, %v1947
          %v1963 = vmul.f32 %v1898, %v1947
          %v1964 = vmul.f32 %v1901, %v1947
          %v1965 = vmul.f32 %v1904, %v1947
          %v1966 = vmul.f32 %v1907, %v1947
          %v1967 = vmul.f32 %v1910, %v1947
          %v1968 = vmul.f32 %v1913, %v1947
          %v1969 = vmul.f32 %v1916, %v1947
          %v1970 = vmul.f32 %v1919, %v1947
          %v1971 = vmul.f32 %v1922, %v1947
          %v1972 = vmul.f32 %v1925, %v1947
          %v1973 = vmul.f32 %v1928, %v1947
          %v1974 = vmul.f32 %v1931, %v1947
          %v1975 = vmul.f32 %v1934, %v1947
          %v1976 = vmul.f32 %v1937, %v1947
          %v1977 = vmul.f32 %v1940, %v1947
          %v1978 = vmul.f32 %v1943, %v1947
          %v1979 = vmul.f32 %v1946, %v1947
          %v1980 = vsub.f32 %v1787, %v1948
          %v1981 = vsub.f32 %v1788, %v1948
          %v1982 = vsub.f32 %v1789, %v1949
          %v1983 = vsub.f32 %v1790, %v1949
          %v1984 = vsub.f32 %v1791, %v1950
          %v1985 = vsub.f32 %v1792, %v1950
          %v1986 = vsub.f32 %v1793, %v1951
          %v1987 = vsub.f32 %v1794, %v1951
          %v1988 = vsub.f32 %v1795, %v1952
          %v1989 = vsub.f32 %v1796, %v1952
          %v1990 = vsub.f32 %v1797, %v1953
          %v1991 = vsub.f32 %v1798, %v1953
          %v1992 = vsub.f32 %v1799, %v1954
          %v1993 = vsub.f32 %v1800, %v1954
          %v1994 = vsub.f32 %v1801, %v1955
          %v1995 = vsub.f32 %v1802, %v1955
          %v1996 = vsub.f32 %v1803, %v1956
          %v1997 = vsub.f32 %v1804, %v1956
          %v1998 = vsub.f32 %v1805, %v1957
          %v1999 = vsub.f32 %v1806, %v1957
          %v2000 = vsub.f32 %v1807, %v1958
          %v2001 = vsub.f32 %v1808, %v1958
          %v2002 = vsub.f32 %v1809, %v1959
          %v2003 = vsub.f32 %v1810, %v1959
          %v2004 = vsub.f32 %v1811, %v1960
          %v2005 = vsub.f32 %v1812, %v1960
          %v2006 = vsub.f32 %v1813, %v1961
          %v2007 = vsub.f32 %v1814, %v1961
          %v2008 = vsub.f32 %v1815, %v1962
          %v2009 = vsub.f32 %v1816, %v1962
          %v2010 = vsub.f32 %v1817, %v1963
          %v2011 = vsub.f32 %v1818, %v1963
          %v2012 = vsub.f32 %v1819, %v1964
          %v2013 = vsub.f32 %v1820, %v1964
          %v2014 = vsub.f32 %v1821, %v1965
          %v2015 = vsub.f32 %v1822, %v1965
          %v2016 = vsub.f32 %v1823, %v1966
          %v2017 = vsub.f32 %v1824, %v1966
          %v2018 = vsub.f32 %v1825, %v1967
          %v2019 = vsub.f32 %v1826, %v1967
          %v2020 = vsub.f32 %v1827, %v1968
          %v2021 = vsub.f32 %v1828, %v1968
          %v2022 = vsub.f32 %v1829, %v1969
          %v2023 = vsub.f32 %v1830, %v1969
          %v2024 = vsub.f32 %v1831, %v1970
          %v2025 = vsub.f32 %v1832, %v1970
          %v2026 = vsub.f32 %v1833, %v1971
          %v2027 = vsub.f32 %v1834, %v1971
          %v2028 = vsub.f32 %v1835, %v1972
          %v2029 = vsub.f32 %v1836, %v1972
          %v2030 = vsub.f32 %v1837, %v1973
          %v2031 = vsub.f32 %v1838, %v1973
          %v2032 = vsub.f32 %v1839, %v1974
          %v2033 = vsub.f32 %v1840, %v1974
          %v2034 = vsub.f32 %v1841, %v1975
          %v2035 = vsub.f32 %v1842, %v1975
          %v2036 = vsub.f32 %v1843, %v1976
          %v2037 = vsub.f32 %v1844, %v1976
          %v2038 = vsub.f32 %v1845, %v1977
          %v2039 = vsub.f32 %v1846, %v1977
          %v2040 = vsub.f32 %v1847, %v1978
          %v2041 = vsub.f32 %v1848, %v1978
          %v2042 = vsub.f32 %v1849, %v1979
          %v2043 = vsub.f32 %v1850, %v1979
          %v2044 = vmul.f32 %v1980, %v1980
          %v2045 = vmul.f32 %v1981, %v1981
          %v2046 = vmul.f32 %v1982, %v1982
          %v2047 = vmul.f32 %v1983, %v1983
          %v2048 = vmul.f32 %v1984, %v1984
          %v2049 = vmul.f32 %v1985, %v1985
          %v2050 = vmul.f32 %v1986, %v1986
          %v2051 = vmul.f32 %v1987, %v1987
          %v2052 = vmul.f32 %v1988, %v1988
          %v2053 = vmul.f32 %v1989, %v1989
          %v2054 = vmul.f32 %v1990, %v1990
          %v2055 = vmul.f32 %v1991, %v1991
          %v2056 = vmul.f32 %v1992, %v1992
          %v2057 = vmul.f32 %v1993, %v1993
          %v2058 = vmul.f32 %v1994, %v1994
          %v2059 = vmul.f32 %v1995, %v1995
          %v2060 = vmul.f32 %v1996, %v1996
          %v2061 = vmul.f32 %v1997, %v1997
          %v2062 = vmul.f32 %v1998, %v1998
          %v2063 = vmul.f32 %v1999, %v1999
          %v2064 = vmul.f32 %v2000, %v2000
          %v2065 = vmul.f32 %v2001, %v2001
          %v2066 = vmul.f32 %v2002, %v2002
          %v2067 = vmul.f32 %v2003, %v2003
          %v2068 = vmul.f32 %v2004, %v2004
          %v2069 = vmul.f32 %v2005, %v2005
          %v2070 = vmul.f32 %v2006, %v2006
          %v2071 = vmul.f32 %v2007, %v2007
          %v2072 = vmul.f32 %v2008, %v2008
          %v2073 = vmul.f32 %v2009, %v2009
          %v2074 = vmul.f32 %v2010, %v2010
          %v2075 = vmul.f32 %v2011, %v2011
          %v2076 = vmul.f32 %v2012, %v2012
          %v2077 = vmul.f32 %v2013, %v2013
          %v2078 = vmul.f32 %v2014, %v2014
          %v2079 = vmul.f32 %v2015, %v2015
          %v2080 = vmul.f32 %v2016, %v2016
          %v2081 = vmul.f32 %v2017, %v2017
          %v2082 = vmul.f32 %v2018, %v2018
          %v2083 = vmul.f32 %v2019, %v2019
          %v2084 = vmul.f32 %v2020, %v2020
          %v2085 = vmul.f32 %v2021, %v2021
          %v2086 = vmul.f32 %v2022, %v2022
          %v2087 = vmul.f32 %v2023, %v2023
          %v2088 = vmul.f32 %v2024, %v2024
          %v2089 = vmul.f32 %v2025, %v2025
          %v2090 = vmul.f32 %v2026, %v2026
          %v2091 = vmul.f32 %v2027, %v2027
          %v2092 = vmul.f32 %v2028, %v2028
          %v2093 = vmul.f32 %v2029, %v2029
          %v2094 = vmul.f32 %v2030, %v2030
          %v2095 = vmul.f32 %v2031, %v2031
          %v2096 = vmul.f32 %v2032, %v2032
          %v2097 = vmul.f32 %v2033, %v2033
          %v2098 = vmul.f32 %v2034, %v2034
          %v2099 = vmul.f32 %v2035, %v2035
          %v2100 = vmul.f32 %v2036, %v2036
          %v2101 = vmul.f32 %v2037, %v2037
          %v2102 = vmul.f32 %v2038, %v2038
          %v2103 = vmul.f32 %v2039, %v2039
          %v2104 = vmul.f32 %v2040, %v2040
          %v2105 = vmul.f32 %v2041, %v2041
          %v2106 = vmul.f32 %v2042, %v2042
          %v2107 = vmul.f32 %v2043, %v2043
          %v2108 = vadd.f32 %v2044, %v2045
          %2109 = vadd.xlane.f32.xlu0 %v2108
          %v2110 = vpop.xlane.xlu0 %2109
          %v2111 = vadd.f32 %v2046, %v2047
          %2112 = vadd.xlane.f32.xlu0 %v2111
          %v2113 = vpop.xlane.xlu0 %2112
          %v2114 = vadd.f32 %v2048, %v2049
          %2115 = vadd.xlane.f32.xlu0 %v2114
          %v2116 = vpop.xlane.xlu0 %2115
          %v2117 = vadd.f32 %v2050, %v2051
          %2118 = vadd.xlane.f32.xlu0 %v2117
          %v2119 = vpop.xlane.xlu0 %2118
          %v2120 = vadd.f32 %v2052, %v2053
          %2121 = vadd.xlane.f32.xlu0 %v2120
          %v2122 = vpop.xlane.xlu0 %2121
          %v2123 = vadd.f32 %v2054, %v2055
          %2124 = vadd.xlane.f32.xlu0 %v2123
          %v2125 = vpop.xlane.xlu0 %2124
          %v2126 = vadd.f32 %v2056, %v2057
          %2127 = vadd.xlane.f32.xlu0 %v2126
          %v2128 = vpop.xlane.xlu0 %2127
          %v2129 = vadd.f32 %v2058, %v2059
          %2130 = vadd.xlane.f32.xlu0 %v2129
          %v2131 = vpop.xlane.xlu0 %2130
          %v2132 = vadd.f32 %v2060, %v2061
          %2133 = vadd.xlane.f32.xlu0 %v2132
          %v2134 = vpop.xlane.xlu0 %2133
          %v2135 = vadd.f32 %v2062, %v2063
          %2136 = vadd.xlane.f32.xlu0 %v2135
          %v2137 = vpop.xlane.xlu0 %2136
          %v2138 = vadd.f32 %v2064, %v2065
          %2139 = vadd.xlane.f32.xlu0 %v2138
          %v2140 = vpop.xlane.xlu0 %2139
          %v2141 = vadd.f32 %v2066, %v2067
          %2142 = vadd.xlane.f32.xlu0 %v2141
          %v2143 = vpop.xlane.xlu0 %2142
          %v2144 = vadd.f32 %v2068, %v2069
          %2145 = vadd.xlane.f32.xlu0 %v2144
          %v2146 = vpop.xlane.xlu0 %2145
          %v2147 = vadd.f32 %v2070, %v2071
          %2148 = vadd.xlane.f32.xlu0 %v2147
          %v2149 = vpop.xlane.xlu0 %2148
          %v2150 = vadd.f32 %v2072, %v2073
          %2151 = vadd.xlane.f32.xlu0 %v2150
          %v2152 = vpop.xlane.xlu0 %2151
          %v2153 = vadd.f32 %v2074, %v2075
          %2154 = vadd.xlane.f32.xlu0 %v2153
          %v2155 = vpop.xlane.xlu0 %2154
          %v2156 = vadd.f32 %v2076, %v2077
          %2157 = vadd.xlane.f32.xlu0 %v2156
          %v2158 = vpop.xlane.xlu0 %2157
          %v2159 = vadd.f32 %v2078, %v2079
          %2160 = vadd.xlane.f32.xlu0 %v2159
          %v2161 = vpop.xlane.xlu0 %2160
          %v2162 = vadd.f32 %v2080, %v2081
          %2163 = vadd.xlane.f32.xlu0 %v2162
          %v2164 = vpop.xlane.xlu0 %2163
          %v2165 = vadd.f32 %v2082, %v2083
          %2166 = vadd.xlane.f32.xlu0 %v2165
          %v2167 = vpop.xlane.xlu0 %2166
          %v2168 = vadd.f32 %v2084, %v2085
          %2169 = vadd.xlane.f32.xlu0 %v2168
          %v2170 = vpop.xlane.xlu0 %2169
          %v2171 = vadd.f32 %v2086, %v2087
          %2172 = vadd.xlane.f32.xlu0 %v2171
          %v2173 = vpop.xlane.xlu0 %2172
          %v2174 = vadd.f32 %v2088, %v2089
          %2175 = vadd.xlane.f32.xlu0 %v2174
          %v2176 = vpop.xlane.xlu0 %2175
          %v2177 = vadd.f32 %v2090, %v2091
          %2178 = vadd.xlane.f32.xlu0 %v2177
          %v2179 = vpop.xlane.xlu0 %2178
          %v2180 = vadd.f32 %v2092, %v2093
          %2181 = vadd.xlane.f32.xlu0 %v2180
          %v2182 = vpop.xlane.xlu0 %2181
          %v2183 = vadd.f32 %v2094, %v2095
          %2184 = vadd.xlane.f32.xlu0 %v2183
          %v2185 = vpop.xlane.xlu0 %2184
          %v2186 = vadd.f32 %v2096, %v2097
          %2187 = vadd.xlane.f32.xlu0 %v2186
          %v2188 = vpop.xlane.xlu0 %2187
          %v2189 = vadd.f32 %v2098, %v2099
          %2190 = vadd.xlane.f32.xlu0 %v2189
          %v2191 = vpop.xlane.xlu0 %2190
          %v2192 = vadd.f32 %v2100, %v2101
          %2193 = vadd.xlane.f32.xlu0 %v2192
          %v2194 = vpop.xlane.xlu0 %2193
          %v2195 = vadd.f32 %v2102, %v2103
          %2196 = vadd.xlane.f32.xlu0 %v2195
          %v2197 = vpop.xlane.xlu0 %2196
          %v2198 = vadd.f32 %v2104, %v2105
          %2199 = vadd.xlane.f32.xlu0 %v2198
          %v2200 = vpop.xlane.xlu0 %2199
          %v2201 = vadd.f32 %v2106, %v2107
          %2202 = vadd.xlane.f32.xlu0 %v2201
          %v2203 = vpop.xlane.xlu0 %2202
          %v2204 = vmul.f32 %v2110, %v1947
          %v2205 = vmul.f32 %v2113, %v1947
          %v2206 = vmul.f32 %v2116, %v1947
          %v2207 = vmul.f32 %v2119, %v1947
          %v2208 = vmul.f32 %v2122, %v1947
          %v2209 = vmul.f32 %v2125, %v1947
          %v2210 = vmul.f32 %v2128, %v1947
          %v2211 = vmul.f32 %v2131, %v1947
          %v2212 = vmul.f32 %v2134, %v1947
          %v2213 = vmul.f32 %v2137, %v1947
          %v2214 = vmul.f32 %v2140, %v1947
          %v2215 = vmul.f32 %v2143, %v1947
          %v2216 = vmul.f32 %v2146, %v1947
          %v2217 = vmul.f32 %v2149, %v1947
          %v2218 = vmul.f32 %v2152, %v1947
          %v2219 = vmul.f32 %v2155, %v1947
          %v2220 = vmul.f32 %v2158, %v1947
          %v2221 = vmul.f32 %v2161, %v1947
          %v2222 = vmul.f32 %v2164, %v1947
          %v2223 = vmul.f32 %v2167, %v1947
          %v2224 = vmul.f32 %v2170, %v1947
          %v2225 = vmul.f32 %v2173, %v1947
          %v2226 = vmul.f32 %v2176, %v1947
          %v2227 = vmul.f32 %v2179, %v1947
          %v2228 = vmul.f32 %v2182, %v1947
          %v2229 = vmul.f32 %v2185, %v1947
          %v2230 = vmul.f32 %v2188, %v1947
          %v2231 = vmul.f32 %v2191, %v1947
          %v2232 = vmul.f32 %v2194, %v1947
          %v2233 = vmul.f32 %v2197, %v1947
          %v2234 = vmul.f32 %v2200, %v1947
          %v2235 = vmul.f32 %v2203, %v1947
          %v2236 = vadd.f32 %v2204, 1e-05
          %v2237 = vadd.f32 %v2205, 1e-05
          %v2238 = vadd.f32 %v2206, 1e-05
          %v2239 = vadd.f32 %v2207, 1e-05
          %v2240 = vadd.f32 %v2208, 1e-05
          %v2241 = vadd.f32 %v2209, 1e-05
          %v2242 = vadd.f32 %v2210, 1e-05
          %v2243 = vadd.f32 %v2211, 1e-05
          %v2244 = vadd.f32 %v2212, 1e-05
          %v2245 = vadd.f32 %v2213, 1e-05
          %v2246 = vadd.f32 %v2214, 1e-05
          %v2247 = vadd.f32 %v2215, 1e-05
          %v2248 = vadd.f32 %v2216, 1e-05
          %v2249 = vadd.f32 %v2217, 1e-05
          %v2250 = vadd.f32 %v2218, 1e-05
          %v2251 = vadd.f32 %v2219, 1e-05
          %v2252 = vadd.f32 %v2220, 1e-05
          %v2253 = vadd.f32 %v2221, 1e-05
          %v2254 = vadd.f32 %v2222, 1e-05
          %v2255 = vadd.f32 %v2223, 1e-05
          %v2256 = vadd.f32 %v2224, 1e-05
          %v2257 = vadd.f32 %v2225, 1e-05
          %v2258 = vadd.f32 %v2226, 1e-05
          %v2259 = vadd.f32 %v2227, 1e-05
          %v2260 = vadd.f32 %v2228, 1e-05
          %v2261 = vadd.f32 %v2229, 1e-05
          %v2262 = vadd.f32 %v2230, 1e-05
          %v2263 = vadd.f32 %v2231, 1e-05
          %v2264 = vadd.f32 %v2232, 1e-05
          %v2265 = vadd.f32 %v2233, 1e-05
          %v2266 = vadd.f32 %v2234, 1e-05
          %v2267 = vadd.f32 %v2235, 1e-05
          %v2268 = vrsqrt.pop %v2236
          %v2269 = vrsqrt.pop %v2237
          %v2270 = vrsqrt.pop %v2238
          %v2271 = vrsqrt.pop %v2239
          %v2272 = vrsqrt.pop %v2240
          %v2273 = vrsqrt.pop %v2241
          %v2274 = vrsqrt.pop %v2242
          %v2275 = vrsqrt.pop %v2243
          %v2276 = vrsqrt.pop %v2244
          %v2277 = vrsqrt.pop %v2245
          %v2278 = vrsqrt.pop %v2246
          %v2279 = vrsqrt.pop %v2247
          %v2280 = vrsqrt.pop %v2248
          %v2281 = vrsqrt.pop %v2249
          %v2282 = vrsqrt.pop %v2250
          %v2283 = vrsqrt.pop %v2251
          %v2284 = vrsqrt.pop %v2252
          %v2285 = vrsqrt.pop %v2253
          %v2286 = vrsqrt.pop %v2254
          %v2287 = vrsqrt.pop %v2255
          %v2288 = vrsqrt.pop %v2256
          %v2289 = vrsqrt.pop %v2257
          %v2290 = vrsqrt.pop %v2258
          %v2291 = vrsqrt.pop %v2259
          %v2292 = vrsqrt.pop %v2260
          %v2293 = vrsqrt.pop %v2261
          %v2294 = vrsqrt.pop %v2262
          %v2295 = vrsqrt.pop %v2263
          %v2296 = vrsqrt.pop %v2264
          %v2297 = vrsqrt.pop %v2265
          %v2298 = vrsqrt.pop %v2266
          %v2299 = vrsqrt.pop %v2267
          %v2300 = vmul.f32 %v1980, %v2268
          %v2301 = vmul.f32 %v1981, %v2268
          %v2302 = vmul.f32 %v1982, %v2269
          %v2303 = vmul.f32 %v1983, %v2269
          %v2304 = vmul.f32 %v1984, %v2270
          %v2305 = vmul.f32 %v1985, %v2270
          %v2306 = vmul.f32 %v1986, %v2271
          %v2307 = vmul.f32 %v1987, %v2271
          %v2308 = vmul.f32 %v1988, %v2272
          %v2309 = vmul.f32 %v1989, %v2272
          %v2310 = vmul.f32 %v1990, %v2273
          %v2311 = vmul.f32 %v1991, %v2273
          %v2312 = vmul.f32 %v1992, %v2274
          %v2313 = vmul.f32 %v1993, %v2274
          %v2314 = vmul.f32 %v1994, %v2275
          %v2315 = vmul.f32 %v1995, %v2275
          %v2316 = vmul.f32 %v1996, %v2276
          %v2317 = vmul.f32 %v1997, %v2276
          %v2318 = vmul.f32 %v1998, %v2277
          %v2319 = vmul.f32 %v1999, %v2277
          %v2320 = vmul.f32 %v2000, %v2278
          %v2321 = vmul.f32 %v2001, %v2278
          %v2322 = vmul.f32 %v2002, %v2279
          %v2323 = vmul.f32 %v2003, %v2279
          %v2324 = vmul.f32 %v2004, %v2280
          %v2325 = vmul.f32 %v2005, %v2280
          %v2326 = vmul.f32 %v2006, %v2281
          %v2327 = vmul.f32 %v2007, %v2281
          %v2328 = vmul.f32 %v2008, %v2282
          %v2329 = vmul.f32 %v2009, %v2282
          %v2330 = vmul.f32 %v2010, %v2283
          %v2331 = vmul.f32 %v2011, %v2283
          %v2332 = vmul.f32 %v2012, %v2284
          %v2333 = vmul.f32 %v2013, %v2284
          %v2334 = vmul.f32 %v2014, %v2285
          %v2335 = vmul.f32 %v2015, %v2285
          %v2336 = vmul.f32 %v2016, %v2286
          %v2337 = vmul.f32 %v2017, %v2286
          %v2338 = vmul.f32 %v2018, %v2287
          %v2339 = vmul.f32 %v2019, %v2287
          %v2340 = vmul.f32 %v2020, %v2288
          %v2341 = vmul.f32 %v2021, %v2288
          %v2342 = vmul.f32 %v2022, %v2289
          %v2343 = vmul.f32 %v2023, %v2289
          %v2344 = vmul.f32 %v2024, %v2290
          %v2345 = vmul.f32 %v2025, %v2290
          %v2346 = vmul.f32 %v2026, %v2291
          %v2347 = vmul.f32 %v2027, %v2291
          %v2348 = vmul.f32 %v2028, %v2292
          %v2349 = vmul.f32 %v2029, %v2292
          %v2350 = vmul.f32 %v2030, %v2293
          %v2351 = vmul.f32 %v2031, %v2293
          %v2352 = vmul.f32 %v2032, %v2294
          %v2353 = vmul.f32 %v2033, %v2294
          %v2354 = vmul.f32 %v2034, %v2295
          %v2355 = vmul.f32 %v2035, %v2295
          %v2356 = vmul.f32 %v2036, %v2296
          %v2357 = vmul.f32 %v2037, %v2296
          %v2358 = vmul.f32 %v2038, %v2297
          %v2359 = vmul.f32 %v2039, %v2297
          %v2360 = vmul.f32 %v2040, %v2298
          %v2361 = vmul.f32 %v2041, %v2298
          %v2362 = vmul.f32 %v2042, %v2299
          %v2363 = vmul.f32 %v2043, %v2299
          %v2364 = vld [vmem:[%s5] sm:$0x3]
          %v2366 = vlaneseq
          %v2367 = vshrl.u32 %v2366, 7
          %v2368 = vsub.s32 0, %v2367
          %v2369 = vrot.slane %v2364, %v2368
          %v2370 = vlaneseq
          %v2371 = vshrl.u32 %v2370, 7
          %v2372 = vsub.s32 1, %v2371
          %v2373 = vrot.slane %v2364, %v2372
          %v2376 = vmul.f32 %v2300, %v2369
          %v2377 = vmul.f32 %v2301, %v2373
          %v2378 = vmul.f32 %v2302, %v2369
          %v2379 = vmul.f32 %v2303, %v2373
          %v2380 = vmul.f32 %v2304, %v2369
          %v2381 = vmul.f32 %v2305, %v2373
          %v2382 = vmul.f32 %v2306, %v2369
          %v2383 = vmul.f32 %v2307, %v2373
          %v2384 = vmul.f32 %v2308, %v2369
          %v2385 = vmul.f32 %v2309, %v2373
          %v2386 = vmul.f32 %v2310, %v2369
          %v2387 = vmul.f32 %v2311, %v2373
          %v2388 = vmul.f32 %v2312, %v2369
          %v2389 = vmul.f32 %v2313, %v2373
          %v2390 = vmul.f32 %v2314, %v2369
          %v2391 = vmul.f32 %v2315, %v2373
          %v2392 = vmul.f32 %v2316, %v2369
          %v2393 = vmul.f32 %v2317, %v2373
          %v2394 = vmul.f32 %v2318, %v2369
          %v2395 = vmul.f32 %v2319, %v2373
          %v2396 = vmul.f32 %v2320, %v2369
          %v2397 = vmul.f32 %v2321, %v2373
          %v2398 = vmul.f32 %v2322, %v2369
          %v2399 = vmul.f32 %v2323, %v2373
          %v2400 = vmul.f32 %v2324, %v2369
          %v2401 = vmul.f32 %v2325, %v2373
          %v2402 = vmul.f32 %v2326, %v2369
          %v2403 = vmul.f32 %v2327, %v2373
          %v2404 = vmul.f32 %v2328, %v2369
          %v2405 = vmul.f32 %v2329, %v2373
          %v2406 = vmul.f32 %v2330, %v2369
          %v2407 = vmul.f32 %v2331, %v2373
          %v2408 = vmul.f32 %v2332, %v2369
          %v2409 = vmul.f32 %v2333, %v2373
          %v2410 = vmul.f32 %v2334, %v2369
          %v2411 = vmul.f32 %v2335, %v2373
          %v2412 = vmul.f32 %v2336, %v2369
          %v2413 = vmul.f32 %v2337, %v2373
          %v2414 = vmul.f32 %v2338, %v2369
          %v2415 = vmul.f32 %v2339, %v2373
          %v2416 = vmul.f32 %v2340, %v2369
          %v2417 = vmul.f32 %v2341, %v2373
          %v2418 = vmul.f32 %v2342, %v2369
          %v2419 = vmul.f32 %v2343, %v2373
          %v2420 = vmul.f32 %v2344, %v2369
          %v2421 = vmul.f32 %v2345, %v2373
          %v2422 = vmul.f32 %v2346, %v2369
          %v2423 = vmul.f32 %v2347, %v2373
          %v2424 = vmul.f32 %v2348, %v2369
          %v2425 = vmul.f32 %v2349, %v2373
          %v2426 = vmul.f32 %v2350, %v2369
          %v2427 = vmul.f32 %v2351, %v2373
          %v2428 = vmul.f32 %v2352, %v2369
          %v2429 = vmul.f32 %v2353, %v2373
          %v2430 = vmul.f32 %v2354, %v2369
          %v2431 = vmul.f32 %v2355, %v2373
          %v2432 = vmul.f32 %v2356, %v2369
          %v2433 = vmul.f32 %v2357, %v2373
          %v2434 = vmul.f32 %v2358, %v2369
          %v2435 = vmul.f32 %v2359, %v2373
          %v2436 = vmul.f32 %v2360, %v2369
          %v2437 = vmul.f32 %v2361, %v2373
          %v2438 = vmul.f32 %v2362, %v2369
          %v2439 = vmul.f32 %v2363, %v2373
          %v2440 = vld [vmem:[%s6] sm:$0x3]
          %v2442 = vlaneseq
          %v2443 = vshrl.u32 %v2442, 7
          %v2444 = vsub.s32 0, %v2443
          %v2445 = vrot.slane %v2440, %v2444
          %v2446 = vlaneseq
          %v2447 = vshrl.u32 %v2446, 7
          %v2448 = vsub.s32 1, %v2447
          %v2449 = vrot.slane %v2440, %v2448
          %v2452 = vadd.f32 %v2376, %v2445
          %v2453 = vadd.f32 %v2377, %v2449
          %v2454 = vadd.f32 %v2378, %v2445
          %v2455 = vadd.f32 %v2379, %v2449
          %v2456 = vadd.f32 %v2380, %v2445
          %v2457 = vadd.f32 %v2381, %v2449
          %v2458 = vadd.f32 %v2382, %v2445
          %v2459 = vadd.f32 %v2383, %v2449
          %v2460 = vadd.f32 %v2384, %v2445
          %v2461 = vadd.f32 %v2385, %v2449
          %v2462 = vadd.f32 %v2386, %v2445
          %v2463 = vadd.f32 %v2387, %v2449
          %v2464 = vadd.f32 %v2388, %v2445
          %v2465 = vadd.f32 %v2389, %v2449
          %v2466 = vadd.f32 %v2390, %v2445
          %v2467 = vadd.f32 %v2391, %v2449
          %v2468 = vadd.f32 %v2392, %v2445
          %v2469 = vadd.f32 %v2393, %v2449
          %v2470 = vadd.f32 %v2394, %v2445
          %v2471 = vadd.f32 %v2395, %v2449
          %v2472 = vadd.f32 %v2396, %v2445
          %v2473 = vadd.f32 %v2397, %v2449
          %v2474 = vadd.f32 %v2398, %v2445
          %v2475 = vadd.f32 %v2399, %v2449
          %v2476 = vadd.f32 %v2400, %v2445
          %v2477 = vadd.f32 %v2401, %v2449
          %v2478 = vadd.f32 %v2402, %v2445
          %v2479 = vadd.f32 %v2403, %v2449
          %v2480 = vadd.f32 %v2404, %v2445
          %v2481 = vadd.f32 %v2405, %v2449
          %v2482 = vadd.f32 %v2406, %v2445
          %v2483 = vadd.f32 %v2407, %v2449
          %v2484 = vadd.f32 %v2408, %v2445
          %v2485 = vadd.f32 %v2409, %v2449
          %v2486 = vadd.f32 %v2410, %v2445
          %v2487 = vadd.f32 %v2411, %v2449
          %v2488 = vadd.f32 %v2412, %v2445
          %v2489 = vadd.f32 %v2413, %v2449
          %v2490 = vadd.f32 %v2414, %v2445
          %v2491 = vadd.f32 %v2415, %v2449
          %v2492 = vadd.f32 %v2416, %v2445
          %v2493 = vadd.f32 %v2417, %v2449
          %v2494 = vadd.f32 %v2418, %v2445
          %v2495 = vadd.f32 %v2419, %v2449
          %v2496 = vadd.f32 %v2420, %v2445
          %v2497 = vadd.f32 %v2421, %v2449
          %v2498 = vadd.f32 %v2422, %v2445
          %v2499 = vadd.f32 %v2423, %v2449
          %v2500 = vadd.f32 %v2424, %v2445
          %v2501 = vadd.f32 %v2425, %v2449
          %v2502 = vadd.f32 %v2426, %v2445
          %v2503 = vadd.f32 %v2427, %v2449
          %v2504 = vadd.f32 %v2428, %v2445
          %v2505 = vadd.f32 %v2429, %v2449
          %v2506 = vadd.f32 %v2430, %v2445
          %v2507 = vadd.f32 %v2431, %v2449
          %v2508 = vadd.f32 %v2432, %v2445
          %v2509 = vadd.f32 %v2433, %v2449
          %v2510 = vadd.f32 %v2434, %v2445
          %v2511 = vadd.f32 %v2435, %v2449
          %v2512 = vadd.f32 %v2436, %v2445
          %v2513 = vadd.f32 %v2437, %v2449
          %v2514 = vadd.f32 %v2438, %v2445
          %v2515 = vadd.f32 %v2439, %v2449
          %2516 = vst [vmem:[%s342] sm:$0xff] %v2452
          %2517 = vst [vmem:[%s342 + $0x8] sm:$0xff] %v2453
          %2518 = vst [vmem:[%s342 + $0x10] sm:$0xff] %v2454
          %2519 = vst [vmem:[%s342 + $0x18] sm:$0xff] %v2455
          %2520 = vst [vmem:[%s342 + $0x20] sm:$0xff] %v2456
          %2521 = vst [vmem:[%s342 + $0x28] sm:$0xff] %v2457
          %2522 = vst [vmem:[%s342 + $0x30] sm:$0xff] %v2458
          %2523 = vst [vmem:[%s342 + $0x38] sm:$0xff] %v2459
          %2524 = vst [vmem:[%s342 + $0x40] sm:$0xff] %v2460
          %2525 = vst [vmem:[%s342 + $0x48] sm:$0xff] %v2461
          %2526 = vst [vmem:[%s342 + $0x50] sm:$0xff] %v2462
          %2527 = vst [vmem:[%s342 + $0x58] sm:$0xff] %v2463
          %2528 = vst [vmem:[%s342 + $0x60] sm:$0xff] %v2464
          %2529 = vst [vmem:[%s342 + $0x68] sm:$0xff] %v2465
          %2530 = vst [vmem:[%s342 + $0x70] sm:$0xff] %v2466
          %2531 = vst [vmem:[%s342 + $0x78] sm:$0xff] %v2467
          %2532 = vst [vmem:[%s342 + $0x80] sm:$0xff] %v2468
          %2533 = vst [vmem:[%s342 + $0x88] sm:$0xff] %v2469
          %2534 = vst [vmem:[%s342 + $0x90] sm:$0xff] %v2470
          %2535 = vst [vmem:[%s342 + $0x98] sm:$0xff] %v2471
          %2536 = vst [vmem:[%s342 + $0xa0] sm:$0xff] %v2472
          %2537 = vst [vmem:[%s342 + $0xa8] sm:$0xff] %v2473
          %2538 = vst [vmem:[%s342 + $0xb0] sm:$0xff] %v2474
          %2539 = vst [vmem:[%s342 + $0xb8] sm:$0xff] %v2475
          %2540 = vst [vmem:[%s342 + $0xc0] sm:$0xff] %v2476
          %2541 = vst [vmem:[%s342 + $0xc8] sm:$0xff] %v2477
          %2542 = vst [vmem:[%s342 + $0xd0] sm:$0xff] %v2478
          %2543 = vst [vmem:[%s342 + $0xd8] sm:$0xff] %v2479
          %2544 = vst [vmem:[%s342 + $0xe0] sm:$0xff] %v2480
          %2545 = vst [vmem:[%s342 + $0xe8] sm:$0xff] %v2481
          %2546 = vst [vmem:[%s342 + $0xf0] sm:$0xff] %v2482
          %2547 = vst [vmem:[%s342 + $0xf8] sm:$0xff] %v2483
          %2548 = vst [vmem:[%s342 + $0x100] sm:$0xff] %v2484
          %2549 = vst [vmem:[%s342 + $0x108] sm:$0xff] %v2485
          %2550 = vst [vmem:[%s342 + $0x110] sm:$0xff] %v2486
          %2551 = vst [vmem:[%s342 + $0x118] sm:$0xff] %v2487
          %2552 = vst [vmem:[%s342 + $0x120] sm:$0xff] %v2488
          %2553 = vst [vmem:[%s342 + $0x128] sm:$0xff] %v2489
          %2554 = vst [vmem:[%s342 + $0x130] sm:$0xff] %v2490
          %2555 = vst [vmem:[%s342 + $0x138] sm:$0xff] %v2491
          %2556 = vst [vmem:[%s342 + $0x140] sm:$0xff] %v2492
          %2557 = vst [vmem:[%s342 + $0x148] sm:$0xff] %v2493
          %2558 = vst [vmem:[%s342 + $0x150] sm:$0xff] %v2494
          %2559 = vst [vmem:[%s342 + $0x158] sm:$0xff] %v2495
          %2560 = vst [vmem:[%s342 + $0x160] sm:$0xff] %v2496
          %2561 = vst [vmem:[%s342 + $0x168] sm:$0xff] %v2497
          %2562 = vst [vmem:[%s342 + $0x170] sm:$0xff] %v2498
          %2563 = vst [vmem:[%s342 + $0x178] sm:$0xff] %v2499
          %2564 = vst [vmem:[%s342 + $0x180] sm:$0xff] %v2500
          %2565 = vst [vmem:[%s342 + $0x188] sm:$0xff] %v2501
          %2566 = vst [vmem:[%s342 + $0x190] sm:$0xff] %v2502
          %2567 = vst [vmem:[%s342 + $0x198] sm:$0xff] %v2503
          %2568 = vst [vmem:[%s342 + $0x1a0] sm:$0xff] %v2504
          %2569 = vst [vmem:[%s342 + $0x1a8] sm:$0xff] %v2505
          %2570 = vst [vmem:[%s342 + $0x1b0] sm:$0xff] %v2506
          %2571 = vst [vmem:[%s342 + $0x1b8] sm:$0xff] %v2507
          %2572 = vst [vmem:[%s342 + $0x1c0] sm:$0xff] %v2508
          %2573 = vst [vmem:[%s342 + $0x1c8] sm:$0xff] %v2509
          %2574 = vst [vmem:[%s342 + $0x1d0] sm:$0xff] %v2510
          %2575 = vst [vmem:[%s342 + $0x1d8] sm:$0xff] %v2511
          %2576 = vst [vmem:[%s342 + $0x1e0] sm:$0xff] %v2512
          %2577 = vst [vmem:[%s342 + $0x1e8] sm:$0xff] %v2513
          %2578 = vst [vmem:[%s342 + $0x1f0] sm:$0xff] %v2514
          %2579 = vst [vmem:[%s342 + $0x1f8] sm:$0xff] %v2515
        $region68: #{tpu_custom_call.1} parent=47 // pred_fallthru
          _
        %s2580 = sand.u32 %s199, 1
        %s2581 = scalar_lea.sflag [#allocation5], %s2580
        %s2582 = sand.u32 %s199, 1
        %s2583 = smul.addr %s2582, 512
        %s2584 = scalar_lea.vmem [#allocation9], %s2583
        // Predicated region
        $region69: #{tpu_custom_call.1} parent=47 // pred_check
          %p2585 = pneg %p209
        $region70: #{tpu_custom_call.1} parent=47 // pred_check_branch
          %2587 = sbr.rel (%p2585) target = $region72
        $region71: #{tpu_custom_call.1} parent=47 // pred_region
          %s2588 = smul.u32 32, %s29
          %s2590 = ssub.s32 8192, 8192
          %2591 = vsyncadd %s2581, %s2590
          %s2592 = smul.addr %s2588, 2
          %s2593 = smul.addr %s2592, 128
          %s2594 = scalar_lea.hbm %s7, %s2593
          %s2595 = sshll.u32 %s2584, 4
          %s2596 = int_to_ptr.vmem [resolvable:$true] %s2595
          %2601 = dma.vmem_to_hbm [thread:$0]  %s2596, 8192, %s2594, %s2581, 256, 256, 16
        $region72: #{tpu_custom_call.1} parent=47 // pred_fallthru
          _
      $region48: #{tpu_custom_call.1} parent=5 // pred_fallthru
        _
      %p2602 = scmp.le.s32.totalorder 2, %s20
      // Predicated region
      $region73: #{tpu_custom_call.1} parent=5 // pred_check
        %p2603 = pneg %p2602
      $region74: #{tpu_custom_call.1} parent=5 // pred_check_branch
        %2605 = sbr.rel (%p2603) target = $region76
      $region75: #{tpu_custom_call.1} parent=5 // pred_region
        %s2606 = ssub.s32 %s20, 2
        // Predicated region
        $region77: #{tpu_custom_call.1} parent=75 // pred_check
          %p2607 = pneg %p215
        $region78: #{tpu_custom_call.1} parent=75 // pred_check_branch
          %2609 = sbr.rel (%p2607) target = $region80
        $region79: #{tpu_custom_call.1} parent=75 // pred_region
          %s2610 = sand.u32 %s200, 1
          %s2611 = scalar_lea.sflag [#allocation5], %s2610
          %s2612 = sand.u32 %s200, 1
          %s2613 = smul.addr %s2612, 512
          %s2614 = scalar_lea.vmem [#allocation9], %s2613
          %2615 = dma.done %s2611, 8192
        $region80: #{tpu_custom_call.1} parent=75 // pred_fallthru
          _
      $region76: #{tpu_custom_call.1} parent=5 // pred_fallthru
        _
    $region6: #{tpu_custom_call.1} parent=1 // loop_footer
      %s24 = sadd.s32 1, %s20
    $region7: #{tpu_custom_call.1} parent=1 // loop_footer_branch
      %19 = sbr.rel target = $region3
    $region8: #{tpu_custom_call.1} parent=1 // loop_exit
      _
    %2616 = vsyncpa [#allocation4], 1
    %s2617 = scalar_lea.sflag [#allocation4], 1
    %2618 = vsyncpa %s2617, 1
    %2619 = vsyncpa [#allocation7], 1
    %2620 = vsyncpa [#allocation5], 1
    %s2621 = scalar_lea.sflag [#allocation5], 1
    %2622 = vsyncpa %s2621, 1

</llo_original>
